<compile_context>
chip_gen: v5e
topology: v5e:2x2
jax: 0.10.0
libtpu: 0.0.40
codegen_flags: <defaults>
</compile_context>

<pallas_src>
import jax
import jax.numpy as jnp
from jax.experimental import pallas as pl
from jax.experimental.pallas import tpu as pltpu

# ----------------------------- configuration --------------------------------
B = 2                      # real batch (module's example size)
BP = 8                     # padded batch = one sublane tile
T_ENC = 8                  # encoder sequence length
TAU = 4                    # decoder (future) sequence length
D_INPUT = 4                # continuous features
D_EMB = 4                  # embedding dim per categorical feature
N_EMBEDDING = (10, 12)     # vocab sizes
N_CATE = len(N_EMBEDDING)
D_MODEL = 32               # LSTM hidden size
H = D_MODEL
NUM_TARGETS = 2
N_LAYERS = 3
ENC_IN = D_INPUT + N_CATE * D_EMB      # 12
DEC_EMB = N_CATE * D_EMB               # 8
DEC_IN = D_MODEL + DEC_EMB             # 40
G = 4 * H                              # 128 gate lanes
IN_LANES = 32                          # lane width of the packed input slab
DEC_LANE = 16                          # decoder-emb lane offset in input slab


def _dot(a, b):
    # bf16 (or f32) inputs, f32 accumulation on the MXU.
    return jnp.dot(a, b, preferred_element_type=jnp.float32)


def _softplus(z):
    # stable softplus == log(1 + exp(z)), no overflow for large z
    return jnp.maximum(z, 0.0) + jnp.log(1.0 + jnp.exp(-jnp.abs(z)))


# Gate columns are [i, f, o, g]; i/f/o columns carry z/2 (0.5 folded into the
# packed weights and biases), so sigmoid(z) == 0.5 * tanh(z/2) + 0.5 and a
# single tanh over all 4H lanes handles every gate.
def _cell(gates, c_prev):
    t = jnp.tanh(gates)                       # one EUP pass over (BP, 4H)
    s = 0.5 * t[:, :3 * H] + 0.5              # i, f, o
    g = t[:, 3 * H:]
    c_new = s[:, H:2 * H] * c_prev + s[:, :H] * g
    h_new = s[:, 2 * H:] * jnp.tanh(c_new)
    return h_new.astype(jnp.bfloat16), c_new


def _cell0(gates):
    # h_prev = c_prev = 0 (caller also skips the recurrent matmul).
    t = jnp.tanh(gates)
    s = 0.5 * t[:, :3 * H] + 0.5
    g = t[:, 3 * H:]
    c_new = s[:, :H] * g
    h_new = s[:, 2 * H:] * jnp.tanh(c_new)
    return h_new.astype(jnp.bfloat16), c_new


# ------------------------------ fused Pallas kernel --------------------------
# Operands:
#  x_ref : ((T_ENC+TAU)*BP, 32) bf16 — encoder features at lanes 0:12 (rows
#          0:64), decoder embeddings at lanes 16:24 (rows 64:96), zero padded.
#  w_ref : (416, 128) bf16 weight slab, row offsets:
#            0:32   layer-0 input weights (enc W_ih0 rows 0:12, dec W_ih0e 16:24)
#            32:64  enc W_hh0
#            64:128 enc layer1 [W_ih; W_hh]   128:192 enc layer2 [W_ih; W_hh]
#            192:256 dec layer0 [W_ih_h; W_hh] 256:320 dec layer1  320:384 dec layer2
#            384:416 head weight (mu cols 0:2, sigma cols 2:4, rest 0)
#  b_ref : (80, 128) f32 pre-broadcast biases: 6 blocks of 8 rows (enc0..2,
#          dec0..2) + 32 rows of head bias.
def _deepar_kernel(x_ref, w_ref, b_ref, out_ref):
    # Hoisted layer-0 input projections for ALL encoder + decoder steps.
    in_proj = _dot(x_ref[...], w_ref[0:32, :])          # (96, 4H) f32

    whh0_e = w_ref[32:64, :]
    wf_e1 = w_ref[64:128, :]
    wf_e2 = w_ref[128:192, :]
    wf_d0 = w_ref[192:256, :]
    wf_d1 = w_ref[256:320, :]
    wf_d2 = w_ref[320:384, :]
    w_head = w_ref[384:416, :]

    b0e, b1e, b2e = b_ref[0:8, :], b_ref[8:16, :], b_ref[16:24, :]
    b0d, b1d, b2d = b_ref[24:32, :], b_ref[32:40, :], b_ref[40:48, :]
    b_head = b_ref[48:80, :]

    h = [None] * N_LAYERS
    c = [None] * N_LAYERS

    # ------------------------------ encoder ---------------------------------
    # t == 0: zero initial state -> recurrent matmuls skipped.
    h[0], c[0] = _cell0(in_proj[0:BP, :] + b0e)
    h[1], c[1] = _cell0(_dot(h[0], wf_e1[0:H, :]) + b1e)
    h[2], c[2] = _cell0(_dot(h[1], wf_e2[0:H, :]) + b2e)

    for t in range(1, T_ENC):
        g0 = in_proj[t * BP:(t + 1) * BP, :] + b0e + _dot(h[0], whh0_e)
        h[0], c[0] = _cell(g0, c[0])
        g1 = _dot(jnp.concatenate([h[0], h[1]], axis=1), wf_e1) + b1e
        h[1], c[1] = _cell(g1, c[1])
        g2 = _dot(jnp.concatenate([h[1], h[2]], axis=1), wf_e2) + b2e
        h[2], c[2] = _cell(g2, c[2])

    # ------------------------------ decoder ---------------------------------
    h_tops = []
    off = T_ENC * BP
    for t in range(TAU):
        h_top = h[2]                         # previous-step top hidden (bf16)
        g0 = (in_proj[off + t * BP:off + (t + 1) * BP, :] + b0d
              + _dot(jnp.concatenate([h_top, h[0]], axis=1), wf_d0))
        h[0], c[0] = _cell(g0, c[0])
        g1 = _dot(jnp.concatenate([h[0], h[1]], axis=1), wf_d1) + b1d
        h[1], c[1] = _cell(g1, c[1])
        g2 = _dot(jnp.concatenate([h[1], h[2]], axis=1), wf_d2) + b2d
        h[2], c[2] = _cell(g2, c[2])
        h_tops.append(h[2])

    # Batched mu/sigma head: one MXU op, in-place softplus via lane mask,
    # one lane-dense (TAU*BP, 128) store. Wrapper slices mu / sigma lanes.
    outs = jnp.concatenate(h_tops, axis=0)               # (TAU*BP, H) bf16
    head = _dot(outs, w_head) + b_head                   # (TAU*BP, 4H) f32
    lane = jax.lax.broadcasted_iota(jnp.int32, head.shape, 1)
    out_ref[...] = jnp.where(lane < NUM_TARGETS, head, _softplus(head))


# ------------------------------ kernel wrapper -------------------------------
_VM = pl.BlockSpec(memory_space=pltpu.MemorySpace.VMEM)


def embed(idx, tables):
    """idx: (B, S, N_CATE) int32 -> (B, S, N_CATE * D_EMB) float32."""
    outs = [tables[i][idx[:, :, i]] for i in range(N_CATE)]
    return jnp.concatenate(outs, axis=-1)


@jax.jit
def deepar_pallas(conti, cate, future, p):
    emb_enc = embed(cate, p['enc_emb'])
    x_enc = jnp.concatenate([conti, emb_enc], axis=-1)          # (B, T, 12)
    emb_fut = embed(future, p['dec_emb'])                       # (B, TAU, 8)

    def to_rows(x, lane_off):
        # pad batch to BP, go time-major, place features at lane_off.
        seq, width = x.shape[1], x.shape[2]
        x = jnp.pad(x, ((0, BP - B), (0, 0), (0, 0)))
        x = jnp.transpose(x, (1, 0, 2)).reshape(seq * BP, width)
        return jnp.pad(x, ((0, 0), (lane_off, IN_LANES - lane_off - width)))

    x_all = jnp.concatenate([to_rows(x_enc, 0),
                             to_rows(emb_fut, DEC_LANE)],
                            axis=0).astype(jnp.bfloat16)        # (96, 32)

    out = pl.pallas_call(
        _deepar_kernel,
        out_shape=jax.ShapeDtypeStruct((TAU * BP, G), jnp.float32),
        in_specs=[_VM, _VM, _VM],
        out_specs=_VM,
    )(x_all, p['w_slab'], p['b_slab'])

    out = out.reshape(TAU, BP, G)
    mu = jnp.transpose(out[:, :B, :NUM_TARGETS], (1, 0, 2))
    sigma = jnp.transpose(out[:, :B, NUM_TARGETS:2 * NUM_TARGETS], (1, 0, 2))
    return mu, sigma


# ------------------------------ weight packing --------------------------------
def pack_params(p):
    """Build the bf16 weight slab and f32 bias slab (init-time only)."""
    # fold 0.5 into the i/f/o gate columns (sigmoid-via-tanh rewrite); the g
    # (tanh) columns are untouched.  0.5 is a power of two, so folding before
    # the bf16 cast is bit-identical to casting then scaling.
    scale = jnp.concatenate([jnp.full((3 * H,), 0.5, jnp.float32),
                             jnp.ones((H,), jnp.float32)])[None, :]

    def fold(w):
        return w * scale

    def zrows(r):
        return jnp.zeros((r, G), jnp.float32)

    e0, e1, e2 = p['enc_lstm']
    d0, d1, d2 = p['dec_lstm']
    wih0h, wih0e = d0[0][:D_MODEL], d0[0][D_MODEL:]
    w_mu, b_mu, w_sig, b_sig = p['lin']

    w_in0 = jnp.concatenate(
        [fold(e0[0]), zrows(DEC_LANE - ENC_IN),
         fold(wih0e), zrows(IN_LANES - DEC_LANE - DEC_EMB)], axis=0)  # (32,128)

    w_head = jnp.zeros((H, G), jnp.float32)
    w_head = w_head.at[:, :NUM_TARGETS].set(w_mu)
    w_head = w_head.at[:, NUM_TARGETS:2 * NUM_TARGETS].set(w_sig)

    w_slab = jnp.concatenate(
        [w_in0,                                                      # 0:32
         fold(e0[1]),                                                # 32:64
         jnp.concatenate([fold(e1[0]), fold(e1[1])], axis=0),        # 64:128
         jnp.concatenate([fold(e2[0]), fold(e2[1])], axis=0),        # 128:192
         jnp.concatenate([fold(wih0h), fold(d0[1])], axis=0),        # 192:256
         jnp.concatenate([fold(d1[0]), fold(d1[1])], axis=0),        # 256:320
         jnp.concatenate([fold(d2[0]), fold(d2[1])], axis=0),        # 320:384
         w_head], axis=0).astype(jnp.bfloat16)                       # 384:416

    def bb(b):                                    # pre-broadcast: no in-kernel
        return jnp.broadcast_to(fold(b), (BP, G))  # broadcast_in_dim per step

    b_head = jnp.zeros((1, G), jnp.float32)
    b_head = b_head.at[:, :NUM_TARGETS].set(b_mu)
    b_head = b_head.at[:, NUM_TARGETS:2 * NUM_TARGETS].set(b_sig)

    b_slab = jnp.concatenate(
        [bb(e0[2]), bb(e1[2]), bb(e2[2]),
         bb(d0[2]), bb(d1[2]), bb(d2[2]),
         jnp.broadcast_to(b_head, (TAU * BP, G))], axis=0)           # (80,128)
    return w_slab, b_slab


# --------------------------------- params ------------------------------------
def init_params(key):
    keys = iter(jax.random.split(key, 64))
    bound = 1.0 / (H ** 0.5)

    def uni(shape):
        return jax.random.uniform(next(keys), shape, jnp.float32, -bound, bound)

    enc_emb = [jax.random.normal(next(keys), (n, D_EMB), jnp.float32)
               for n in N_EMBEDDING]
    dec_emb = [jax.random.normal(next(keys), (n, D_EMB), jnp.float32)
               for n in N_EMBEDDING]

    # Permute PyTorch gate order [i, f, g, o] -> [i, f, o, g] so the three
    # sigmoid gates occupy the first 3H columns and tanh the last H columns.
    perm = jnp.concatenate([jnp.arange(0, 2 * H),
                            jnp.arange(3 * H, 4 * H),
                            jnp.arange(2 * H, 3 * H)])

    def lstm_layer(in_size):
        wih = uni((4 * H, in_size))[perm].T                  # (in, 4H)
        whh = uni((4 * H, H))[perm].T                        # (H, 4H)
        b = (uni((4 * H,)) + uni((4 * H,)))[perm].reshape(1, 4 * H)
        return wih, whh, b

    enc_lstm = [lstm_layer(ENC_IN if l == 0 else H) for l in range(N_LAYERS)]
    dec_lstm = [lstm_layer(DEC_IN if l == 0 else H) for l in range(N_LAYERS)]

    w_mu = uni((NUM_TARGETS, D_MODEL)).T                     # (H, NT)
    b_mu = uni((NUM_TARGETS,)).reshape(1, NUM_TARGETS)
    w_sig = uni((NUM_TARGETS, D_MODEL)).T
    b_sig = uni((NUM_TARGETS,)).reshape(1, NUM_TARGETS)

    p = dict(enc_emb=enc_emb, dec_emb=dec_emb, enc_lstm=enc_lstm,
             dec_lstm=dec_lstm, lin=(w_mu, b_mu, w_sig, b_sig))
    # All per-call weight preprocessing hoisted here (init-time, once).
    w_slab, b_slab = pack_params(p)
    p['w_slab'] = w_slab
    p['b_slab'] = b_slab
    return p


# ------------------------------ pure-JAX reference ---------------------------
def deepar_reference(conti, cate, future, p, *, bf16_matmul=False):
    cast = (lambda x: x.astype(jnp.bfloat16)) if bf16_matmul else (lambda x: x)

    def dot(a, b):
        return jnp.dot(cast(a), cast(b), preferred_element_type=jnp.float32,
                       precision=jax.lax.Precision.HIGHEST)

    def gate_update(gates, c_prev):                # gate order [i, f, o, g]
        s = jax.nn.sigmoid(gates[:, :3 * H])
        g = jnp.tanh(gates[:, 3 * H:])
        c_new = s[:, H:2 * H] * c_prev + s[:, 0:H] * g
        h_new = s[:, 2 * H:3 * H] * jnp.tanh(c_new)
        return h_new, c_new

    def cell(x, h, c, wih, whh, b):
        return gate_update(dot(x, wih) + dot(h, whh) + b, c)

    emb_enc = embed(cate, p['enc_emb'])
    x = jnp.concatenate([conti, emb_enc], axis=-1)
    h = [jnp.zeros((B, H), jnp.float32) for _ in range(N_LAYERS)]
    c = [jnp.zeros((B, H), jnp.float32) for _ in range(N_LAYERS)]
    for t in range(T_ENC):
        layer_in = x[:, t, :]
        for l in range(N_LAYERS):
            wih, whh, b = p['enc_lstm'][l]
            h[l], c[l] = cell(layer_in, h[l], c[l], wih, whh, b)
            layer_in = h[l]

    emb_fut = embed(future, p['dec_emb'])
    w_mu, b_mu, w_sig, b_sig = p['lin']
    mus, sigs = [], []
    for t in range(TAU):
        layer_in = jnp.concatenate([h[N_LAYERS - 1], emb_fut[:, t, :]], axis=-1)
        for l in range(N_LAYERS):
            wih, whh, b = p['dec_lstm'][l]
            h[l], c[l] = cell(layer_in, h[l], c[l], wih, whh, b)
            layer_in = h[l]
        mus.append(dot(layer_in, w_mu) + b_mu)
        sigs.append(_softplus(dot(layer_in, w_sig) + b_sig))
    return jnp.stack(mus, axis=1), jnp.stack(sigs, axis=1)


# ----------------------------------- main ------------------------------------
if __name__ == "__main__":
    root = jax.random.PRNGKey(0)
    pkey, dkey = jax.random.split(root)
    params = init_params(pkey)

    k_conti, k_cate, k_fut = jax.random.split(dkey, 3)
    conti = jax.random.normal(k_conti, (B, T_ENC, D_INPUT), jnp.float32)

    def rand_cate(key, seq_len):
        cols = []
        for kk, n in zip(jax.random.split(key, N_CATE), N_EMBEDDING):
            cols.append(jax.random.randint(kk, (B, seq_len, 1), 0, n,
                                           dtype=jnp.int32))
        return jnp.concatenate(cols, axis=-1)

    cate = rand_cate(k_cate, T_ENC)        # (B, T_ENC, N_CATE)
    future = rand_cate(k_fut, TAU)         # (B, TAU, N_CATE)

    mu, sigma = deepar_pallas(conti, cate, future, params)
    mu = jax.block_until_ready(mu)
    sigma = jax.block_until_ready(sigma)

    # 1) algorithmic check vs. a reference that mirrors bf16 matmul inputs
    mu_bf, sig_bf = deepar_reference(conti, cate, future, params,
                                     bf16_matmul=True)
    err_bf = max(float(jnp.max(jnp.abs(mu - mu_bf))),
                 float(jnp.max(jnp.abs(sigma - sig_bf))))
    # 2) accuracy check vs. the full-f32 spec reference (bf16-input tolerance)
    mu_fp, sig_fp = deepar_reference(conti, cate, future, params,
                                     bf16_matmul=False)
    err_fp = max(float(jnp.max(jnp.abs(mu - mu_fp))),
                 float(jnp.max(jnp.abs(sigma - sig_fp))))

    assert mu.shape == (B, TAU, NUM_TARGETS)
    assert sigma.shape == (B, TAU, NUM_TARGETS)
    assert err_bf < 5e-3, f"mismatch vs bf16-mirrored reference: {err_bf}"
    assert err_fp < 5e-2, f"mismatch vs f32 spec reference: {err_fp}"
    print("KERNEL_OK")
</pallas_src>

<mosaic_0001>
module attributes {stable_mosaic.version = 11 : i64} {
  func.func @_deepar_kernel(%arg0: memref<96x32xbf16, #tpu.memory_space<vmem>>, %arg1: memref<416x128xbf16, #tpu.memory_space<vmem>>, %arg2: memref<80x128xf32, #tpu.memory_space<vmem>>, %arg3: memref<32x128xf32, #tpu.memory_space<vmem>>) attributes {dimension_semantics = [], scalar_prefetch = 0 : i64, scratch_operands = 0 : i64, tpu.core_type = #tpu.core_type<tc>} {
    %c0 = arith.constant 0 : index
    %c0_0 = arith.constant 0 : index
    %0 = vector.load %arg0[%c0, %c0_0] : memref<96x32xbf16, #tpu.memory_space<vmem>>, vector<96x32xbf16>
    %c0_1 = arith.constant 0 : index
    %c0_2 = arith.constant 0 : index
    %1 = vector.load %arg1[%c0_1, %c0_2] : memref<416x128xbf16, #tpu.memory_space<vmem>>, vector<32x128xbf16>
    %cst = arith.constant dense<0.000000e+00> : vector<96x128xf32>
    %2 = tpu.matmul %0, %1, %cst {dimension_numbers = #tpu.dot_dimension_numbers<[1], [0], [0], [1], [0, 0, 1, 1], [], []>} : vector<96x32xbf16>, vector<32x128xbf16>, vector<96x128xf32> -> vector<96x128xf32>
    %c32 = arith.constant 32 : index
    %c0_3 = arith.constant 0 : index
    %3 = vector.load %arg1[%c32, %c0_3] : memref<416x128xbf16, #tpu.memory_space<vmem>>, vector<32x128xbf16>
    %c64 = arith.constant 64 : index
    %c0_4 = arith.constant 0 : index
    %4 = vector.load %arg1[%c64, %c0_4] : memref<416x128xbf16, #tpu.memory_space<vmem>>, vector<64x128xbf16>
    %c128 = arith.constant 128 : index
    %c0_5 = arith.constant 0 : index
    %5 = vector.load %arg1[%c128, %c0_5] : memref<416x128xbf16, #tpu.memory_space<vmem>>, vector<64x128xbf16>
    %c192 = arith.constant 192 : index
    %c0_6 = arith.constant 0 : index
    %6 = vector.load %arg1[%c192, %c0_6] : memref<416x128xbf16, #tpu.memory_space<vmem>>, vector<64x128xbf16>
    %c256 = arith.constant 256 : index
    %c0_7 = arith.constant 0 : index
    %7 = vector.load %arg1[%c256, %c0_7] : memref<416x128xbf16, #tpu.memory_space<vmem>>, vector<64x128xbf16>
    %c320 = arith.constant 320 : index
    %c0_8 = arith.constant 0 : index
    %8 = vector.load %arg1[%c320, %c0_8] : memref<416x128xbf16, #tpu.memory_space<vmem>>, vector<64x128xbf16>
    %c384 = arith.constant 384 : index
    %c0_9 = arith.constant 0 : index
    %9 = vector.load %arg1[%c384, %c0_9] : memref<416x128xbf16, #tpu.memory_space<vmem>>, vector<32x128xbf16>
    %c0_10 = arith.constant 0 : index
    %c0_11 = arith.constant 0 : index
    %10 = vector.load %arg2[%c0_10, %c0_11] : memref<80x128xf32, #tpu.memory_space<vmem>>, vector<8x128xf32>
    %c8 = arith.constant 8 : index
    %c0_12 = arith.constant 0 : index
    %11 = vector.load %arg2[%c8, %c0_12] : memref<80x128xf32, #tpu.memory_space<vmem>>, vector<8x128xf32>
    %c16 = arith.constant 16 : index
    %c0_13 = arith.constant 0 : index
    %12 = vector.load %arg2[%c16, %c0_13] : memref<80x128xf32, #tpu.memory_space<vmem>>, vector<8x128xf32>
    %c24 = arith.constant 24 : index
    %c0_14 = arith.constant 0 : index
    %13 = vector.load %arg2[%c24, %c0_14] : memref<80x128xf32, #tpu.memory_space<vmem>>, vector<8x128xf32>
    %c32_15 = arith.constant 32 : index
    %c0_16 = arith.constant 0 : index
    %14 = vector.load %arg2[%c32_15, %c0_16] : memref<80x128xf32, #tpu.memory_space<vmem>>, vector<8x128xf32>
    %c40 = arith.constant 40 : index
    %c0_17 = arith.constant 0 : index
    %15 = vector.load %arg2[%c40, %c0_17] : memref<80x128xf32, #tpu.memory_space<vmem>>, vector<8x128xf32>
    %c48 = arith.constant 48 : index
    %c0_18 = arith.constant 0 : index
    %16 = vector.load %arg2[%c48, %c0_18] : memref<80x128xf32, #tpu.memory_space<vmem>>, vector<32x128xf32>
    %17 = vector.extract_strided_slice %2 {offsets = [0, 0], sizes = [8, 128], strides = [1, 1]} : vector<96x128xf32> to vector<8x128xf32>
    %18 = arith.addf %17, %10 : vector<8x128xf32>
    %19 = math.tanh %18 : vector<8x128xf32>
    %20 = vector.extract_strided_slice %19 {offsets = [0, 0], sizes = [8, 96], strides = [1, 1]} : vector<8x128xf32> to vector<8x96xf32>
    %cst_19 = arith.constant 5.000000e-01 : f32
    %21 = vector.broadcast %cst_19 : f32 to vector<8x96xf32>
    %22 = arith.mulf %21, %20 : vector<8x96xf32>
    %cst_20 = arith.constant 5.000000e-01 : f32
    %23 = vector.broadcast %cst_20 : f32 to vector<8x96xf32>
    %24 = arith.addf %22, %23 : vector<8x96xf32>
    %25 = vector.extract_strided_slice %19 {offsets = [0, 96], sizes = [8, 32], strides = [1, 1]} : vector<8x128xf32> to vector<8x32xf32>
    %26 = vector.extract_strided_slice %24 {offsets = [0, 0], sizes = [8, 32], strides = [1, 1]} : vector<8x96xf32> to vector<8x32xf32>
    %27 = arith.mulf %26, %25 : vector<8x32xf32>
    %28 = vector.extract_strided_slice %24 {offsets = [0, 64], sizes = [8, 32], strides = [1, 1]} : vector<8x96xf32> to vector<8x32xf32>
    %29 = math.tanh %27 : vector<8x32xf32>
    %30 = arith.mulf %28, %29 : vector<8x32xf32>
    %31 = arith.truncf %30 : vector<8x32xf32> to vector<8x32xbf16>
    %32 = vector.extract_strided_slice %4 {offsets = [0, 0], sizes = [32, 128], strides = [1, 1]} : vector<64x128xbf16> to vector<32x128xbf16>
    %cst_21 = arith.constant dense<0.000000e+00> : vector<8x128xf32>
    %33 = tpu.matmul %31, %32, %cst_21 {dimension_numbers = #tpu.dot_dimension_numbers<[1], [0], [0], [1], [0, 0, 1, 1], [], []>} : vector<8x32xbf16>, vector<32x128xbf16>, vector<8x128xf32> -> vector<8x128xf32>
    %34 = arith.addf %33, %11 : vector<8x128xf32>
    %35 = math.tanh %34 : vector<8x128xf32>
    %36 = vector.extract_strided_slice %35 {offsets = [0, 0], sizes = [8, 96], strides = [1, 1]} : vector<8x128xf32> to vector<8x96xf32>
    %cst_22 = arith.constant 5.000000e-01 : f32
    %37 = vector.broadcast %cst_22 : f32 to vector<8x96xf32>
    %38 = arith.mulf %37, %36 : vector<8x96xf32>
    %cst_23 = arith.constant 5.000000e-01 : f32
    %39 = vector.broadcast %cst_23 : f32 to vector<8x96xf32>
    %40 = arith.addf %38, %39 : vector<8x96xf32>
    %41 = vector.extract_strided_slice %35 {offsets = [0, 96], sizes = [8, 32], strides = [1, 1]} : vector<8x128xf32> to vector<8x32xf32>
    %42 = vector.extract_strided_slice %40 {offsets = [0, 0], sizes = [8, 32], strides = [1, 1]} : vector<8x96xf32> to vector<8x32xf32>
    %43 = arith.mulf %42, %41 : vector<8x32xf32>
    %44 = vector.extract_strided_slice %40 {offsets = [0, 64], sizes = [8, 32], strides = [1, 1]} : vector<8x96xf32> to vector<8x32xf32>
    %45 = math.tanh %43 : vector<8x32xf32>
    %46 = arith.mulf %44, %45 : vector<8x32xf32>
    %47 = arith.truncf %46 : vector<8x32xf32> to vector<8x32xbf16>
    %48 = vector.extract_strided_slice %5 {offsets = [0, 0], sizes = [32, 128], strides = [1, 1]} : vector<64x128xbf16> to vector<32x128xbf16>
    %cst_24 = arith.constant dense<0.000000e+00> : vector<8x128xf32>
    %49 = tpu.matmul %47, %48, %cst_24 {dimension_numbers = #tpu.dot_dimension_numbers<[1], [0], [0], [1], [0, 0, 1, 1], [], []>} : vector<8x32xbf16>, vector<32x128xbf16>, vector<8x128xf32> -> vector<8x128xf32>
    %50 = arith.addf %49, %12 : vector<8x128xf32>
    %51 = math.tanh %50 : vector<8x128xf32>
    %52 = vector.extract_strided_slice %51 {offsets = [0, 0], sizes = [8, 96], strides = [1, 1]} : vector<8x128xf32> to vector<8x96xf32>
    %cst_25 = arith.constant 5.000000e-01 : f32
    %53 = vector.broadcast %cst_25 : f32 to vector<8x96xf32>
    %54 = arith.mulf %53, %52 : vector<8x96xf32>
    %cst_26 = arith.constant 5.000000e-01 : f32
    %55 = vector.broadcast %cst_26 : f32 to vector<8x96xf32>
    %56 = arith.addf %54, %55 : vector<8x96xf32>
    %57 = vector.extract_strided_slice %51 {offsets = [0, 96], sizes = [8, 32], strides = [1, 1]} : vector<8x128xf32> to vector<8x32xf32>
    %58 = vector.extract_strided_slice %56 {offsets = [0, 0], sizes = [8, 32], strides = [1, 1]} : vector<8x96xf32> to vector<8x32xf32>
    %59 = arith.mulf %58, %57 : vector<8x32xf32>
    %60 = vector.extract_strided_slice %56 {offsets = [0, 64], sizes = [8, 32], strides = [1, 1]} : vector<8x96xf32> to vector<8x32xf32>
    %61 = math.tanh %59 : vector<8x32xf32>
    %62 = arith.mulf %60, %61 : vector<8x32xf32>
    %63 = arith.truncf %62 : vector<8x32xf32> to vector<8x32xbf16>
    %64 = vector.extract_strided_slice %2 {offsets = [8, 0], sizes = [8, 128], strides = [1, 1]} : vector<96x128xf32> to vector<8x128xf32>
    %65 = arith.addf %64, %10 : vector<8x128xf32>
    %cst_27 = arith.constant dense<0.000000e+00> : vector<8x128xf32>
    %66 = tpu.matmul %31, %3, %cst_27 {dimension_numbers = #tpu.dot_dimension_numbers<[1], [0], [0], [1], [0, 0, 1, 1], [], []>} : vector<8x32xbf16>, vector<32x128xbf16>, vector<8x128xf32> -> vector<8x128xf32>
    %67 = arith.addf %65, %66 : vector<8x128xf32>
    %68 = math.tanh %67 : vector<8x128xf32>
    %69 = vector.extract_strided_slice %68 {offsets = [0, 0], sizes = [8, 96], strides = [1, 1]} : vector<8x128xf32> to vector<8x96xf32>
    %cst_28 = arith.constant 5.000000e-01 : f32
    %70 = vector.broadcast %cst_28 : f32 to vector<8x96xf32>
    %71 = arith.mulf %70, %69 : vector<8x96xf32>
    %cst_29 = arith.constant 5.000000e-01 : f32
    %72 = vector.broadcast %cst_29 : f32 to vector<8x96xf32>
    %73 = arith.addf %71, %72 : vector<8x96xf32>
    %74 = vector.extract_strided_slice %68 {offsets = [0, 96], sizes = [8, 32], strides = [1, 1]} : vector<8x128xf32> to vector<8x32xf32>
    %75 = vector.extract_strided_slice %73 {offsets = [0, 32], sizes = [8, 32], strides = [1, 1]} : vector<8x96xf32> to vector<8x32xf32>
    %76 = arith.mulf %75, %27 : vector<8x32xf32>
    %77 = vector.extract_strided_slice %73 {offsets = [0, 0], sizes = [8, 32], strides = [1, 1]} : vector<8x96xf32> to vector<8x32xf32>
    %78 = arith.mulf %77, %74 : vector<8x32xf32>
    %79 = arith.addf %76, %78 : vector<8x32xf32>
    %80 = vector.extract_strided_slice %73 {offsets = [0, 64], sizes = [8, 32], strides = [1, 1]} : vector<8x96xf32> to vector<8x32xf32>
    %81 = math.tanh %79 : vector<8x32xf32>
    %82 = arith.mulf %80, %81 : vector<8x32xf32>
    %83 = arith.truncf %82 : vector<8x32xf32> to vector<8x32xbf16>
    %84 = tpu.concatenate %83, %47 in 1 : vector<8x32xbf16>, vector<8x32xbf16> -> vector<8x64xbf16>
    %cst_30 = arith.constant dense<0.000000e+00> : vector<8x128xf32>
    %85 = tpu.matmul %84, %4, %cst_30 {dimension_numbers = #tpu.dot_dimension_numbers<[1], [0], [0], [1], [0, 0, 1, 1], [], []>} : vector<8x64xbf16>, vector<64x128xbf16>, vector<8x128xf32> -> vector<8x128xf32>
    %86 = arith.addf %85, %11 : vector<8x128xf32>
    %87 = math.tanh %86 : vector<8x128xf32>
    %88 = vector.extract_strided_slice %87 {offsets = [0, 0], sizes = [8, 96], strides = [1, 1]} : vector<8x128xf32> to vector<8x96xf32>
    %cst_31 = arith.constant 5.000000e-01 : f32
    %89 = vector.broadcast %cst_31 : f32 to vector<8x96xf32>
    %90 = arith.mulf %89, %88 : vector<8x96xf32>
    %cst_32 = arith.constant 5.000000e-01 : f32
    %91 = vector.broadcast %cst_32 : f32 to vector<8x96xf32>
    %92 = arith.addf %90, %91 : vector<8x96xf32>
    %93 = vector.extract_strided_slice %87 {offsets = [0, 96], sizes = [8, 32], strides = [1, 1]} : vector<8x128xf32> to vector<8x32xf32>
    %94 = vector.extract_strided_slice %92 {offsets = [0, 32], sizes = [8, 32], strides = [1, 1]} : vector<8x96xf32> to vector<8x32xf32>
    %95 = arith.mulf %94, %43 : vector<8x32xf32>
    %96 = vector.extract_strided_slice %92 {offsets = [0, 0], sizes = [8, 32], strides = [1, 1]} : vector<8x96xf32> to vector<8x32xf32>
    %97 = arith.mulf %96, %93 : vector<8x32xf32>
    %98 = arith.addf %95, %97 : vector<8x32xf32>
    %99 = vector.extract_strided_slice %92 {offsets = [0, 64], sizes = [8, 32], strides = [1, 1]} : vector<8x96xf32> to vector<8x32xf32>
    %100 = math.tanh %98 : vector<8x32xf32>
    %101 = arith.mulf %99, %100 : vector<8x32xf32>
    %102 = arith.truncf %101 : vector<8x32xf32> to vector<8x32xbf16>
    %103 = tpu.concatenate %102, %63 in 1 : vector<8x32xbf16>, vector<8x32xbf16> -> vector<8x64xbf16>
    %cst_33 = arith.constant dense<0.000000e+00> : vector<8x128xf32>
    %104 = tpu.matmul %103, %5, %cst_33 {dimension_numbers = #tpu.dot_dimension_numbers<[1], [0], [0], [1], [0, 0, 1, 1], [], []>} : vector<8x64xbf16>, vector<64x128xbf16>, vector<8x128xf32> -> vector<8x128xf32>
    %105 = arith.addf %104, %12 : vector<8x128xf32>
    %106 = math.tanh %105 : vector<8x128xf32>
    %107 = vector.extract_strided_slice %106 {offsets = [0, 0], sizes = [8, 96], strides = [1, 1]} : vector<8x128xf32> to vector<8x96xf32>
    %cst_34 = arith.constant 5.000000e-01 : f32
    %108 = vector.broadcast %cst_34 : f32 to vector<8x96xf32>
    %109 = arith.mulf %108, %107 : vector<8x96xf32>
    %cst_35 = arith.constant 5.000000e-01 : f32
    %110 = vector.broadcast %cst_35 : f32 to vector<8x96xf32>
    %111 = arith.addf %109, %110 : vector<8x96xf32>
    %112 = vector.extract_strided_slice %106 {offsets = [0, 96], sizes = [8, 32], strides = [1, 1]} : vector<8x128xf32> to vector<8x32xf32>
    %113 = vector.extract_strided_slice %111 {offsets = [0, 32], sizes = [8, 32], strides = [1, 1]} : vector<8x96xf32> to vector<8x32xf32>
    %114 = arith.mulf %113, %59 : vector<8x32xf32>
    %115 = vector.extract_strided_slice %111 {offsets = [0, 0], sizes = [8, 32], strides = [1, 1]} : vector<8x96xf32> to vector<8x32xf32>
    %116 = arith.mulf %115, %112 : vector<8x32xf32>
    %117 = arith.addf %114, %116 : vector<8x32xf32>
    %118 = vector.extract_strided_slice %111 {offsets = [0, 64], sizes = [8, 32], strides = [1, 1]} : vector<8x96xf32> to vector<8x32xf32>
    %119 = math.tanh %117 : vector<8x32xf32>
    %120 = arith.mulf %118, %119 : vector<8x32xf32>
    %121 = arith.truncf %120 : vector<8x32xf32> to vector<8x32xbf16>
    %122 = vector.extract_strided_slice %2 {offsets = [16, 0], sizes = [8, 128], strides = [1, 1]} : vector<96x128xf32> to vector<8x128xf32>
    %123 = arith.addf %122, %10 : vector<8x128xf32>
    %cst_36 = arith.constant dense<0.000000e+00> : vector<8x128xf32>
    %124 = tpu.matmul %83, %3, %cst_36 {dimension_numbers = #tpu.dot_dimension_numbers<[1], [0], [0], [1], [0, 0, 1, 1], [], []>} : vector<8x32xbf16>, vector<32x128xbf16>, vector<8x128xf32> -> vector<8x128xf32>
    %125 = arith.addf %123, %124 : vector<8x128xf32>
    %126 = math.tanh %125 : vector<8x128xf32>
    %127 = vector.extract_strided_slice %126 {offsets = [0, 0], sizes = [8, 96], strides = [1, 1]} : vector<8x128xf32> to vector<8x96xf32>
    %cst_37 = arith.constant 5.000000e-01 : f32
    %128 = vector.broadcast %cst_37 : f32 to vector<8x96xf32>
    %129 = arith.mulf %128, %127 : vector<8x96xf32>
    %cst_38 = arith.constant 5.000000e-01 : f32
    %130 = vector.broadcast %cst_38 : f32 to vector<8x96xf32>
    %131 = arith.addf %129, %130 : vector<8x96xf32>
    %132 = vector.extract_strided_slice %126 {offsets = [0, 96], sizes = [8, 32], strides = [1, 1]} : vector<8x128xf32> to vector<8x32xf32>
    %133 = vector.extract_strided_slice %131 {offsets = [0, 32], sizes = [8, 32], strides = [1, 1]} : vector<8x96xf32> to vector<8x32xf32>
    %134 = arith.mulf %133, %79 : vector<8x32xf32>
    %135 = vector.extract_strided_slice %131 {offsets = [0, 0], sizes = [8, 32], strides = [1, 1]} : vector<8x96xf32> to vector<8x32xf32>
    %136 = arith.mulf %135, %132 : vector<8x32xf32>
    %137 = arith.addf %134, %136 : vector<8x32xf32>
    %138 = vector.extract_strided_slice %131 {offsets = [0, 64], sizes = [8, 32], strides = [1, 1]} : vector<8x96xf32> to vector<8x32xf32>
    %139 = math.tanh %137 : vector<8x32xf32>
    %140 = arith.mulf %138, %139 : vector<8x32xf32>
    %141 = arith.truncf %140 : vector<8x32xf32> to vector<8x32xbf16>
    %142 = tpu.concatenate %141, %102 in 1 : vector<8x32xbf16>, vector<8x32xbf16> -> vector<8x64xbf16>
    %cst_39 = arith.constant dense<0.000000e+00> : vector<8x128xf32>
    %143 = tpu.matmul %142, %4, %cst_39 {dimension_numbers = #tpu.dot_dimension_numbers<[1], [0], [0], [1], [0, 0, 1, 1], [], []>} : vector<8x64xbf16>, vector<64x128xbf16>, vector<8x128xf32> -> vector<8x128xf32>
    %144 = arith.addf %143, %11 : vector<8x128xf32>
    %145 = math.tanh %144 : vector<8x128xf32>
    %146 = vector.extract_strided_slice %145 {offsets = [0, 0], sizes = [8, 96], strides = [1, 1]} : vector<8x128xf32> to vector<8x96xf32>
    %cst_40 = arith.constant 5.000000e-01 : f32
    %147 = vector.broadcast %cst_40 : f32 to vector<8x96xf32>
    %148 = arith.mulf %147, %146 : vector<8x96xf32>
    %cst_41 = arith.constant 5.000000e-01 : f32
    %149 = vector.broadcast %cst_41 : f32 to vector<8x96xf32>
    %150 = arith.addf %148, %149 : vector<8x96xf32>
    %151 = vector.extract_strided_slice %145 {offsets = [0, 96], sizes = [8, 32], strides = [1, 1]} : vector<8x128xf32> to vector<8x32xf32>
    %152 = vector.extract_strided_slice %150 {offsets = [0, 32], sizes = [8, 32], strides = [1, 1]} : vector<8x96xf32> to vector<8x32xf32>
    %153 = arith.mulf %152, %98 : vector<8x32xf32>
    %154 = vector.extract_strided_slice %150 {offsets = [0, 0], sizes = [8, 32], strides = [1, 1]} : vector<8x96xf32> to vector<8x32xf32>
    %155 = arith.mulf %154, %151 : vector<8x32xf32>
    %156 = arith.addf %153, %155 : vector<8x32xf32>
    %157 = vector.extract_strided_slice %150 {offsets = [0, 64], sizes = [8, 32], strides = [1, 1]} : vector<8x96xf32> to vector<8x32xf32>
    %158 = math.tanh %156 : vector<8x32xf32>
    %159 = arith.mulf %157, %158 : vector<8x32xf32>
    %160 = arith.truncf %159 : vector<8x32xf32> to vector<8x32xbf16>
    %161 = tpu.concatenate %160, %121 in 1 : vector<8x32xbf16>, vector<8x32xbf16> -> vector<8x64xbf16>
    %cst_42 = arith.constant dense<0.000000e+00> : vector<8x128xf32>
    %162 = tpu.matmul %161, %5, %cst_42 {dimension_numbers = #tpu.dot_dimension_numbers<[1], [0], [0], [1], [0, 0, 1, 1], [], []>} : vector<8x64xbf16>, vector<64x128xbf16>, vector<8x128xf32> -> vector<8x128xf32>
    %163 = arith.addf %162, %12 : vector<8x128xf32>
    %164 = math.tanh %163 : vector<8x128xf32>
    %165 = vector.extract_strided_slice %164 {offsets = [0, 0], sizes = [8, 96], strides = [1, 1]} : vector<8x128xf32> to vector<8x96xf32>
    %cst_43 = arith.constant 5.000000e-01 : f32
    %166 = vector.broadcast %cst_43 : f32 to vector<8x96xf32>
    %167 = arith.mulf %166, %165 : vector<8x96xf32>
    %cst_44 = arith.constant 5.000000e-01 : f32
    %168 = vector.broadcast %cst_44 : f32 to vector<8x96xf32>
    %169 = arith.addf %167, %168 : vector<8x96xf32>
    %170 = vector.extract_strided_slice %164 {offsets = [0, 96], sizes = [8, 32], strides = [1, 1]} : vector<8x128xf32> to vector<8x32xf32>
    %171 = vector.extract_strided_slice %169 {offsets = [0, 32], sizes = [8, 32], strides = [1, 1]} : vector<8x96xf32> to vector<8x32xf32>
    %172 = arith.mulf %171, %117 : vector<8x32xf32>
    %173 = vector.extract_strided_slice %169 {offsets = [0, 0], sizes = [8, 32], strides = [1, 1]} : vector<8x96xf32> to vector<8x32xf32>
    %174 = arith.mulf %173, %170 : vector<8x32xf32>
    %175 = arith.addf %172, %174 : vector<8x32xf32>
    %176 = vector.extract_strided_slice %169 {offsets = [0, 64], sizes = [8, 32], strides = [1, 1]} : vector<8x96xf32> to vector<8x32xf32>
    %177 = math.tanh %175 : vector<8x32xf32>
    %178 = arith.mulf %176, %177 : vector<8x32xf32>
    %179 = arith.truncf %178 : vector<8x32xf32> to vector<8x32xbf16>
    %180 = vector.extract_strided_slice %2 {offsets = [24, 0], sizes = [8, 128], strides = [1, 1]} : vector<96x128xf32> to vector<8x128xf32>
    %181 = arith.addf %180, %10 : vector<8x128xf32>
    %cst_45 = arith.constant dense<0.000000e+00> : vector<8x128xf32>
    %182 = tpu.matmul %141, %3, %cst_45 {dimension_numbers = #tpu.dot_dimension_numbers<[1], [0], [0], [1], [0, 0, 1, 1], [], []>} : vector<8x32xbf16>, vector<32x128xbf16>, vector<8x128xf32> -> vector<8x128xf32>
    %183 = arith.addf %181, %182 : vector<8x128xf32>
    %184 = math.tanh %183 : vector<8x128xf32>
    %185 = vector.extract_strided_slice %184 {offsets = [0, 0], sizes = [8, 96], strides = [1, 1]} : vector<8x128xf32> to vector<8x96xf32>
    %cst_46 = arith.constant 5.000000e-01 : f32
    %186 = vector.broadcast %cst_46 : f32 to vector<8x96xf32>
    %187 = arith.mulf %186, %185 : vector<8x96xf32>
    %cst_47 = arith.constant 5.000000e-01 : f32
    %188 = vector.broadcast %cst_47 : f32 to vector<8x96xf32>
    %189 = arith.addf %187, %188 : vector<8x96xf32>
    %190 = vector.extract_strided_slice %184 {offsets = [0, 96], sizes = [8, 32], strides = [1, 1]} : vector<8x128xf32> to vector<8x32xf32>
    %191 = vector.extract_strided_slice %189 {offsets = [0, 32], sizes = [8, 32], strides = [1, 1]} : vector<8x96xf32> to vector<8x32xf32>
    %192 = arith.mulf %191, %137 : vector<8x32xf32>
    %193 = vector.extract_strided_slice %189 {offsets = [0, 0], sizes = [8, 32], strides = [1, 1]} : vector<8x96xf32> to vector<8x32xf32>
    %194 = arith.mulf %193, %190 : vector<8x32xf32>
    %195 = arith.addf %192, %194 : vector<8x32xf32>
    %196 = vector.extract_strided_slice %189 {offsets = [0, 64], sizes = [8, 32], strides = [1, 1]} : vector<8x96xf32> to vector<8x32xf32>
    %197 = math.tanh %195 : vector<8x32xf32>
    %198 = arith.mulf %196, %197 : vector<8x32xf32>
    %199 = arith.truncf %198 : vector<8x32xf32> to vector<8x32xbf16>
    %200 = tpu.concatenate %199, %160 in 1 : vector<8x32xbf16>, vector<8x32xbf16> -> vector<8x64xbf16>
    %cst_48 = arith.constant dense<0.000000e+00> : vector<8x128xf32>
    %201 = tpu.matmul %200, %4, %cst_48 {dimension_numbers = #tpu.dot_dimension_numbers<[1], [0], [0], [1], [0, 0, 1, 1], [], []>} : vector<8x64xbf16>, vector<64x128xbf16>, vector<8x128xf32> -> vector<8x128xf32>
    %202 = arith.addf %201, %11 : vector<8x128xf32>
    %203 = math.tanh %202 : vector<8x128xf32>
    %204 = vector.extract_strided_slice %203 {offsets = [0, 0], sizes = [8, 96], strides = [1, 1]} : vector<8x128xf32> to vector<8x96xf32>
    %cst_49 = arith.constant 5.000000e-01 : f32
    %205 = vector.broadcast %cst_49 : f32 to vector<8x96xf32>
    %206 = arith.mulf %205, %204 : vector<8x96xf32>
    %cst_50 = arith.constant 5.000000e-01 : f32
    %207 = vector.broadcast %cst_50 : f32 to vector<8x96xf32>
    %208 = arith.addf %206, %207 : vector<8x96xf32>
    %209 = vector.extract_strided_slice %203 {offsets = [0, 96], sizes = [8, 32], strides = [1, 1]} : vector<8x128xf32> to vector<8x32xf32>
    %210 = vector.extract_strided_slice %208 {offsets = [0, 32], sizes = [8, 32], strides = [1, 1]} : vector<8x96xf32> to vector<8x32xf32>
    %211 = arith.mulf %210, %156 : vector<8x32xf32>
    %212 = vector.extract_strided_slice %208 {offsets = [0, 0], sizes = [8, 32], strides = [1, 1]} : vector<8x96xf32> to vector<8x32xf32>
    %213 = arith.mulf %212, %209 : vector<8x32xf32>
    %214 = arith.addf %211, %213 : vector<8x32xf32>
    %215 = vector.extract_strided_slice %208 {offsets = [0, 64], sizes = [8, 32], strides = [1, 1]} : vector<8x96xf32> to vector<8x32xf32>
    %216 = math.tanh %214 : vector<8x32xf32>
    %217 = arith.mulf %215, %216 : vector<8x32xf32>
    %218 = arith.truncf %217 : vector<8x32xf32> to vector<8x32xbf16>
    %219 = tpu.concatenate %218, %179 in 1 : vector<8x32xbf16>, vector<8x32xbf16> -> vector<8x64xbf16>
    %cst_51 = arith.constant dense<0.000000e+00> : vector<8x128xf32>
    %220 = tpu.matmul %219, %5, %cst_51 {dimension_numbers = #tpu.dot_dimension_numbers<[1], [0], [0], [1], [0, 0, 1, 1], [], []>} : vector<8x64xbf16>, vector<64x128xbf16>, vector<8x128xf32> -> vector<8x128xf32>
    %221 = arith.addf %220, %12 : vector<8x128xf32>
    %222 = math.tanh %221 : vector<8x128xf32>
    %223 = vector.extract_strided_slice %222 {offsets = [0, 0], sizes = [8, 96], strides = [1, 1]} : vector<8x128xf32> to vector<8x96xf32>
    %cst_52 = arith.constant 5.000000e-01 : f32
    %224 = vector.broadcast %cst_52 : f32 to vector<8x96xf32>
    %225 = arith.mulf %224, %223 : vector<8x96xf32>
    %cst_53 = arith.constant 5.000000e-01 : f32
    %226 = vector.broadcast %cst_53 : f32 to vector<8x96xf32>
    %227 = arith.addf %225, %226 : vector<8x96xf32>
    %228 = vector.extract_strided_slice %222 {offsets = [0, 96], sizes = [8, 32], strides = [1, 1]} : vector<8x128xf32> to vector<8x32xf32>
    %229 = vector.extract_strided_slice %227 {offsets = [0, 32], sizes = [8, 32], strides = [1, 1]} : vector<8x96xf32> to vector<8x32xf32>
    %230 = arith.mulf %229, %175 : vector<8x32xf32>
    %231 = vector.extract_strided_slice %227 {offsets = [0, 0], sizes = [8, 32], strides = [1, 1]} : vector<8x96xf32> to vector<8x32xf32>
    %232 = arith.mulf %231, %228 : vector<8x32xf32>
    %233 = arith.addf %230, %232 : vector<8x32xf32>
    %234 = vector.extract_strided_slice %227 {offsets = [0, 64], sizes = [8, 32], strides = [1, 1]} : vector<8x96xf32> to vector<8x32xf32>
    %235 = math.tanh %233 : vector<8x32xf32>
    %236 = arith.mulf %234, %235 : vector<8x32xf32>
    %237 = arith.truncf %236 : vector<8x32xf32> to vector<8x32xbf16>
    %238 = vector.extract_strided_slice %2 {offsets = [32, 0], sizes = [8, 128], strides = [1, 1]} : vector<96x128xf32> to vector<8x128xf32>
    %239 = arith.addf %238, %10 : vector<8x128xf32>
    %cst_54 = arith.constant dense<0.000000e+00> : vector<8x128xf32>
    %240 = tpu.matmul %199, %3, %cst_54 {dimension_numbers = #tpu.dot_dimension_numbers<[1], [0], [0], [1], [0, 0, 1, 1], [], []>} : vector<8x32xbf16>, vector<32x128xbf16>, vector<8x128xf32> -> vector<8x128xf32>
    %241 = arith.addf %239, %240 : vector<8x128xf32>
    %242 = math.tanh %241 : vector<8x128xf32>
    %243 = vector.extract_strided_slice %242 {offsets = [0, 0], sizes = [8, 96], strides = [1, 1]} : vector<8x128xf32> to vector<8x96xf32>
    %cst_55 = arith.constant 5.000000e-01 : f32
    %244 = vector.broadcast %cst_55 : f32 to vector<8x96xf32>
    %245 = arith.mulf %244, %243 : vector<8x96xf32>
    %cst_56 = arith.constant 5.000000e-01 : f32
    %246 = vector.broadcast %cst_56 : f32 to vector<8x96xf32>
    %247 = arith.addf %245, %246 : vector<8x96xf32>
    %248 = vector.extract_strided_slice %242 {offsets = [0, 96], sizes = [8, 32], strides = [1, 1]} : vector<8x128xf32> to vector<8x32xf32>
    %249 = vector.extract_strided_slice %247 {offsets = [0, 32], sizes = [8, 32], strides = [1, 1]} : vector<8x96xf32> to vector<8x32xf32>
    %250 = arith.mulf %249, %195 : vector<8x32xf32>
    %251 = vector.extract_strided_slice %247 {offsets = [0, 0], sizes = [8, 32], strides = [1, 1]} : vector<8x96xf32> to vector<8x32xf32>
    %252 = arith.mulf %251, %248 : vector<8x32xf32>
    %253 = arith.addf %250, %252 : vector<8x32xf32>
    %254 = vector.extract_strided_slice %247 {offsets = [0, 64], sizes = [8, 32], strides = [1, 1]} : vector<8x96xf32> to vector<8x32xf32>
    %255 = math.tanh %253 : vector<8x32xf32>
    %256 = arith.mulf %254, %255 : vector<8x32xf32>
    %257 = arith.truncf %256 : vector<8x32xf32> to vector<8x32xbf16>
    %258 = tpu.concatenate %257, %218 in 1 : vector<8x32xbf16>, vector<8x32xbf16> -> vector<8x64xbf16>
    %cst_57 = arith.constant dense<0.000000e+00> : vector<8x128xf32>
    %259 = tpu.matmul %258, %4, %cst_57 {dimension_numbers = #tpu.dot_dimension_numbers<[1], [0], [0], [1], [0, 0, 1, 1], [], []>} : vector<8x64xbf16>, vector<64x128xbf16>, vector<8x128xf32> -> vector<8x128xf32>
    %260 = arith.addf %259, %11 : vector<8x128xf32>
    %261 = math.tanh %260 : vector<8x128xf32>
    %262 = vector.extract_strided_slice %261 {offsets = [0, 0], sizes = [8, 96], strides = [1, 1]} : vector<8x128xf32> to vector<8x96xf32>
    %cst_58 = arith.constant 5.000000e-01 : f32
    %263 = vector.broadcast %cst_58 : f32 to vector<8x96xf32>
    %264 = arith.mulf %263, %262 : vector<8x96xf32>
    %cst_59 = arith.constant 5.000000e-01 : f32
    %265 = vector.broadcast %cst_59 : f32 to vector<8x96xf32>
    %266 = arith.addf %264, %265 : vector<8x96xf32>
    %267 = vector.extract_strided_slice %261 {offsets = [0, 96], sizes = [8, 32], strides = [1, 1]} : vector<8x128xf32> to vector<8x32xf32>
    %268 = vector.extract_strided_slice %266 {offsets = [0, 32], sizes = [8, 32], strides = [1, 1]} : vector<8x96xf32> to vector<8x32xf32>
    %269 = arith.mulf %268, %214 : vector<8x32xf32>
    %270 = vector.extract_strided_slice %266 {offsets = [0, 0], sizes = [8, 32], strides = [1, 1]} : vector<8x96xf32> to vector<8x32xf32>
    %271 = arith.mulf %270, %267 : vector<8x32xf32>
    %272 = arith.addf %269, %271 : vector<8x32xf32>
    %273 = vector.extract_strided_slice %266 {offsets = [0, 64], sizes = [8, 32], strides = [1, 1]} : vector<8x96xf32> to vector<8x32xf32>
    %274 = math.tanh %272 : vector<8x32xf32>
    %275 = arith.mulf %273, %274 : vector<8x32xf32>
    %276 = arith.truncf %275 : vector<8x32xf32> to vector<8x32xbf16>
    %277 = tpu.concatenate %276, %237 in 1 : vector<8x32xbf16>, vector<8x32xbf16> -> vector<8x64xbf16>
    %cst_60 = arith.constant dense<0.000000e+00> : vector<8x128xf32>
    %278 = tpu.matmul %277, %5, %cst_60 {dimension_numbers = #tpu.dot_dimension_numbers<[1], [0], [0], [1], [0, 0, 1, 1], [], []>} : vector<8x64xbf16>, vector<64x128xbf16>, vector<8x128xf32> -> vector<8x128xf32>
    %279 = arith.addf %278, %12 : vector<8x128xf32>
    %280 = math.tanh %279 : vector<8x128xf32>
    %281 = vector.extract_strided_slice %280 {offsets = [0, 0], sizes = [8, 96], strides = [1, 1]} : vector<8x128xf32> to vector<8x96xf32>
    %cst_61 = arith.constant 5.000000e-01 : f32
    %282 = vector.broadcast %cst_61 : f32 to vector<8x96xf32>
    %283 = arith.mulf %282, %281 : vector<8x96xf32>
    %cst_62 = arith.constant 5.000000e-01 : f32
    %284 = vector.broadcast %cst_62 : f32 to vector<8x96xf32>
    %285 = arith.addf %283, %284 : vector<8x96xf32>
    %286 = vector.extract_strided_slice %280 {offsets = [0, 96], sizes = [8, 32], strides = [1, 1]} : vector<8x128xf32> to vector<8x32xf32>
    %287 = vector.extract_strided_slice %285 {offsets = [0, 32], sizes = [8, 32], strides = [1, 1]} : vector<8x96xf32> to vector<8x32xf32>
    %288 = arith.mulf %287, %233 : vector<8x32xf32>
    %289 = vector.extract_strided_slice %285 {offsets = [0, 0], sizes = [8, 32], strides = [1, 1]} : vector<8x96xf32> to vector<8x32xf32>
    %290 = arith.mulf %289, %286 : vector<8x32xf32>
    %291 = arith.addf %288, %290 : vector<8x32xf32>
    %292 = vector.extract_strided_slice %285 {offsets = [0, 64], sizes = [8, 32], strides = [1, 1]} : vector<8x96xf32> to vector<8x32xf32>
    %293 = math.tanh %291 : vector<8x32xf32>
    %294 = arith.mulf %292, %293 : vector<8x32xf32>
    %295 = arith.truncf %294 : vector<8x32xf32> to vector<8x32xbf16>
    %296 = vector.extract_strided_slice %2 {offsets = [40, 0], sizes = [8, 128], strides = [1, 1]} : vector<96x128xf32> to vector<8x128xf32>
    %297 = arith.addf %296, %10 : vector<8x128xf32>
    %cst_63 = arith.constant dense<0.000000e+00> : vector<8x128xf32>
    %298 = tpu.matmul %257, %3, %cst_63 {dimension_numbers = #tpu.dot_dimension_numbers<[1], [0], [0], [1], [0, 0, 1, 1], [], []>} : vector<8x32xbf16>, vector<32x128xbf16>, vector<8x128xf32> -> vector<8x128xf32>
    %299 = arith.addf %297, %298 : vector<8x128xf32>
    %300 = math.tanh %299 : vector<8x128xf32>
    %301 = vector.extract_strided_slice %300 {offsets = [0, 0], sizes = [8, 96], strides = [1, 1]} : vector<8x128xf32> to vector<8x96xf32>
    %cst_64 = arith.constant 5.000000e-01 : f32
    %302 = vector.broadcast %cst_64 : f32 to vector<8x96xf32>
    %303 = arith.mulf %302, %301 : vector<8x96xf32>
    %cst_65 = arith.constant 5.000000e-01 : f32
    %304 = vector.broadcast %cst_65 : f32 to vector<8x96xf32>
    %305 = arith.addf %303, %304 : vector<8x96xf32>
    %306 = vector.extract_strided_slice %300 {offsets = [0, 96], sizes = [8, 32], strides = [1, 1]} : vector<8x128xf32> to vector<8x32xf32>
    %307 = vector.extract_strided_slice %305 {offsets = [0, 32], sizes = [8, 32], strides = [1, 1]} : vector<8x96xf32> to vector<8x32xf32>
    %308 = arith.mulf %307, %253 : vector<8x32xf32>
    %309 = vector.extract_strided_slice %305 {offsets = [0, 0], sizes = [8, 32], strides = [1, 1]} : vector<8x96xf32> to vector<8x32xf32>
    %310 = arith.mulf %309, %306 : vector<8x32xf32>
    %311 = arith.addf %308, %310 : vector<8x32xf32>
    %312 = vector.extract_strided_slice %305 {offsets = [0, 64], sizes = [8, 32], strides = [1, 1]} : vector<8x96xf32> to vector<8x32xf32>
    %313 = math.tanh %311 : vector<8x32xf32>
    %314 = arith.mulf %312, %313 : vector<8x32xf32>
    %315 = arith.truncf %314 : vector<8x32xf32> to vector<8x32xbf16>
    %316 = tpu.concatenate %315, %276 in 1 : vector<8x32xbf16>, vector<8x32xbf16> -> vector<8x64xbf16>
    %cst_66 = arith.constant dense<0.000000e+00> : vector<8x128xf32>
    %317 = tpu.matmul %316, %4, %cst_66 {dimension_numbers = #tpu.dot_dimension_numbers<[1], [0], [0], [1], [0, 0, 1, 1], [], []>} : vector<8x64xbf16>, vector<64x128xbf16>, vector<8x128xf32> -> vector<8x128xf32>
    %318 = arith.addf %317, %11 : vector<8x128xf32>
    %319 = math.tanh %318 : vector<8x128xf32>
    %320 = vector.extract_strided_slice %319 {offsets = [0, 0], sizes = [8, 96], strides = [1, 1]} : vector<8x128xf32> to vector<8x96xf32>
    %cst_67 = arith.constant 5.000000e-01 : f32
    %321 = vector.broadcast %cst_67 : f32 to vector<8x96xf32>
    %322 = arith.mulf %321, %320 : vector<8x96xf32>
    %cst_68 = arith.constant 5.000000e-01 : f32
    %323 = vector.broadcast %cst_68 : f32 to vector<8x96xf32>
    %324 = arith.addf %322, %323 : vector<8x96xf32>
    %325 = vector.extract_strided_slice %319 {offsets = [0, 96], sizes = [8, 32], strides = [1, 1]} : vector<8x128xf32> to vector<8x32xf32>
    %326 = vector.extract_strided_slice %324 {offsets = [0, 32], sizes = [8, 32], strides = [1, 1]} : vector<8x96xf32> to vector<8x32xf32>
    %327 = arith.mulf %326, %272 : vector<8x32xf32>
    %328 = vector.extract_strided_slice %324 {offsets = [0, 0], sizes = [8, 32], strides = [1, 1]} : vector<8x96xf32> to vector<8x32xf32>
    %329 = arith.mulf %328, %325 : vector<8x32xf32>
    %330 = arith.addf %327, %329 : vector<8x32xf32>
    %331 = vector.extract_strided_slice %324 {offsets = [0, 64], sizes = [8, 32], strides = [1, 1]} : vector<8x96xf32> to vector<8x32xf32>
    %332 = math.tanh %330 : vector<8x32xf32>
    %333 = arith.mulf %331, %332 : vector<8x32xf32>
    %334 = arith.truncf %333 : vector<8x32xf32> to vector<8x32xbf16>
    %335 = tpu.concatenate %334, %295 in 1 : vector<8x32xbf16>, vector<8x32xbf16> -> vector<8x64xbf16>
    %cst_69 = arith.constant dense<0.000000e+00> : vector<8x128xf32>
    %336 = tpu.matmul %335, %5, %cst_69 {dimension_numbers = #tpu.dot_dimension_numbers<[1], [0], [0], [1], [0, 0, 1, 1], [], []>} : vector<8x64xbf16>, vector<64x128xbf16>, vector<8x128xf32> -> vector<8x128xf32>
    %337 = arith.addf %336, %12 : vector<8x128xf32>
    %338 = math.tanh %337 : vector<8x128xf32>
    %339 = vector.extract_strided_slice %338 {offsets = [0, 0], sizes = [8, 96], strides = [1, 1]} : vector<8x128xf32> to vector<8x96xf32>
    %cst_70 = arith.constant 5.000000e-01 : f32
    %340 = vector.broadcast %cst_70 : f32 to vector<8x96xf32>
    %341 = arith.mulf %340, %339 : vector<8x96xf32>
    %cst_71 = arith.constant 5.000000e-01 : f32
    %342 = vector.broadcast %cst_71 : f32 to vector<8x96xf32>
    %343 = arith.addf %341, %342 : vector<8x96xf32>
    %344 = vector.extract_strided_slice %338 {offsets = [0, 96], sizes = [8, 32], strides = [1, 1]} : vector<8x128xf32> to vector<8x32xf32>
    %345 = vector.extract_strided_slice %343 {offsets = [0, 32], sizes = [8, 32], strides = [1, 1]} : vector<8x96xf32> to vector<8x32xf32>
    %346 = arith.mulf %345, %291 : vector<8x32xf32>
    %347 = vector.extract_strided_slice %343 {offsets = [0, 0], sizes = [8, 32], strides = [1, 1]} : vector<8x96xf32> to vector<8x32xf32>
    %348 = arith.mulf %347, %344 : vector<8x32xf32>
    %349 = arith.addf %346, %348 : vector<8x32xf32>
    %350 = vector.extract_strided_slice %343 {offsets = [0, 64], sizes = [8, 32], strides = [1, 1]} : vector<8x96xf32> to vector<8x32xf32>
    %351 = math.tanh %349 : vector<8x32xf32>
    %352 = arith.mulf %350, %351 : vector<8x32xf32>
    %353 = arith.truncf %352 : vector<8x32xf32> to vector<8x32xbf16>
    %354 = vector.extract_strided_slice %2 {offsets = [48, 0], sizes = [8, 128], strides = [1, 1]} : vector<96x128xf32> to vector<8x128xf32>
    %355 = arith.addf %354, %10 : vector<8x128xf32>
    %cst_72 = arith.constant dense<0.000000e+00> : vector<8x128xf32>
    %356 = tpu.matmul %315, %3, %cst_72 {dimension_numbers = #tpu.dot_dimension_numbers<[1], [0], [0], [1], [0, 0, 1, 1], [], []>} : vector<8x32xbf16>, vector<32x128xbf16>, vector<8x128xf32> -> vector<8x128xf32>
    %357 = arith.addf %355, %356 : vector<8x128xf32>
    %358 = math.tanh %357 : vector<8x128xf32>
    %359 = vector.extract_strided_slice %358 {offsets = [0, 0], sizes = [8, 96], strides = [1, 1]} : vector<8x128xf32> to vector<8x96xf32>
    %cst_73 = arith.constant 5.000000e-01 : f32
    %360 = vector.broadcast %cst_73 : f32 to vector<8x96xf32>
    %361 = arith.mulf %360, %359 : vector<8x96xf32>
    %cst_74 = arith.constant 5.000000e-01 : f32
    %362 = vector.broadcast %cst_74 : f32 to vector<8x96xf32>
    %363 = arith.addf %361, %362 : vector<8x96xf32>
    %364 = vector.extract_strided_slice %358 {offsets = [0, 96], sizes = [8, 32], strides = [1, 1]} : vector<8x128xf32> to vector<8x32xf32>
    %365 = vector.extract_strided_slice %363 {offsets = [0, 32], sizes = [8, 32], strides = [1, 1]} : vector<8x96xf32> to vector<8x32xf32>
    %366 = arith.mulf %365, %311 : vector<8x32xf32>
    %367 = vector.extract_strided_slice %363 {offsets = [0, 0], sizes = [8, 32], strides = [1, 1]} : vector<8x96xf32> to vector<8x32xf32>
    %368 = arith.mulf %367, %364 : vector<8x32xf32>
    %369 = arith.addf %366, %368 : vector<8x32xf32>
    %370 = vector.extract_strided_slice %363 {offsets = [0, 64], sizes = [8, 32], strides = [1, 1]} : vector<8x96xf32> to vector<8x32xf32>
    %371 = math.tanh %369 : vector<8x32xf32>
    %372 = arith.mulf %370, %371 : vector<8x32xf32>
    %373 = arith.truncf %372 : vector<8x32xf32> to vector<8x32xbf16>
    %374 = tpu.concatenate %373, %334 in 1 : vector<8x32xbf16>, vector<8x32xbf16> -> vector<8x64xbf16>
    %cst_75 = arith.constant dense<0.000000e+00> : vector<8x128xf32>
    %375 = tpu.matmul %374, %4, %cst_75 {dimension_numbers = #tpu.dot_dimension_numbers<[1], [0], [0], [1], [0, 0, 1, 1], [], []>} : vector<8x64xbf16>, vector<64x128xbf16>, vector<8x128xf32> -> vector<8x128xf32>
    %376 = arith.addf %375, %11 : vector<8x128xf32>
    %377 = math.tanh %376 : vector<8x128xf32>
    %378 = vector.extract_strided_slice %377 {offsets = [0, 0], sizes = [8, 96], strides = [1, 1]} : vector<8x128xf32> to vector<8x96xf32>
    %cst_76 = arith.constant 5.000000e-01 : f32
    %379 = vector.broadcast %cst_76 : f32 to vector<8x96xf32>
    %380 = arith.mulf %379, %378 : vector<8x96xf32>
    %cst_77 = arith.constant 5.000000e-01 : f32
    %381 = vector.broadcast %cst_77 : f32 to vector<8x96xf32>
    %382 = arith.addf %380, %381 : vector<8x96xf32>
    %383 = vector.extract_strided_slice %377 {offsets = [0, 96], sizes = [8, 32], strides = [1, 1]} : vector<8x128xf32> to vector<8x32xf32>
    %384 = vector.extract_strided_slice %382 {offsets = [0, 32], sizes = [8, 32], strides = [1, 1]} : vector<8x96xf32> to vector<8x32xf32>
    %385 = arith.mulf %384, %330 : vector<8x32xf32>
    %386 = vector.extract_strided_slice %382 {offsets = [0, 0], sizes = [8, 32], strides = [1, 1]} : vector<8x96xf32> to vector<8x32xf32>
    %387 = arith.mulf %386, %383 : vector<8x32xf32>
    %388 = arith.addf %385, %387 : vector<8x32xf32>
    %389 = vector.extract_strided_slice %382 {offsets = [0, 64], sizes = [8, 32], strides = [1, 1]} : vector<8x96xf32> to vector<8x32xf32>
    %390 = math.tanh %388 : vector<8x32xf32>
    %391 = arith.mulf %389, %390 : vector<8x32xf32>
    %392 = arith.truncf %391 : vector<8x32xf32> to vector<8x32xbf16>
    %393 = tpu.concatenate %392, %353 in 1 : vector<8x32xbf16>, vector<8x32xbf16> -> vector<8x64xbf16>
    %cst_78 = arith.constant dense<0.000000e+00> : vector<8x128xf32>
    %394 = tpu.matmul %393, %5, %cst_78 {dimension_numbers = #tpu.dot_dimension_numbers<[1], [0], [0], [1], [0, 0, 1, 1], [], []>} : vector<8x64xbf16>, vector<64x128xbf16>, vector<8x128xf32> -> vector<8x128xf32>
    %395 = arith.addf %394, %12 : vector<8x128xf32>
    %396 = math.tanh %395 : vector<8x128xf32>
    %397 = vector.extract_strided_slice %396 {offsets = [0, 0], sizes = [8, 96], strides = [1, 1]} : vector<8x128xf32> to vector<8x96xf32>
    %cst_79 = arith.constant 5.000000e-01 : f32
    %398 = vector.broadcast %cst_79 : f32 to vector<8x96xf32>
    %399 = arith.mulf %398, %397 : vector<8x96xf32>
    %cst_80 = arith.constant 5.000000e-01 : f32
    %400 = vector.broadcast %cst_80 : f32 to vector<8x96xf32>
    %401 = arith.addf %399, %400 : vector<8x96xf32>
    %402 = vector.extract_strided_slice %396 {offsets = [0, 96], sizes = [8, 32], strides = [1, 1]} : vector<8x128xf32> to vector<8x32xf32>
    %403 = vector.extract_strided_slice %401 {offsets = [0, 32], sizes = [8, 32], strides = [1, 1]} : vector<8x96xf32> to vector<8x32xf32>
    %404 = arith.mulf %403, %349 : vector<8x32xf32>
    %405 = vector.extract_strided_slice %401 {offsets = [0, 0], sizes = [8, 32], strides = [1, 1]} : vector<8x96xf32> to vector<8x32xf32>
    %406 = arith.mulf %405, %402 : vector<8x32xf32>
    %407 = arith.addf %404, %406 : vector<8x32xf32>
    %408 = vector.extract_strided_slice %401 {offsets = [0, 64], sizes = [8, 32], strides = [1, 1]} : vector<8x96xf32> to vector<8x32xf32>
    %409 = math.tanh %407 : vector<8x32xf32>
    %410 = arith.mulf %408, %409 : vector<8x32xf32>
    %411 = arith.truncf %410 : vector<8x32xf32> to vector<8x32xbf16>
    %412 = vector.extract_strided_slice %2 {offsets = [56, 0], sizes = [8, 128], strides = [1, 1]} : vector<96x128xf32> to vector<8x128xf32>
    %413 = arith.addf %412, %10 : vector<8x128xf32>
    %cst_81 = arith.constant dense<0.000000e+00> : vector<8x128xf32>
    %414 = tpu.matmul %373, %3, %cst_81 {dimension_numbers = #tpu.dot_dimension_numbers<[1], [0], [0], [1], [0, 0, 1, 1], [], []>} : vector<8x32xbf16>, vector<32x128xbf16>, vector<8x128xf32> -> vector<8x128xf32>
    %415 = arith.addf %413, %414 : vector<8x128xf32>
    %416 = math.tanh %415 : vector<8x128xf32>
    %417 = vector.extract_strided_slice %416 {offsets = [0, 0], sizes = [8, 96], strides = [1, 1]} : vector<8x128xf32> to vector<8x96xf32>
    %cst_82 = arith.constant 5.000000e-01 : f32
    %418 = vector.broadcast %cst_82 : f32 to vector<8x96xf32>
    %419 = arith.mulf %418, %417 : vector<8x96xf32>
    %cst_83 = arith.constant 5.000000e-01 : f32
    %420 = vector.broadcast %cst_83 : f32 to vector<8x96xf32>
    %421 = arith.addf %419, %420 : vector<8x96xf32>
    %422 = vector.extract_strided_slice %416 {offsets = [0, 96], sizes = [8, 32], strides = [1, 1]} : vector<8x128xf32> to vector<8x32xf32>
    %423 = vector.extract_strided_slice %421 {offsets = [0, 32], sizes = [8, 32], strides = [1, 1]} : vector<8x96xf32> to vector<8x32xf32>
    %424 = arith.mulf %423, %369 : vector<8x32xf32>
    %425 = vector.extract_strided_slice %421 {offsets = [0, 0], sizes = [8, 32], strides = [1, 1]} : vector<8x96xf32> to vector<8x32xf32>
    %426 = arith.mulf %425, %422 : vector<8x32xf32>
    %427 = arith.addf %424, %426 : vector<8x32xf32>
    %428 = vector.extract_strided_slice %421 {offsets = [0, 64], sizes = [8, 32], strides = [1, 1]} : vector<8x96xf32> to vector<8x32xf32>
    %429 = math.tanh %427 : vector<8x32xf32>
    %430 = arith.mulf %428, %429 : vector<8x32xf32>
    %431 = arith.truncf %430 : vector<8x32xf32> to vector<8x32xbf16>
    %432 = tpu.concatenate %431, %392 in 1 : vector<8x32xbf16>, vector<8x32xbf16> -> vector<8x64xbf16>
    %cst_84 = arith.constant dense<0.000000e+00> : vector<8x128xf32>
    %433 = tpu.matmul %432, %4, %cst_84 {dimension_numbers = #tpu.dot_dimension_numbers<[1], [0], [0], [1], [0, 0, 1, 1], [], []>} : vector<8x64xbf16>, vector<64x128xbf16>, vector<8x128xf32> -> vector<8x128xf32>
    %434 = arith.addf %433, %11 : vector<8x128xf32>
    %435 = math.tanh %434 : vector<8x128xf32>
    %436 = vector.extract_strided_slice %435 {offsets = [0, 0], sizes = [8, 96], strides = [1, 1]} : vector<8x128xf32> to vector<8x96xf32>
    %cst_85 = arith.constant 5.000000e-01 : f32
    %437 = vector.broadcast %cst_85 : f32 to vector<8x96xf32>
    %438 = arith.mulf %437, %436 : vector<8x96xf32>
    %cst_86 = arith.constant 5.000000e-01 : f32
    %439 = vector.broadcast %cst_86 : f32 to vector<8x96xf32>
    %440 = arith.addf %438, %439 : vector<8x96xf32>
    %441 = vector.extract_strided_slice %435 {offsets = [0, 96], sizes = [8, 32], strides = [1, 1]} : vector<8x128xf32> to vector<8x32xf32>
    %442 = vector.extract_strided_slice %440 {offsets = [0, 32], sizes = [8, 32], strides = [1, 1]} : vector<8x96xf32> to vector<8x32xf32>
    %443 = arith.mulf %442, %388 : vector<8x32xf32>
    %444 = vector.extract_strided_slice %440 {offsets = [0, 0], sizes = [8, 32], strides = [1, 1]} : vector<8x96xf32> to vector<8x32xf32>
    %445 = arith.mulf %444, %441 : vector<8x32xf32>
    %446 = arith.addf %443, %445 : vector<8x32xf32>
    %447 = vector.extract_strided_slice %440 {offsets = [0, 64], sizes = [8, 32], strides = [1, 1]} : vector<8x96xf32> to vector<8x32xf32>
    %448 = math.tanh %446 : vector<8x32xf32>
    %449 = arith.mulf %447, %448 : vector<8x32xf32>
    %450 = arith.truncf %449 : vector<8x32xf32> to vector<8x32xbf16>
    %451 = tpu.concatenate %450, %411 in 1 : vector<8x32xbf16>, vector<8x32xbf16> -> vector<8x64xbf16>
    %cst_87 = arith.constant dense<0.000000e+00> : vector<8x128xf32>
    %452 = tpu.matmul %451, %5, %cst_87 {dimension_numbers = #tpu.dot_dimension_numbers<[1], [0], [0], [1], [0, 0, 1, 1], [], []>} : vector<8x64xbf16>, vector<64x128xbf16>, vector<8x128xf32> -> vector<8x128xf32>
    %453 = arith.addf %452, %12 : vector<8x128xf32>
    %454 = math.tanh %453 : vector<8x128xf32>
    %455 = vector.extract_strided_slice %454 {offsets = [0, 0], sizes = [8, 96], strides = [1, 1]} : vector<8x128xf32> to vector<8x96xf32>
    %cst_88 = arith.constant 5.000000e-01 : f32
    %456 = vector.broadcast %cst_88 : f32 to vector<8x96xf32>
    %457 = arith.mulf %456, %455 : vector<8x96xf32>
    %cst_89 = arith.constant 5.000000e-01 : f32
    %458 = vector.broadcast %cst_89 : f32 to vector<8x96xf32>
    %459 = arith.addf %457, %458 : vector<8x96xf32>
    %460 = vector.extract_strided_slice %454 {offsets = [0, 96], sizes = [8, 32], strides = [1, 1]} : vector<8x128xf32> to vector<8x32xf32>
    %461 = vector.extract_strided_slice %459 {offsets = [0, 32], sizes = [8, 32], strides = [1, 1]} : vector<8x96xf32> to vector<8x32xf32>
    %462 = arith.mulf %461, %407 : vector<8x32xf32>
    %463 = vector.extract_strided_slice %459 {offsets = [0, 0], sizes = [8, 32], strides = [1, 1]} : vector<8x96xf32> to vector<8x32xf32>
    %464 = arith.mulf %463, %460 : vector<8x32xf32>
    %465 = arith.addf %462, %464 : vector<8x32xf32>
    %466 = vector.extract_strided_slice %459 {offsets = [0, 64], sizes = [8, 32], strides = [1, 1]} : vector<8x96xf32> to vector<8x32xf32>
    %467 = math.tanh %465 : vector<8x32xf32>
    %468 = arith.mulf %466, %467 : vector<8x32xf32>
    %469 = arith.truncf %468 : vector<8x32xf32> to vector<8x32xbf16>
    %470 = vector.extract_strided_slice %2 {offsets = [64, 0], sizes = [8, 128], strides = [1, 1]} : vector<96x128xf32> to vector<8x128xf32>
    %471 = arith.addf %470, %13 : vector<8x128xf32>
    %472 = tpu.concatenate %469, %431 in 1 : vector<8x32xbf16>, vector<8x32xbf16> -> vector<8x64xbf16>
    %cst_90 = arith.constant dense<0.000000e+00> : vector<8x128xf32>
    %473 = tpu.matmul %472, %6, %cst_90 {dimension_numbers = #tpu.dot_dimension_numbers<[1], [0], [0], [1], [0, 0, 1, 1], [], []>} : vector<8x64xbf16>, vector<64x128xbf16>, vector<8x128xf32> -> vector<8x128xf32>
    %474 = arith.addf %471, %473 : vector<8x128xf32>
    %475 = math.tanh %474 : vector<8x128xf32>
    %476 = vector.extract_strided_slice %475 {offsets = [0, 0], sizes = [8, 96], strides = [1, 1]} : vector<8x128xf32> to vector<8x96xf32>
    %cst_91 = arith.constant 5.000000e-01 : f32
    %477 = vector.broadcast %cst_91 : f32 to vector<8x96xf32>
    %478 = arith.mulf %477, %476 : vector<8x96xf32>
    %cst_92 = arith.constant 5.000000e-01 : f32
    %479 = vector.broadcast %cst_92 : f32 to vector<8x96xf32>
    %480 = arith.addf %478, %479 : vector<8x96xf32>
    %481 = vector.extract_strided_slice %475 {offsets = [0, 96], sizes = [8, 32], strides = [1, 1]} : vector<8x128xf32> to vector<8x32xf32>
    %482 = vector.extract_strided_slice %480 {offsets = [0, 32], sizes = [8, 32], strides = [1, 1]} : vector<8x96xf32> to vector<8x32xf32>
    %483 = arith.mulf %482, %427 : vector<8x32xf32>
    %484 = vector.extract_strided_slice %480 {offsets = [0, 0], sizes = [8, 32], strides = [1, 1]} : vector<8x96xf32> to vector<8x32xf32>
    %485 = arith.mulf %484, %481 : vector<8x32xf32>
    %486 = arith.addf %483, %485 : vector<8x32xf32>
    %487 = vector.extract_strided_slice %480 {offsets = [0, 64], sizes = [8, 32], strides = [1, 1]} : vector<8x96xf32> to vector<8x32xf32>
    %488 = math.tanh %486 : vector<8x32xf32>
    %489 = arith.mulf %487, %488 : vector<8x32xf32>
    %490 = arith.truncf %489 : vector<8x32xf32> to vector<8x32xbf16>
    %491 = tpu.concatenate %490, %450 in 1 : vector<8x32xbf16>, vector<8x32xbf16> -> vector<8x64xbf16>
    %cst_93 = arith.constant dense<0.000000e+00> : vector<8x128xf32>
    %492 = tpu.matmul %491, %7, %cst_93 {dimension_numbers = #tpu.dot_dimension_numbers<[1], [0], [0], [1], [0, 0, 1, 1], [], []>} : vector<8x64xbf16>, vector<64x128xbf16>, vector<8x128xf32> -> vector<8x128xf32>
    %493 = arith.addf %492, %14 : vector<8x128xf32>
    %494 = math.tanh %493 : vector<8x128xf32>
    %495 = vector.extract_strided_slice %494 {offsets = [0, 0], sizes = [8, 96], strides = [1, 1]} : vector<8x128xf32> to vector<8x96xf32>
    %cst_94 = arith.constant 5.000000e-01 : f32
    %496 = vector.broadcast %cst_94 : f32 to vector<8x96xf32>
    %497 = arith.mulf %496, %495 : vector<8x96xf32>
    %cst_95 = arith.constant 5.000000e-01 : f32
    %498 = vector.broadcast %cst_95 : f32 to vector<8x96xf32>
    %499 = arith.addf %497, %498 : vector<8x96xf32>
    %500 = vector.extract_strided_slice %494 {offsets = [0, 96], sizes = [8, 32], strides = [1, 1]} : vector<8x128xf32> to vector<8x32xf32>
    %501 = vector.extract_strided_slice %499 {offsets = [0, 32], sizes = [8, 32], strides = [1, 1]} : vector<8x96xf32> to vector<8x32xf32>
    %502 = arith.mulf %501, %446 : vector<8x32xf32>
    %503 = vector.extract_strided_slice %499 {offsets = [0, 0], sizes = [8, 32], strides = [1, 1]} : vector<8x96xf32> to vector<8x32xf32>
    %504 = arith.mulf %503, %500 : vector<8x32xf32>
    %505 = arith.addf %502, %504 : vector<8x32xf32>
    %506 = vector.extract_strided_slice %499 {offsets = [0, 64], sizes = [8, 32], strides = [1, 1]} : vector<8x96xf32> to vector<8x32xf32>
    %507 = math.tanh %505 : vector<8x32xf32>
    %508 = arith.mulf %506, %507 : vector<8x32xf32>
    %509 = arith.truncf %508 : vector<8x32xf32> to vector<8x32xbf16>
    %510 = tpu.concatenate %509, %469 in 1 : vector<8x32xbf16>, vector<8x32xbf16> -> vector<8x64xbf16>
    %cst_96 = arith.constant dense<0.000000e+00> : vector<8x128xf32>
    %511 = tpu.matmul %510, %8, %cst_96 {dimension_numbers = #tpu.dot_dimension_numbers<[1], [0], [0], [1], [0, 0, 1, 1], [], []>} : vector<8x64xbf16>, vector<64x128xbf16>, vector<8x128xf32> -> vector<8x128xf32>
    %512 = arith.addf %511, %15 : vector<8x128xf32>
    %513 = math.tanh %512 : vector<8x128xf32>
    %514 = vector.extract_strided_slice %513 {offsets = [0, 0], sizes = [8, 96], strides = [1, 1]} : vector<8x128xf32> to vector<8x96xf32>
    %cst_97 = arith.constant 5.000000e-01 : f32
    %515 = vector.broadcast %cst_97 : f32 to vector<8x96xf32>
    %516 = arith.mulf %515, %514 : vector<8x96xf32>
    %cst_98 = arith.constant 5.000000e-01 : f32
    %517 = vector.broadcast %cst_98 : f32 to vector<8x96xf32>
    %518 = arith.addf %516, %517 : vector<8x96xf32>
    %519 = vector.extract_strided_slice %513 {offsets = [0, 96], sizes = [8, 32], strides = [1, 1]} : vector<8x128xf32> to vector<8x32xf32>
    %520 = vector.extract_strided_slice %518 {offsets = [0, 32], sizes = [8, 32], strides = [1, 1]} : vector<8x96xf32> to vector<8x32xf32>
    %521 = arith.mulf %520, %465 : vector<8x32xf32>
    %522 = vector.extract_strided_slice %518 {offsets = [0, 0], sizes = [8, 32], strides = [1, 1]} : vector<8x96xf32> to vector<8x32xf32>
    %523 = arith.mulf %522, %519 : vector<8x32xf32>
    %524 = arith.addf %521, %523 : vector<8x32xf32>
    %525 = vector.extract_strided_slice %518 {offsets = [0, 64], sizes = [8, 32], strides = [1, 1]} : vector<8x96xf32> to vector<8x32xf32>
    %526 = math.tanh %524 : vector<8x32xf32>
    %527 = arith.mulf %525, %526 : vector<8x32xf32>
    %528 = arith.truncf %527 : vector<8x32xf32> to vector<8x32xbf16>
    %529 = vector.extract_strided_slice %2 {offsets = [72, 0], sizes = [8, 128], strides = [1, 1]} : vector<96x128xf32> to vector<8x128xf32>
    %530 = arith.addf %529, %13 : vector<8x128xf32>
    %531 = tpu.concatenate %528, %490 in 1 : vector<8x32xbf16>, vector<8x32xbf16> -> vector<8x64xbf16>
    %cst_99 = arith.constant dense<0.000000e+00> : vector<8x128xf32>
    %532 = tpu.matmul %531, %6, %cst_99 {dimension_numbers = #tpu.dot_dimension_numbers<[1], [0], [0], [1], [0, 0, 1, 1], [], []>} : vector<8x64xbf16>, vector<64x128xbf16>, vector<8x128xf32> -> vector<8x128xf32>
    %533 = arith.addf %530, %532 : vector<8x128xf32>
    %534 = math.tanh %533 : vector<8x128xf32>
    %535 = vector.extract_strided_slice %534 {offsets = [0, 0], sizes = [8, 96], strides = [1, 1]} : vector<8x128xf32> to vector<8x96xf32>
    %cst_100 = arith.constant 5.000000e-01 : f32
    %536 = vector.broadcast %cst_100 : f32 to vector<8x96xf32>
    %537 = arith.mulf %536, %535 : vector<8x96xf32>
    %cst_101 = arith.constant 5.000000e-01 : f32
    %538 = vector.broadcast %cst_101 : f32 to vector<8x96xf32>
    %539 = arith.addf %537, %538 : vector<8x96xf32>
    %540 = vector.extract_strided_slice %534 {offsets = [0, 96], sizes = [8, 32], strides = [1, 1]} : vector<8x128xf32> to vector<8x32xf32>
    %541 = vector.extract_strided_slice %539 {offsets = [0, 32], sizes = [8, 32], strides = [1, 1]} : vector<8x96xf32> to vector<8x32xf32>
    %542 = arith.mulf %541, %486 : vector<8x32xf32>
    %543 = vector.extract_strided_slice %539 {offsets = [0, 0], sizes = [8, 32], strides = [1, 1]} : vector<8x96xf32> to vector<8x32xf32>
    %544 = arith.mulf %543, %540 : vector<8x32xf32>
    %545 = arith.addf %542, %544 : vector<8x32xf32>
    %546 = vector.extract_strided_slice %539 {offsets = [0, 64], sizes = [8, 32], strides = [1, 1]} : vector<8x96xf32> to vector<8x32xf32>
    %547 = math.tanh %545 : vector<8x32xf32>
    %548 = arith.mulf %546, %547 : vector<8x32xf32>
    %549 = arith.truncf %548 : vector<8x32xf32> to vector<8x32xbf16>
    %550 = tpu.concatenate %549, %509 in 1 : vector<8x32xbf16>, vector<8x32xbf16> -> vector<8x64xbf16>
    %cst_102 = arith.constant dense<0.000000e+00> : vector<8x128xf32>
    %551 = tpu.matmul %550, %7, %cst_102 {dimension_numbers = #tpu.dot_dimension_numbers<[1], [0], [0], [1], [0, 0, 1, 1], [], []>} : vector<8x64xbf16>, vector<64x128xbf16>, vector<8x128xf32> -> vector<8x128xf32>
    %552 = arith.addf %551, %14 : vector<8x128xf32>
    %553 = math.tanh %552 : vector<8x128xf32>
    %554 = vector.extract_strided_slice %553 {offsets = [0, 0], sizes = [8, 96], strides = [1, 1]} : vector<8x128xf32> to vector<8x96xf32>
    %cst_103 = arith.constant 5.000000e-01 : f32
    %555 = vector.broadcast %cst_103 : f32 to vector<8x96xf32>
    %556 = arith.mulf %555, %554 : vector<8x96xf32>
    %cst_104 = arith.constant 5.000000e-01 : f32
    %557 = vector.broadcast %cst_104 : f32 to vector<8x96xf32>
    %558 = arith.addf %556, %557 : vector<8x96xf32>
    %559 = vector.extract_strided_slice %553 {offsets = [0, 96], sizes = [8, 32], strides = [1, 1]} : vector<8x128xf32> to vector<8x32xf32>
    %560 = vector.extract_strided_slice %558 {offsets = [0, 32], sizes = [8, 32], strides = [1, 1]} : vector<8x96xf32> to vector<8x32xf32>
    %561 = arith.mulf %560, %505 : vector<8x32xf32>
    %562 = vector.extract_strided_slice %558 {offsets = [0, 0], sizes = [8, 32], strides = [1, 1]} : vector<8x96xf32> to vector<8x32xf32>
    %563 = arith.mulf %562, %559 : vector<8x32xf32>
    %564 = arith.addf %561, %563 : vector<8x32xf32>
    %565 = vector.extract_strided_slice %558 {offsets = [0, 64], sizes = [8, 32], strides = [1, 1]} : vector<8x96xf32> to vector<8x32xf32>
    %566 = math.tanh %564 : vector<8x32xf32>
    %567 = arith.mulf %565, %566 : vector<8x32xf32>
    %568 = arith.truncf %567 : vector<8x32xf32> to vector<8x32xbf16>
    %569 = tpu.concatenate %568, %528 in 1 : vector<8x32xbf16>, vector<8x32xbf16> -> vector<8x64xbf16>
    %cst_105 = arith.constant dense<0.000000e+00> : vector<8x128xf32>
    %570 = tpu.matmul %569, %8, %cst_105 {dimension_numbers = #tpu.dot_dimension_numbers<[1], [0], [0], [1], [0, 0, 1, 1], [], []>} : vector<8x64xbf16>, vector<64x128xbf16>, vector<8x128xf32> -> vector<8x128xf32>
    %571 = arith.addf %570, %15 : vector<8x128xf32>
    %572 = math.tanh %571 : vector<8x128xf32>
    %573 = vector.extract_strided_slice %572 {offsets = [0, 0], sizes = [8, 96], strides = [1, 1]} : vector<8x128xf32> to vector<8x96xf32>
    %cst_106 = arith.constant 5.000000e-01 : f32
    %574 = vector.broadcast %cst_106 : f32 to vector<8x96xf32>
    %575 = arith.mulf %574, %573 : vector<8x96xf32>
    %cst_107 = arith.constant 5.000000e-01 : f32
    %576 = vector.broadcast %cst_107 : f32 to vector<8x96xf32>
    %577 = arith.addf %575, %576 : vector<8x96xf32>
    %578 = vector.extract_strided_slice %572 {offsets = [0, 96], sizes = [8, 32], strides = [1, 1]} : vector<8x128xf32> to vector<8x32xf32>
    %579 = vector.extract_strided_slice %577 {offsets = [0, 32], sizes = [8, 32], strides = [1, 1]} : vector<8x96xf32> to vector<8x32xf32>
    %580 = arith.mulf %579, %524 : vector<8x32xf32>
    %581 = vector.extract_strided_slice %577 {offsets = [0, 0], sizes = [8, 32], strides = [1, 1]} : vector<8x96xf32> to vector<8x32xf32>
    %582 = arith.mulf %581, %578 : vector<8x32xf32>
    %583 = arith.addf %580, %582 : vector<8x32xf32>
    %584 = vector.extract_strided_slice %577 {offsets = [0, 64], sizes = [8, 32], strides = [1, 1]} : vector<8x96xf32> to vector<8x32xf32>
    %585 = math.tanh %583 : vector<8x32xf32>
    %586 = arith.mulf %584, %585 : vector<8x32xf32>
    %587 = arith.truncf %586 : vector<8x32xf32> to vector<8x32xbf16>
    %588 = vector.extract_strided_slice %2 {offsets = [80, 0], sizes = [8, 128], strides = [1, 1]} : vector<96x128xf32> to vector<8x128xf32>
    %589 = arith.addf %588, %13 : vector<8x128xf32>
    %590 = tpu.concatenate %587, %549 in 1 : vector<8x32xbf16>, vector<8x32xbf16> -> vector<8x64xbf16>
    %cst_108 = arith.constant dense<0.000000e+00> : vector<8x128xf32>
    %591 = tpu.matmul %590, %6, %cst_108 {dimension_numbers = #tpu.dot_dimension_numbers<[1], [0], [0], [1], [0, 0, 1, 1], [], []>} : vector<8x64xbf16>, vector<64x128xbf16>, vector<8x128xf32> -> vector<8x128xf32>
    %592 = arith.addf %589, %591 : vector<8x128xf32>
    %593 = math.tanh %592 : vector<8x128xf32>
    %594 = vector.extract_strided_slice %593 {offsets = [0, 0], sizes = [8, 96], strides = [1, 1]} : vector<8x128xf32> to vector<8x96xf32>
    %cst_109 = arith.constant 5.000000e-01 : f32
    %595 = vector.broadcast %cst_109 : f32 to vector<8x96xf32>
    %596 = arith.mulf %595, %594 : vector<8x96xf32>
    %cst_110 = arith.constant 5.000000e-01 : f32
    %597 = vector.broadcast %cst_110 : f32 to vector<8x96xf32>
    %598 = arith.addf %596, %597 : vector<8x96xf32>
    %599 = vector.extract_strided_slice %593 {offsets = [0, 96], sizes = [8, 32], strides = [1, 1]} : vector<8x128xf32> to vector<8x32xf32>
    %600 = vector.extract_strided_slice %598 {offsets = [0, 32], sizes = [8, 32], strides = [1, 1]} : vector<8x96xf32> to vector<8x32xf32>
    %601 = arith.mulf %600, %545 : vector<8x32xf32>
    %602 = vector.extract_strided_slice %598 {offsets = [0, 0], sizes = [8, 32], strides = [1, 1]} : vector<8x96xf32> to vector<8x32xf32>
    %603 = arith.mulf %602, %599 : vector<8x32xf32>
    %604 = arith.addf %601, %603 : vector<8x32xf32>
    %605 = vector.extract_strided_slice %598 {offsets = [0, 64], sizes = [8, 32], strides = [1, 1]} : vector<8x96xf32> to vector<8x32xf32>
    %606 = math.tanh %604 : vector<8x32xf32>
    %607 = arith.mulf %605, %606 : vector<8x32xf32>
    %608 = arith.truncf %607 : vector<8x32xf32> to vector<8x32xbf16>
    %609 = tpu.concatenate %608, %568 in 1 : vector<8x32xbf16>, vector<8x32xbf16> -> vector<8x64xbf16>
    %cst_111 = arith.constant dense<0.000000e+00> : vector<8x128xf32>
    %610 = tpu.matmul %609, %7, %cst_111 {dimension_numbers = #tpu.dot_dimension_numbers<[1], [0], [0], [1], [0, 0, 1, 1], [], []>} : vector<8x64xbf16>, vector<64x128xbf16>, vector<8x128xf32> -> vector<8x128xf32>
    %611 = arith.addf %610, %14 : vector<8x128xf32>
    %612 = math.tanh %611 : vector<8x128xf32>
    %613 = vector.extract_strided_slice %612 {offsets = [0, 0], sizes = [8, 96], strides = [1, 1]} : vector<8x128xf32> to vector<8x96xf32>
    %cst_112 = arith.constant 5.000000e-01 : f32
    %614 = vector.broadcast %cst_112 : f32 to vector<8x96xf32>
    %615 = arith.mulf %614, %613 : vector<8x96xf32>
    %cst_113 = arith.constant 5.000000e-01 : f32
    %616 = vector.broadcast %cst_113 : f32 to vector<8x96xf32>
    %617 = arith.addf %615, %616 : vector<8x96xf32>
    %618 = vector.extract_strided_slice %612 {offsets = [0, 96], sizes = [8, 32], strides = [1, 1]} : vector<8x128xf32> to vector<8x32xf32>
    %619 = vector.extract_strided_slice %617 {offsets = [0, 32], sizes = [8, 32], strides = [1, 1]} : vector<8x96xf32> to vector<8x32xf32>
    %620 = arith.mulf %619, %564 : vector<8x32xf32>
    %621 = vector.extract_strided_slice %617 {offsets = [0, 0], sizes = [8, 32], strides = [1, 1]} : vector<8x96xf32> to vector<8x32xf32>
    %622 = arith.mulf %621, %618 : vector<8x32xf32>
    %623 = arith.addf %620, %622 : vector<8x32xf32>
    %624 = vector.extract_strided_slice %617 {offsets = [0, 64], sizes = [8, 32], strides = [1, 1]} : vector<8x96xf32> to vector<8x32xf32>
    %625 = math.tanh %623 : vector<8x32xf32>
    %626 = arith.mulf %624, %625 : vector<8x32xf32>
    %627 = arith.truncf %626 : vector<8x32xf32> to vector<8x32xbf16>
    %628 = tpu.concatenate %627, %587 in 1 : vector<8x32xbf16>, vector<8x32xbf16> -> vector<8x64xbf16>
    %cst_114 = arith.constant dense<0.000000e+00> : vector<8x128xf32>
    %629 = tpu.matmul %628, %8, %cst_114 {dimension_numbers = #tpu.dot_dimension_numbers<[1], [0], [0], [1], [0, 0, 1, 1], [], []>} : vector<8x64xbf16>, vector<64x128xbf16>, vector<8x128xf32> -> vector<8x128xf32>
    %630 = arith.addf %629, %15 : vector<8x128xf32>
    %631 = math.tanh %630 : vector<8x128xf32>
    %632 = vector.extract_strided_slice %631 {offsets = [0, 0], sizes = [8, 96], strides = [1, 1]} : vector<8x128xf32> to vector<8x96xf32>
    %cst_115 = arith.constant 5.000000e-01 : f32
    %633 = vector.broadcast %cst_115 : f32 to vector<8x96xf32>
    %634 = arith.mulf %633, %632 : vector<8x96xf32>
    %cst_116 = arith.constant 5.000000e-01 : f32
    %635 = vector.broadcast %cst_116 : f32 to vector<8x96xf32>
    %636 = arith.addf %634, %635 : vector<8x96xf32>
    %637 = vector.extract_strided_slice %631 {offsets = [0, 96], sizes = [8, 32], strides = [1, 1]} : vector<8x128xf32> to vector<8x32xf32>
    %638 = vector.extract_strided_slice %636 {offsets = [0, 32], sizes = [8, 32], strides = [1, 1]} : vector<8x96xf32> to vector<8x32xf32>
    %639 = arith.mulf %638, %583 : vector<8x32xf32>
    %640 = vector.extract_strided_slice %636 {offsets = [0, 0], sizes = [8, 32], strides = [1, 1]} : vector<8x96xf32> to vector<8x32xf32>
    %641 = arith.mulf %640, %637 : vector<8x32xf32>
    %642 = arith.addf %639, %641 : vector<8x32xf32>
    %643 = vector.extract_strided_slice %636 {offsets = [0, 64], sizes = [8, 32], strides = [1, 1]} : vector<8x96xf32> to vector<8x32xf32>
    %644 = math.tanh %642 : vector<8x32xf32>
    %645 = arith.mulf %643, %644 : vector<8x32xf32>
    %646 = arith.truncf %645 : vector<8x32xf32> to vector<8x32xbf16>
    %647 = vector.extract_strided_slice %2 {offsets = [88, 0], sizes = [8, 128], strides = [1, 1]} : vector<96x128xf32> to vector<8x128xf32>
    %648 = arith.addf %647, %13 : vector<8x128xf32>
    %649 = tpu.concatenate %646, %608 in 1 : vector<8x32xbf16>, vector<8x32xbf16> -> vector<8x64xbf16>
    %cst_117 = arith.constant dense<0.000000e+00> : vector<8x128xf32>
    %650 = tpu.matmul %649, %6, %cst_117 {dimension_numbers = #tpu.dot_dimension_numbers<[1], [0], [0], [1], [0, 0, 1, 1], [], []>} : vector<8x64xbf16>, vector<64x128xbf16>, vector<8x128xf32> -> vector<8x128xf32>
    %651 = arith.addf %648, %650 : vector<8x128xf32>
    %652 = math.tanh %651 : vector<8x128xf32>
    %653 = vector.extract_strided_slice %652 {offsets = [0, 0], sizes = [8, 96], strides = [1, 1]} : vector<8x128xf32> to vector<8x96xf32>
    %cst_118 = arith.constant 5.000000e-01 : f32
    %654 = vector.broadcast %cst_118 : f32 to vector<8x96xf32>
    %655 = arith.mulf %654, %653 : vector<8x96xf32>
    %cst_119 = arith.constant 5.000000e-01 : f32
    %656 = vector.broadcast %cst_119 : f32 to vector<8x96xf32>
    %657 = arith.addf %655, %656 : vector<8x96xf32>
    %658 = vector.extract_strided_slice %652 {offsets = [0, 96], sizes = [8, 32], strides = [1, 1]} : vector<8x128xf32> to vector<8x32xf32>
    %659 = vector.extract_strided_slice %657 {offsets = [0, 32], sizes = [8, 32], strides = [1, 1]} : vector<8x96xf32> to vector<8x32xf32>
    %660 = arith.mulf %659, %604 : vector<8x32xf32>
    %661 = vector.extract_strided_slice %657 {offsets = [0, 0], sizes = [8, 32], strides = [1, 1]} : vector<8x96xf32> to vector<8x32xf32>
    %662 = arith.mulf %661, %658 : vector<8x32xf32>
    %663 = arith.addf %660, %662 : vector<8x32xf32>
    %664 = vector.extract_strided_slice %657 {offsets = [0, 64], sizes = [8, 32], strides = [1, 1]} : vector<8x96xf32> to vector<8x32xf32>
    %665 = math.tanh %663 : vector<8x32xf32>
    %666 = arith.mulf %664, %665 : vector<8x32xf32>
    %667 = arith.truncf %666 : vector<8x32xf32> to vector<8x32xbf16>
    %668 = tpu.concatenate %667, %627 in 1 : vector<8x32xbf16>, vector<8x32xbf16> -> vector<8x64xbf16>
    %cst_120 = arith.constant dense<0.000000e+00> : vector<8x128xf32>
    %669 = tpu.matmul %668, %7, %cst_120 {dimension_numbers = #tpu.dot_dimension_numbers<[1], [0], [0], [1], [0, 0, 1, 1], [], []>} : vector<8x64xbf16>, vector<64x128xbf16>, vector<8x128xf32> -> vector<8x128xf32>
    %670 = arith.addf %669, %14 : vector<8x128xf32>
    %671 = math.tanh %670 : vector<8x128xf32>
    %672 = vector.extract_strided_slice %671 {offsets = [0, 0], sizes = [8, 96], strides = [1, 1]} : vector<8x128xf32> to vector<8x96xf32>
    %cst_121 = arith.constant 5.000000e-01 : f32
    %673 = vector.broadcast %cst_121 : f32 to vector<8x96xf32>
    %674 = arith.mulf %673, %672 : vector<8x96xf32>
    %cst_122 = arith.constant 5.000000e-01 : f32
    %675 = vector.broadcast %cst_122 : f32 to vector<8x96xf32>
    %676 = arith.addf %674, %675 : vector<8x96xf32>
    %677 = vector.extract_strided_slice %671 {offsets = [0, 96], sizes = [8, 32], strides = [1, 1]} : vector<8x128xf32> to vector<8x32xf32>
    %678 = vector.extract_strided_slice %676 {offsets = [0, 32], sizes = [8, 32], strides = [1, 1]} : vector<8x96xf32> to vector<8x32xf32>
    %679 = arith.mulf %678, %623 : vector<8x32xf32>
    %680 = vector.extract_strided_slice %676 {offsets = [0, 0], sizes = [8, 32], strides = [1, 1]} : vector<8x96xf32> to vector<8x32xf32>
    %681 = arith.mulf %680, %677 : vector<8x32xf32>
    %682 = arith.addf %679, %681 : vector<8x32xf32>
    %683 = vector.extract_strided_slice %676 {offsets = [0, 64], sizes = [8, 32], strides = [1, 1]} : vector<8x96xf32> to vector<8x32xf32>
    %684 = math.tanh %682 : vector<8x32xf32>
    %685 = arith.mulf %683, %684 : vector<8x32xf32>
    %686 = arith.truncf %685 : vector<8x32xf32> to vector<8x32xbf16>
    %687 = tpu.concatenate %686, %646 in 1 : vector<8x32xbf16>, vector<8x32xbf16> -> vector<8x64xbf16>
    %cst_123 = arith.constant dense<0.000000e+00> : vector<8x128xf32>
    %688 = tpu.matmul %687, %8, %cst_123 {dimension_numbers = #tpu.dot_dimension_numbers<[1], [0], [0], [1], [0, 0, 1, 1], [], []>} : vector<8x64xbf16>, vector<64x128xbf16>, vector<8x128xf32> -> vector<8x128xf32>
    %689 = arith.addf %688, %15 : vector<8x128xf32>
    %690 = math.tanh %689 : vector<8x128xf32>
    %691 = vector.extract_strided_slice %690 {offsets = [0, 0], sizes = [8, 96], strides = [1, 1]} : vector<8x128xf32> to vector<8x96xf32>
    %cst_124 = arith.constant 5.000000e-01 : f32
    %692 = vector.broadcast %cst_124 : f32 to vector<8x96xf32>
    %693 = arith.mulf %692, %691 : vector<8x96xf32>
    %cst_125 = arith.constant 5.000000e-01 : f32
    %694 = vector.broadcast %cst_125 : f32 to vector<8x96xf32>
    %695 = arith.addf %693, %694 : vector<8x96xf32>
    %696 = vector.extract_strided_slice %690 {offsets = [0, 96], sizes = [8, 32], strides = [1, 1]} : vector<8x128xf32> to vector<8x32xf32>
    %697 = vector.extract_strided_slice %695 {offsets = [0, 32], sizes = [8, 32], strides = [1, 1]} : vector<8x96xf32> to vector<8x32xf32>
    %698 = arith.mulf %697, %642 : vector<8x32xf32>
    %699 = vector.extract_strided_slice %695 {offsets = [0, 0], sizes = [8, 32], strides = [1, 1]} : vector<8x96xf32> to vector<8x32xf32>
    %700 = arith.mulf %699, %696 : vector<8x32xf32>
    %701 = arith.addf %698, %700 : vector<8x32xf32>
    %702 = vector.extract_strided_slice %695 {offsets = [0, 64], sizes = [8, 32], strides = [1, 1]} : vector<8x96xf32> to vector<8x32xf32>
    %703 = math.tanh %701 : vector<8x32xf32>
    %704 = arith.mulf %702, %703 : vector<8x32xf32>
    %705 = arith.truncf %704 : vector<8x32xf32> to vector<8x32xbf16>
    %706 = tpu.concatenate %528, %587, %646, %705 in 0 : vector<8x32xbf16>, vector<8x32xbf16>, vector<8x32xbf16>, vector<8x32xbf16> -> vector<32x32xbf16>
    %cst_126 = arith.constant dense<0.000000e+00> : vector<32x128xf32>
    %707 = tpu.matmul %706, %9, %cst_126 {dimension_numbers = #tpu.dot_dimension_numbers<[1], [0], [0], [1], [0, 0, 1, 1], [], []>} : vector<32x32xbf16>, vector<32x128xbf16>, vector<32x128xf32> -> vector<32x128xf32>
    %708 = arith.addf %707, %16 : vector<32x128xf32>
    %709 = tpu.iota {dimensions = array<i32: 1>} : vector<32x128xi32>
    %c2_i32 = arith.constant 2 : i32
    %710 = vector.broadcast %c2_i32 : i32 to vector<32x128xi32>
    %711 = arith.cmpi slt, %709, %710 : vector<32x128xi32>
    %cst_127 = arith.constant 0.000000e+00 : f32
    %712 = vector.broadcast %cst_127 : f32 to vector<32x128xf32>
    %713 = arith.maximumf %708, %712 : vector<32x128xf32>
    %714 = math.absf %708 : vector<32x128xf32>
    %cst_128 = arith.constant 0.000000e+00 : f32
    %715 = vector.broadcast %cst_128 : f32 to vector<32x128xf32>
    %716 = arith.subf %715, %714 : vector<32x128xf32>
    %717 = math.exp %716 : vector<32x128xf32>
    %cst_129 = arith.constant 1.000000e+00 : f32
    %718 = vector.broadcast %cst_129 : f32 to vector<32x128xf32>
    %719 = arith.addf %718, %717 : vector<32x128xf32>
    %720 = math.log %719 : vector<32x128xf32>
    %721 = arith.addf %713, %720 : vector<32x128xf32>
    %722 = arith.select %711, %708, %721 : vector<32x128xi1>, vector<32x128xf32>
    %c0_130 = arith.constant 0 : index
    %c0_131 = arith.constant 0 : index
    %723 = vector.load %arg3[%c0_130, %c0_131] : memref<32x128xf32, #tpu.memory_space<vmem>>, vector<32x128xf32>
    tpu.vector_store %arg3[%c0_130, %c0_131], %722 {strides = array<i32>} : memref<32x128xf32, #tpu.memory_space<vmem>>, vector<32x128xf32>,
    return
  }
}

</mosaic_0001>

<llo_original>
// kernel: deepar_pallas.1
$region0: #{deepar_pallas.1}
  #allocation0 [shape = 'u32[]', space=smem, size = 0x4, offset = 0x4, fixed_abs, tag = 'smem constant byte address 0x4 - core index']
  #allocation1 [shape = 'u32[72,128]{1,0:T(1,128)}', space=vmem, size = 0x9000, scoped, tag = 'internal scratch']
  %s0 = inlined_call_operand.vmem [shape: bf16[96,32], index: 0, kind: input, shape index: {}]
  %s1 = inlined_call_operand.vmem [shape: bf16[416,128], index: 1, kind: input, shape index: {}]
  %s2 = inlined_call_operand.vmem [shape: f32[80,128], index: 2, kind: input, shape index: {}]
  %s3 = inlined_call_operand.vmem [shape: f32[32,128], index: 3, kind: output, shape index: {}]
  %s4 = sld [smem:[#allocation0]]
  $region22: #{deepar_pallas.1} parent=0
    _
  %s6 = ssub.s32 1, %s4
  %s7 = scalar_select 0, %s6, %s4
  // Predicated region
  $region2: #{deepar_pallas.1} parent=0 // pred_check
    _
  $region3: #{deepar_pallas.1} parent=0 // pred_check_branch
    %9 = sbr.rel (0) target = $region5
  $region4: #{deepar_pallas.1} parent=0 // pred_region
    _
  $region5: #{deepar_pallas.1} parent=0 // pred_fallthru
    _
  // Predicated region
  $region6: #{deepar_pallas.1} parent=0 // pred_check
    _
  $region7: #{deepar_pallas.1} parent=0 // pred_check_branch
    %11 = sbr.rel (0) target = $region9
  $region8: #{deepar_pallas.1} parent=0 // pred_region
    _
  $region9: #{deepar_pallas.1} parent=0 // pred_fallthru
    _
  // Predicated region
  $region10: #{deepar_pallas.1} parent=0 // pred_check
    _
  $region11: #{deepar_pallas.1} parent=0 // pred_check_branch
    %13 = sbr.rel (0) target = $region13
  $region12: #{deepar_pallas.1} parent=0 // pred_region
    _
  $region13: #{deepar_pallas.1} parent=0 // pred_fallthru
    _
  %v15 = vld [vmem:[%s0] sm:$0xf]
  %v16 = vld [vmem:[%s0 + $0x4] sm:$0xf]
  %v17 = vld [vmem:[%s0 + $0x8] sm:$0xf]
  %v18 = vld [vmem:[%s0 + $0xc] sm:$0xf]
  %v19 = vld [vmem:[%s0 + $0x10] sm:$0xf]
  %v20 = vld [vmem:[%s0 + $0x14] sm:$0xf]
  %v21 = vld [vmem:[%s0 + $0x18] sm:$0xf]
  %v22 = vld [vmem:[%s0 + $0x1c] sm:$0xf]
  %v23 = vld [vmem:[%s0 + $0x20] sm:$0xf]
  %v24 = vld [vmem:[%s0 + $0x24] sm:$0xf]
  %v25 = vld [vmem:[%s0 + $0x28] sm:$0xf]
  %v26 = vld [vmem:[%s0 + $0x2c] sm:$0xf]
  %v27 = vld [vmem:[%s1] sm:$0xf]
  %v28 = vld [vmem:[%s1 + $0x4] sm:$0xf]
  %v29 = vld [vmem:[%s1 + $0x8] sm:$0xf]
  %v30 = vld [vmem:[%s1 + $0xc] sm:$0xf]
  %v43 = vunpack.c.l.b16 %v15
  %v44 = vunpack.c.l.b16 %v16
  %v45 = vunpack.c.l.b16 %v17
  %v46 = vunpack.c.l.b16 %v18
  %v47 = vunpack.c.l.b16 %v19
  %v48 = vunpack.c.l.b16 %v20
  %v49 = vunpack.c.l.b16 %v21
  %v50 = vunpack.c.l.b16 %v22
  %v51 = vunpack.c.l.b16 %v23
  %v52 = vunpack.c.l.b16 %v24
  %v53 = vunpack.c.l.b16 %v25
  %v54 = vunpack.c.l.b16 %v26
  %v55 = vpack.c.b16 %v44, %v43
  %v56 = vpack.c.b16 %v46, %v45
  %v57 = vpack.c.b16 %v48, %v47
  %v58 = vpack.c.b16 %v50, %v49
  %v59 = vpack.c.b16 %v52, %v51
  %v60 = vpack.c.b16 %v54, %v53
  %v65 = vunpack.c.l.b16 %v27
  %v66 = vunpack.c.l.b16 %v28
  %v67 = vunpack.c.l.b16 %v29
  %v68 = vunpack.c.l.b16 %v30
  %v69 = vpack.c.b16 %v66, %v65
  %v70 = vpack.c.b16 %v68, %v67
  %vm73 = vcmask 261120
  %v75 = vsel %vm73, %v55, 0
  %v78 = vsel %vm73, %v56, 0
  %v81 = vsel %vm73, %v57, 0
  %v84 = vsel %vm73, %v58, 0
  %v87 = vsel %vm73, %v59, 0
  %v90 = vsel %vm73, %v60, 0
  %92 = vmatpush.bf16.msra.mxu0 0
  %93 = vmatpush.bf16.msra.mxu0 0
  %94 = vmatpush.bf16.msra.mxu0 0
  %95 = vmatpush.bf16.msra.mxu0 0
  %96 = vmatpush.bf16.msra.mxu0 0
  %97 = vmatpush.bf16.msra.mxu0 0
  %98 = vmatpush.bf16.msra.mxu0 %v70
  %99 = vmatpush.bf16.msra.mxu0 %v69
  %100 = vmatmul.bf16.gmra.mxu0 %v75
  %v101 = vpop.f32.mrf.mxu0
  %v102 = vadd.f32 0.0, %v101
  %v103 = vpop.f32.mrf.mxu0
  %v104 = vadd.f32 0.0, %v103
  %105 = vmatmul.bf16.gmra.mxu0 %v78
  %v106 = vpop.f32.mrf.mxu0
  %v107 = vadd.f32 0.0, %v106
  %v108 = vpop.f32.mrf.mxu0
  %v109 = vadd.f32 0.0, %v108
  %110 = vmatmul.bf16.gmra.mxu0 %v81
  %v111 = vpop.f32.mrf.mxu0
  %v112 = vadd.f32 0.0, %v111
  %v113 = vpop.f32.mrf.mxu0
  %v114 = vadd.f32 0.0, %v113
  %115 = vmatmul.bf16.gmra.mxu0 %v84
  %v116 = vpop.f32.mrf.mxu0
  %v117 = vadd.f32 0.0, %v116
  %v118 = vpop.f32.mrf.mxu0
  %v119 = vadd.f32 0.0, %v118
  %120 = vmatmul.bf16.gmra.mxu0 %v87
  %v121 = vpop.f32.mrf.mxu0
  %v122 = vadd.f32 0.0, %v121
  %v123 = vpop.f32.mrf.mxu0
  %v124 = vadd.f32 0.0, %v123
  %125 = vmatmul.bf16.gmra.mxu0 %v90
  %v126 = vpop.f32.mrf.mxu0
  %v127 = vadd.f32 0.0, %v126
  %v128 = vpop.f32.mrf.mxu0
  %v129 = vadd.f32 0.0, %v128
  %130 = vdwg.mxu0
  %v131 = vld [vmem:[%s1 + $0x10] sm:$0xf]
  %v132 = vld [vmem:[%s1 + $0x14] sm:$0xf]
  %v133 = vld [vmem:[%s1 + $0x18] sm:$0xf]
  %v134 = vld [vmem:[%s1 + $0x1c] sm:$0xf]
  %v135 = vld [vmem:[%s1 + $0x20] sm:$0xf]
  %v136 = vld [vmem:[%s1 + $0x24] sm:$0xf]
  %v137 = vld [vmem:[%s1 + $0x28] sm:$0xf]
  %v138 = vld [vmem:[%s1 + $0x2c] sm:$0xf]
  %v139 = vld [vmem:[%s1 + $0x30] sm:$0xf]
  %v140 = vld [vmem:[%s1 + $0x34] sm:$0xf]
  %v141 = vld [vmem:[%s1 + $0x38] sm:$0xf]
  %v142 = vld [vmem:[%s1 + $0x3c] sm:$0xf]
  %v143 = vld [vmem:[%s1 + $0x40] sm:$0xf]
  %v144 = vld [vmem:[%s1 + $0x44] sm:$0xf]
  %v145 = vld [vmem:[%s1 + $0x48] sm:$0xf]
  %v146 = vld [vmem:[%s1 + $0x4c] sm:$0xf]
  %v147 = vld [vmem:[%s1 + $0x50] sm:$0xf]
  %v148 = vld [vmem:[%s1 + $0x54] sm:$0xf]
  %v149 = vld [vmem:[%s1 + $0x58] sm:$0xf]
  %v150 = vld [vmem:[%s1 + $0x5c] sm:$0xf]
  %v151 = vld [vmem:[%s1 + $0x60] sm:$0xf]
  %v152 = vld [vmem:[%s1 + $0x64] sm:$0xf]
  %v153 = vld [vmem:[%s1 + $0x68] sm:$0xf]
  %v154 = vld [vmem:[%s1 + $0x6c] sm:$0xf]
  %v155 = vld [vmem:[%s1 + $0x70] sm:$0xf]
  %v156 = vld [vmem:[%s1 + $0x74] sm:$0xf]
  %v157 = vld [vmem:[%s1 + $0x78] sm:$0xf]
  %v158 = vld [vmem:[%s1 + $0x7c] sm:$0xf]
  %v159 = vld [vmem:[%s1 + $0x80] sm:$0xf]
  %v160 = vld [vmem:[%s1 + $0x84] sm:$0xf]
  %v161 = vld [vmem:[%s1 + $0x88] sm:$0xf]
  %v162 = vld [vmem:[%s1 + $0x8c] sm:$0xf]
  %v163 = vld [vmem:[%s1 + $0x90] sm:$0xf]
  %v164 = vld [vmem:[%s1 + $0x94] sm:$0xf]
  %v165 = vld [vmem:[%s1 + $0x98] sm:$0xf]
  %v166 = vld [vmem:[%s1 + $0x9c] sm:$0xf]
  %v167 = vld [vmem:[%s1 + $0xa0] sm:$0xf]
  %v168 = vld [vmem:[%s1 + $0xa4] sm:$0xf]
  %v169 = vld [vmem:[%s1 + $0xa8] sm:$0xf]
  %v170 = vld [vmem:[%s1 + $0xac] sm:$0xf]
  %v171 = vld [vmem:[%s1 + $0xb0] sm:$0xf]
  %v172 = vld [vmem:[%s1 + $0xb4] sm:$0xf]
  %v173 = vld [vmem:[%s1 + $0xb8] sm:$0xf]
  %v174 = vld [vmem:[%s1 + $0xbc] sm:$0xf]
  %v175 = vld [vmem:[%s1 + $0xc0] sm:$0xf]
  %v176 = vld [vmem:[%s1 + $0xc4] sm:$0xf]
  %v177 = vld [vmem:[%s1 + $0xc8] sm:$0xf]
  %v178 = vld [vmem:[%s1 + $0xcc] sm:$0xf]
  %v179 = vld [vmem:[%s2] sm:$0xff]
  %v180 = vld [vmem:[%s2 + $0x8] sm:$0xff]
  %v181 = vld [vmem:[%s2 + $0x10] sm:$0xff]
  %v182 = vld [vmem:[%s2 + $0x18] sm:$0xff]
  %v183 = vld [vmem:[%s2 + $0x20] sm:$0xff]
  %v184 = vld [vmem:[%s2 + $0x28] sm:$0xff]
  %v185 = vld [vmem:[%s2 + $0x30] sm:$0xff]
  %v186 = vld [vmem:[%s2 + $0x38] sm:$0xff]
  %v187 = vld [vmem:[%s2 + $0x40] sm:$0xff]
  %v188 = vld [vmem:[%s2 + $0x48] sm:$0xff]
  %v189 = vadd.f32 %v102, %v179
  %v190 = vtanh.pop %v189
  %v191 = vmul.f32 %v190, 0.5
  %v192 = vadd.f32 %v191, 0.5
  %194 = vrot.lane.b32.xlu0 %v190, 32
  %v195 = vpop.permute.xlu0 %194
  %v197 = vmul.f32 %v192, %v195
  %v198 = vtanh.pop %v197
  %200 = vrot.lane.b32.xlu0 %v198, 64
  %v201 = vpop.permute.xlu0 %200
  %v203 = vmul.f32 %v192, %v201
  %v204 = vpack.c.bf16 %v203, %v203
  %206 = vrot.lane.b32.xlu0 %v204, 64
  %v207 = vpop.permute.xlu0 %206
  %v212 = vunpack.c.l.b16 %v135
  %v213 = vunpack.c.l.b16 %v136
  %v214 = vunpack.c.l.b16 %v137
  %v215 = vunpack.c.l.b16 %v138
  %v216 = vpack.c.b16 %v213, %v212
  %v217 = vpack.c.b16 %v215, %v214
  %v221 = vsel %vm73, %v207, 0
  %223 = vmatpush.bf16.msra.mxu0 0
  %224 = vmatpush.bf16.msra.mxu0 0
  %225 = vmatpush.bf16.msra.mxu0 0
  %226 = vmatpush.bf16.msra.mxu0 0
  %227 = vmatpush.bf16.msra.mxu0 0
  %228 = vmatpush.bf16.msra.mxu0 0
  %229 = vmatpush.bf16.msra.mxu0 %v217
  %230 = vmatpush.bf16.msra.mxu0 %v216
  %231 = vmatmul.bf16.gmra.mxu0 %v221
  %v232 = vpop.f32.mrf.mxu0
  %v233 = vadd.f32 %v180, %v232
  %v234 = vpop.f32.mrf.mxu0
  %235 = vdwg.mxu0
  %v236 = vtanh.pop %v233
  %v237 = vmul.f32 %v236, 0.5
  %v238 = vadd.f32 %v237, 0.5
  %240 = vrot.lane.b32.xlu0 %v236, 32
  %v241 = vpop.permute.xlu0 %240
  %v243 = vmul.f32 %v238, %v241
  %v244 = vtanh.pop %v243
  %246 = vrot.lane.b32.xlu0 %v244, 64
  %v247 = vpop.permute.xlu0 %246
  %v249 = vmul.f32 %v238, %v247
  %v250 = vpack.c.bf16 %v249, %v249
  %v252 = vunpack.c.l.b16 %v250
  %v253 = vpack.c.b16 %v252, %v252
  %254 = vrot.lane.b32.xlu0 %v253, 64
  %v255 = vpop.permute.xlu0 %254
  %v260 = vunpack.c.l.b16 %v143
  %v261 = vunpack.c.l.b16 %v144
  %v262 = vunpack.c.l.b16 %v145
  %v263 = vunpack.c.l.b16 %v146
  %v264 = vpack.c.b16 %v261, %v260
  %v265 = vpack.c.b16 %v263, %v262
  %v269 = vsel %vm73, %v255, 0
  %271 = vmatpush.bf16.msra.mxu0 0
  %272 = vmatpush.bf16.msra.mxu0 0
  %273 = vmatpush.bf16.msra.mxu0 0
  %274 = vmatpush.bf16.msra.mxu0 0
  %275 = vmatpush.bf16.msra.mxu0 0
  %276 = vmatpush.bf16.msra.mxu0 0
  %277 = vmatpush.bf16.msra.mxu0 %v265
  %278 = vmatpush.bf16.msra.mxu0 %v264
  %279 = vmatmul.bf16.gmra.mxu0 %v269
  %v280 = vpop.f32.mrf.mxu0
  %v281 = vadd.f32 %v181, %v280
  %v282 = vpop.f32.mrf.mxu0
  %283 = vdwg.mxu0
  %v284 = vtanh.pop %v281
  %v285 = vmul.f32 %v284, 0.5
  %v286 = vadd.f32 %v285, 0.5
  %288 = vrot.lane.b32.xlu0 %v284, 32
  %v289 = vpop.permute.xlu0 %288
  %v291 = vmul.f32 %v286, %v289
  %v292 = vtanh.pop %v291
  %294 = vrot.lane.b32.xlu0 %v292, 64
  %v295 = vpop.permute.xlu0 %294
  %v297 = vmul.f32 %v286, %v295
  %v298 = vpack.c.bf16 %v297, %v297
  %v299 = vadd.f32 %v104, %v179
  %v304 = vunpack.c.l.b16 %v131
  %v305 = vunpack.c.l.b16 %v132
  %v306 = vunpack.c.l.b16 %v133
  %v307 = vunpack.c.l.b16 %v134
  %v308 = vpack.c.b16 %v305, %v304
  %v309 = vpack.c.b16 %v307, %v306
  %312 = vmatpush.bf16.msra.mxu0 0
  %313 = vmatpush.bf16.msra.mxu0 0
  %314 = vmatpush.bf16.msra.mxu0 0
  %315 = vmatpush.bf16.msra.mxu0 0
  %316 = vmatpush.bf16.msra.mxu0 0
  %317 = vmatpush.bf16.msra.mxu0 0
  %318 = vmatpush.bf16.msra.mxu0 %v309
  %319 = vmatpush.bf16.msra.mxu0 %v308
  %320 = vmatmul.bf16.gmra.mxu0 %v221
  %v321 = vpop.f32.mrf.mxu0
  %v322 = vadd.f32 0.0, %v321
  %v323 = vpop.f32.mrf.mxu0
  %324 = vdwg.mxu0
  %v325 = vadd.f32 %v299, %v322
  %v326 = vtanh.pop %v325
  %v327 = vmul.f32 %v326, 0.5
  %v328 = vadd.f32 %v327, 0.5
  %330 = vrot.lane.b32.xlu0 %v197, 32
  %v331 = vpop.permute.xlu0 %330
  %v333 = vmul.f32 %v328, %v331
  %335 = vrot.lane.b32.xlu0 %v326, 32
  %v336 = vpop.permute.xlu0 %335
  %v338 = vmul.f32 %v328, %v336
  %340 = vrot.lane.b32.xlu0 %v338, 32
  %v341 = vpop.permute.xlu0 %340
  %v343 = vadd.f32 %v333, %v341
  %v344 = vtanh.pop %v343
  %346 = vrot.lane.b32.xlu0 %v344, 32
  %v347 = vpop.permute.xlu0 %346
  %v349 = vmul.f32 %v328, %v347
  %v350 = vpack.c.bf16 %v349, %v349
  %v352 = vunpack.c.l.b16 %v350
  %v353 = vpack.c.b16 %v352, %v352
  %354 = vrot.lane.b32.xlu0 %v353, 64
  %v355 = vpop.permute.xlu0 %354
  %356 = vrot.lane.b32.xlu0 %v253, 96
  %v357 = vpop.permute.xlu0 %356
  %v360 = vsel %vm73, %v355, %v357
  %v365 = vunpack.c.l.b16 %v139
  %v366 = vunpack.c.l.b16 %v140
  %v367 = vunpack.c.l.b16 %v141
  %v368 = vunpack.c.l.b16 %v142
  %v369 = vpack.c.b16 %v366, %v365
  %v370 = vpack.c.b16 %v368, %v367
  %vm373 = vcmask 523264
  %v374 = vsel %vm373, %v360, 0
  %376 = vmatpush.bf16.msra.mxu0 0
  %377 = vmatpush.bf16.msra.mxu0 0
  %378 = vmatpush.bf16.msra.mxu0 0
  %379 = vmatpush.bf16.msra.mxu0 0
  %380 = vmatpush.bf16.msra.mxu0 %v370
  %381 = vmatpush.bf16.msra.mxu0 %v369
  %382 = vmatpush.bf16.msra.mxu0 %v217
  %383 = vmatpush.bf16.msra.mxu0 %v216
  %384 = vmatmul.bf16.gmra.mxu0 %v374
  %v385 = vpop.f32.mrf.mxu0
  %v386 = vadd.f32 %v180, %v385
  %v387 = vpop.f32.mrf.mxu0
  %388 = vdwg.mxu0
  %v389 = vtanh.pop %v386
  %v390 = vmul.f32 %v389, 0.5
  %v391 = vadd.f32 %v390, 0.5
  %393 = vrot.lane.b32.xlu0 %v243, 32
  %v394 = vpop.permute.xlu0 %393
  %v396 = vmul.f32 %v391, %v394
  %398 = vrot.lane.b32.xlu0 %v389, 32
  %v399 = vpop.permute.xlu0 %398
  %v401 = vmul.f32 %v391, %v399
  %403 = vrot.lane.b32.xlu0 %v401, 32
  %v404 = vpop.permute.xlu0 %403
  %v406 = vadd.f32 %v396, %v404
  %v407 = vtanh.pop %v406
  %409 = vrot.lane.b32.xlu0 %v407, 32
  %v410 = vpop.permute.xlu0 %409
  %v412 = vmul.f32 %v391, %v410
  %v413 = vpack.c.bf16 %v412, %v412
  %v415 = vunpack.c.l.b16 %v413
  %v416 = vpack.c.b16 %v415, %v415
  %417 = vrot.lane.b32.xlu0 %v416, 64
  %v418 = vpop.permute.xlu0 %417
  %v420 = vunpack.c.l.b16 %v298
  %v421 = vpack.c.b16 %v420, %v420
  %422 = vrot.lane.b32.xlu0 %v421, 96
  %v423 = vpop.permute.xlu0 %422
  %v426 = vsel %vm73, %v418, %v423
  %v431 = vunpack.c.l.b16 %v147
  %v432 = vunpack.c.l.b16 %v148
  %v433 = vunpack.c.l.b16 %v149
  %v434 = vunpack.c.l.b16 %v150
  %v435 = vpack.c.b16 %v432, %v431
  %v436 = vpack.c.b16 %v434, %v433
  %v439 = vsel %vm373, %v426, 0
  %441 = vmatpush.bf16.msra.mxu0 0
  %442 = vmatpush.bf16.msra.mxu0 0
  %443 = vmatpush.bf16.msra.mxu0 0
  %444 = vmatpush.bf16.msra.mxu0 0
  %445 = vmatpush.bf16.msra.mxu0 %v436
  %446 = vmatpush.bf16.msra.mxu0 %v435
  %447 = vmatpush.bf16.msra.mxu0 %v265
  %448 = vmatpush.bf16.msra.mxu0 %v264
  %449 = vmatmul.bf16.gmra.mxu0 %v439
  %v450 = vpop.f32.mrf.mxu0
  %v451 = vadd.f32 %v181, %v450
  %v452 = vpop.f32.mrf.mxu0
  %453 = vdwg.mxu0
  %v454 = vtanh.pop %v451
  %v455 = vmul.f32 %v454, 0.5
  %v456 = vadd.f32 %v455, 0.5
  %458 = vrot.lane.b32.xlu0 %v291, 32
  %v459 = vpop.permute.xlu0 %458
  %v461 = vmul.f32 %v456, %v459
  %463 = vrot.lane.b32.xlu0 %v454, 32
  %v464 = vpop.permute.xlu0 %463
  %v466 = vmul.f32 %v456, %v464
  %468 = vrot.lane.b32.xlu0 %v466, 32
  %v469 = vpop.permute.xlu0 %468
  %v471 = vadd.f32 %v461, %v469
  %v472 = vtanh.pop %v471
  %474 = vrot.lane.b32.xlu0 %v472, 32
  %v475 = vpop.permute.xlu0 %474
  %v477 = vmul.f32 %v456, %v475
  %v478 = vpack.c.bf16 %v477, %v477
  %v479 = vadd.f32 %v107, %v179
  %v480 = vsel %vm73, %v355, 0
  %482 = vmatpush.bf16.msra.mxu0 0
  %483 = vmatpush.bf16.msra.mxu0 0
  %484 = vmatpush.bf16.msra.mxu0 0
  %485 = vmatpush.bf16.msra.mxu0 0
  %486 = vmatpush.bf16.msra.mxu0 0
  %487 = vmatpush.bf16.msra.mxu0 0
  %488 = vmatpush.bf16.msra.mxu0 %v309
  %489 = vmatpush.bf16.msra.mxu0 %v308
  %490 = vmatmul.bf16.gmra.mxu0 %v480
  %v491 = vpop.f32.mrf.mxu0
  %v492 = vadd.f32 0.0, %v491
  %v493 = vpop.f32.mrf.mxu0
  %494 = vdwg.mxu0
  %v495 = vadd.f32 %v479, %v492
  %v496 = vtanh.pop %v495
  %v497 = vmul.f32 %v496, 0.5
  %v498 = vadd.f32 %v497, 0.5
  %v499 = vmul.f32 %v498, %v343
  %501 = vrot.lane.b32.xlu0 %v496, 32
  %v502 = vpop.permute.xlu0 %501
  %v504 = vmul.f32 %v498, %v502
  %506 = vrot.lane.b32.xlu0 %v504, 32
  %v507 = vpop.permute.xlu0 %506
  %v509 = vadd.f32 %v499, %v507
  %v510 = vtanh.pop %v509
  %512 = vrot.lane.b32.xlu0 %v510, 32
  %v513 = vpop.permute.xlu0 %512
  %v515 = vmul.f32 %v498, %v513
  %v516 = vpack.c.bf16 %v515, %v515
  %v518 = vunpack.c.l.b16 %v516
  %v519 = vpack.c.b16 %v518, %v518
  %520 = vrot.lane.b32.xlu0 %v519, 64
  %v521 = vpop.permute.xlu0 %520
  %522 = vrot.lane.b32.xlu0 %v416, 96
  %v523 = vpop.permute.xlu0 %522
  %v526 = vsel %vm73, %v521, %v523
  %v527 = vsel %vm373, %v526, 0
  %529 = vmatpush.bf16.msra.mxu0 0
  %530 = vmatpush.bf16.msra.mxu0 0
  %531 = vmatpush.bf16.msra.mxu0 0
  %532 = vmatpush.bf16.msra.mxu0 0
  %533 = vmatpush.bf16.msra.mxu0 %v370
  %534 = vmatpush.bf16.msra.mxu0 %v369
  %535 = vmatpush.bf16.msra.mxu0 %v217
  %536 = vmatpush.bf16.msra.mxu0 %v216
  %537 = vmatmul.bf16.gmra.mxu0 %v527
  %v538 = vpop.f32.mrf.mxu0
  %v539 = vadd.f32 %v180, %v538
  %v540 = vpop.f32.mrf.mxu0
  %541 = vdwg.mxu0
  %v542 = vtanh.pop %v539
  %v543 = vmul.f32 %v542, 0.5
  %v544 = vadd.f32 %v543, 0.5
  %v545 = vmul.f32 %v544, %v406
  %547 = vrot.lane.b32.xlu0 %v542, 32
  %v548 = vpop.permute.xlu0 %547
  %v550 = vmul.f32 %v544, %v548
  %552 = vrot.lane.b32.xlu0 %v550, 32
  %v553 = vpop.permute.xlu0 %552
  %v555 = vadd.f32 %v545, %v553
  %v556 = vtanh.pop %v555
  %558 = vrot.lane.b32.xlu0 %v556, 32
  %v559 = vpop.permute.xlu0 %558
  %v561 = vmul.f32 %v544, %v559
  %v562 = vpack.c.bf16 %v561, %v561
  %v564 = vunpack.c.l.b16 %v562
  %v565 = vpack.c.b16 %v564, %v564
  %566 = vrot.lane.b32.xlu0 %v565, 64
  %v567 = vpop.permute.xlu0 %566
  %v569 = vunpack.c.l.b16 %v478
  %v570 = vpack.c.b16 %v569, %v569
  %571 = vrot.lane.b32.xlu0 %v570, 96
  %v572 = vpop.permute.xlu0 %571
  %v575 = vsel %vm73, %v567, %v572
  %v576 = vsel %vm373, %v575, 0
  %578 = vmatpush.bf16.msra.mxu0 0
  %579 = vmatpush.bf16.msra.mxu0 0
  %580 = vmatpush.bf16.msra.mxu0 0
  %581 = vmatpush.bf16.msra.mxu0 0
  %582 = vmatpush.bf16.msra.mxu0 %v436
  %583 = vmatpush.bf16.msra.mxu0 %v435
  %584 = vmatpush.bf16.msra.mxu0 %v265
  %585 = vmatpush.bf16.msra.mxu0 %v264
  %586 = vmatmul.bf16.gmra.mxu0 %v576
  %v587 = vpop.f32.mrf.mxu0
  %v588 = vadd.f32 %v181, %v587
  %v589 = vpop.f32.mrf.mxu0
  %590 = vdwg.mxu0
  %v591 = vtanh.pop %v588
  %v592 = vmul.f32 %v591, 0.5
  %v593 = vadd.f32 %v592, 0.5
  %v594 = vmul.f32 %v593, %v471
  %596 = vrot.lane.b32.xlu0 %v591, 32
  %v597 = vpop.permute.xlu0 %596
  %v599 = vmul.f32 %v593, %v597
  %601 = vrot.lane.b32.xlu0 %v599, 32
  %v602 = vpop.permute.xlu0 %601
  %v604 = vadd.f32 %v594, %v602
  %v605 = vtanh.pop %v604
  %607 = vrot.lane.b32.xlu0 %v605, 32
  %v608 = vpop.permute.xlu0 %607
  %v610 = vmul.f32 %v593, %v608
  %v611 = vpack.c.bf16 %v610, %v610
  %v612 = vadd.f32 %v109, %v179
  %v613 = vsel %vm73, %v521, 0
  %615 = vmatpush.bf16.msra.mxu0 0
  %616 = vmatpush.bf16.msra.mxu0 0
  %617 = vmatpush.bf16.msra.mxu0 0
  %618 = vmatpush.bf16.msra.mxu0 0
  %619 = vmatpush.bf16.msra.mxu0 0
  %620 = vmatpush.bf16.msra.mxu0 0
  %621 = vmatpush.bf16.msra.mxu0 %v309
  %622 = vmatpush.bf16.msra.mxu0 %v308
  %623 = vmatmul.bf16.gmra.mxu0 %v613
  %v624 = vpop.f32.mrf.mxu0
  %v625 = vadd.f32 0.0, %v624
  %v626 = vpop.f32.mrf.mxu0
  %627 = vdwg.mxu0
  %v628 = vadd.f32 %v612, %v625
  %v629 = vtanh.pop %v628
  %v630 = vmul.f32 %v629, 0.5
  %v631 = vadd.f32 %v630, 0.5
  %v632 = vmul.f32 %v631, %v509
  %634 = vrot.lane.b32.xlu0 %v629, 32
  %v635 = vpop.permute.xlu0 %634
  %v637 = vmul.f32 %v631, %v635
  %639 = vrot.lane.b32.xlu0 %v637, 32
  %v640 = vpop.permute.xlu0 %639
  %v642 = vadd.f32 %v632, %v640
  %v643 = vtanh.pop %v642
  %645 = vrot.lane.b32.xlu0 %v643, 32
  %v646 = vpop.permute.xlu0 %645
  %v648 = vmul.f32 %v631, %v646
  %v649 = vpack.c.bf16 %v648, %v648
  %v651 = vunpack.c.l.b16 %v649
  %v652 = vpack.c.b16 %v651, %v651
  %653 = vrot.lane.b32.xlu0 %v652, 64
  %v654 = vpop.permute.xlu0 %653
  %655 = vrot.lane.b32.xlu0 %v565, 96
  %v656 = vpop.permute.xlu0 %655
  %v659 = vsel %vm73, %v654, %v656
  %v660 = vsel %vm373, %v659, 0
  %662 = vmatpush.bf16.msra.mxu0 0
  %663 = vmatpush.bf16.msra.mxu0 0
  %664 = vmatpush.bf16.msra.mxu0 0
  %665 = vmatpush.bf16.msra.mxu0 0
  %666 = vmatpush.bf16.msra.mxu0 %v370
  %667 = vmatpush.bf16.msra.mxu0 %v369
  %668 = vmatpush.bf16.msra.mxu0 %v217
  %669 = vmatpush.bf16.msra.mxu0 %v216
  %670 = vmatmul.bf16.gmra.mxu0 %v660
  %v671 = vpop.f32.mrf.mxu0
  %v672 = vadd.f32 %v180, %v671
  %v673 = vpop.f32.mrf.mxu0
  %674 = vdwg.mxu0
  %v675 = vtanh.pop %v672
  %v676 = vmul.f32 %v675, 0.5
  %v677 = vadd.f32 %v676, 0.5
  %v678 = vmul.f32 %v677, %v555
  %680 = vrot.lane.b32.xlu0 %v675, 32
  %v681 = vpop.permute.xlu0 %680
  %v683 = vmul.f32 %v677, %v681
  %685 = vrot.lane.b32.xlu0 %v683, 32
  %v686 = vpop.permute.xlu0 %685
  %v688 = vadd.f32 %v678, %v686
  %v689 = vtanh.pop %v688
  %691 = vrot.lane.b32.xlu0 %v689, 32
  %v692 = vpop.permute.xlu0 %691
  %v694 = vmul.f32 %v677, %v692
  %v695 = vpack.c.bf16 %v694, %v694
  %v697 = vunpack.c.l.b16 %v695
  %v698 = vpack.c.b16 %v697, %v697
  %699 = vrot.lane.b32.xlu0 %v698, 64
  %v700 = vpop.permute.xlu0 %699
  %v702 = vunpack.c.l.b16 %v611
  %v703 = vpack.c.b16 %v702, %v702
  %704 = vrot.lane.b32.xlu0 %v703, 96
  %v705 = vpop.permute.xlu0 %704
  %v708 = vsel %vm73, %v700, %v705
  %v709 = vsel %vm373, %v708, 0
  %711 = vmatpush.bf16.msra.mxu0 0
  %712 = vmatpush.bf16.msra.mxu0 0
  %713 = vmatpush.bf16.msra.mxu0 0
  %714 = vmatpush.bf16.msra.mxu0 0
  %715 = vmatpush.bf16.msra.mxu0 %v436
  %716 = vmatpush.bf16.msra.mxu0 %v435
  %717 = vmatpush.bf16.msra.mxu0 %v265
  %718 = vmatpush.bf16.msra.mxu0 %v264
  %719 = vmatmul.bf16.gmra.mxu0 %v709
  %v720 = vpop.f32.mrf.mxu0
  %v721 = vadd.f32 %v181, %v720
  %v722 = vpop.f32.mrf.mxu0
  %723 = vdwg.mxu0
  %v724 = vtanh.pop %v721
  %v725 = vmul.f32 %v724, 0.5
  %v726 = vadd.f32 %v725, 0.5
  %v727 = vmul.f32 %v726, %v604
  %729 = vrot.lane.b32.xlu0 %v724, 32
  %v730 = vpop.permute.xlu0 %729
  %v732 = vmul.f32 %v726, %v730
  %734 = vrot.lane.b32.xlu0 %v732, 32
  %v735 = vpop.permute.xlu0 %734
  %v737 = vadd.f32 %v727, %v735
  %v738 = vtanh.pop %v737
  %740 = vrot.lane.b32.xlu0 %v738, 32
  %v741 = vpop.permute.xlu0 %740
  %v743 = vmul.f32 %v726, %v741
  %v744 = vpack.c.bf16 %v743, %v743
  %v745 = vadd.f32 %v112, %v179
  %v746 = vsel %vm73, %v654, 0
  %748 = vmatpush.bf16.msra.mxu0 0
  %749 = vmatpush.bf16.msra.mxu0 0
  %750 = vmatpush.bf16.msra.mxu0 0
  %751 = vmatpush.bf16.msra.mxu0 0
  %752 = vmatpush.bf16.msra.mxu0 0
  %753 = vmatpush.bf16.msra.mxu0 0
  %754 = vmatpush.bf16.msra.mxu0 %v309
  %755 = vmatpush.bf16.msra.mxu0 %v308
  %756 = vmatmul.bf16.gmra.mxu0 %v746
  %v757 = vpop.f32.mrf.mxu0
  %v758 = vadd.f32 0.0, %v757
  %v759 = vpop.f32.mrf.mxu0
  %760 = vdwg.mxu0
  %v761 = vadd.f32 %v745, %v758
  %v762 = vtanh.pop %v761
  %v763 = vmul.f32 %v762, 0.5
  %v764 = vadd.f32 %v763, 0.5
  %v765 = vmul.f32 %v764, %v642
  %767 = vrot.lane.b32.xlu0 %v762, 32
  %v768 = vpop.permute.xlu0 %767
  %v770 = vmul.f32 %v764, %v768
  %772 = vrot.lane.b32.xlu0 %v770, 32
  %v773 = vpop.permute.xlu0 %772
  %v775 = vadd.f32 %v765, %v773
  %v776 = vtanh.pop %v775
  %778 = vrot.lane.b32.xlu0 %v776, 32
  %v779 = vpop.permute.xlu0 %778
  %v781 = vmul.f32 %v764, %v779
  %v782 = vpack.c.bf16 %v781, %v781
  %v784 = vunpack.c.l.b16 %v782
  %v785 = vpack.c.b16 %v784, %v784
  %786 = vrot.lane.b32.xlu0 %v785, 64
  %v787 = vpop.permute.xlu0 %786
  %788 = vrot.lane.b32.xlu0 %v698, 96
  %v789 = vpop.permute.xlu0 %788
  %v792 = vsel %vm73, %v787, %v789
  %v793 = vsel %vm373, %v792, 0
  %795 = vmatpush.bf16.msra.mxu0 0
  %796 = vmatpush.bf16.msra.mxu0 0
  %797 = vmatpush.bf16.msra.mxu0 0
  %798 = vmatpush.bf16.msra.mxu0 0
  %799 = vmatpush.bf16.msra.mxu0 %v370
  %800 = vmatpush.bf16.msra.mxu0 %v369
  %801 = vmatpush.bf16.msra.mxu0 %v217
  %802 = vmatpush.bf16.msra.mxu0 %v216
  %803 = vmatmul.bf16.gmra.mxu0 %v793
  %v804 = vpop.f32.mrf.mxu0
  %v805 = vadd.f32 %v180, %v804
  %v806 = vpop.f32.mrf.mxu0
  %807 = vdwg.mxu0
  %v808 = vtanh.pop %v805
  %v809 = vmul.f32 %v808, 0.5
  %v810 = vadd.f32 %v809, 0.5
  %v811 = vmul.f32 %v810, %v688
  %813 = vrot.lane.b32.xlu0 %v808, 32
  %v814 = vpop.permute.xlu0 %813
  %v816 = vmul.f32 %v810, %v814
  %818 = vrot.lane.b32.xlu0 %v816, 32
  %v819 = vpop.permute.xlu0 %818
  %v821 = vadd.f32 %v811, %v819
  %v822 = vtanh.pop %v821
  %824 = vrot.lane.b32.xlu0 %v822, 32
  %v825 = vpop.permute.xlu0 %824
  %v827 = vmul.f32 %v810, %v825
  %v828 = vpack.c.bf16 %v827, %v827
  %v830 = vunpack.c.l.b16 %v828
  %v831 = vpack.c.b16 %v830, %v830
  %832 = vrot.lane.b32.xlu0 %v831, 64
  %v833 = vpop.permute.xlu0 %832
  %v835 = vunpack.c.l.b16 %v744
  %v836 = vpack.c.b16 %v835, %v835
  %837 = vrot.lane.b32.xlu0 %v836, 96
  %v838 = vpop.permute.xlu0 %837
  %v841 = vsel %vm73, %v833, %v838
  %v842 = vsel %vm373, %v841, 0
  %844 = vmatpush.bf16.msra.mxu0 0
  %845 = vmatpush.bf16.msra.mxu0 0
  %846 = vmatpush.bf16.msra.mxu0 0
  %847 = vmatpush.bf16.msra.mxu0 0
  %848 = vmatpush.bf16.msra.mxu0 %v436
  %849 = vmatpush.bf16.msra.mxu0 %v435
  %850 = vmatpush.bf16.msra.mxu0 %v265
  %851 = vmatpush.bf16.msra.mxu0 %v264
  %852 = vmatmul.bf16.gmra.mxu0 %v842
  %v853 = vpop.f32.mrf.mxu0
  %v854 = vadd.f32 %v181, %v853
  %v855 = vpop.f32.mrf.mxu0
  %856 = vdwg.mxu0
  %v857 = vtanh.pop %v854
  %v858 = vmul.f32 %v857, 0.5
  %v859 = vadd.f32 %v858, 0.5
  %v860 = vmul.f32 %v859, %v737
  %862 = vrot.lane.b32.xlu0 %v857, 32
  %v863 = vpop.permute.xlu0 %862
  %v865 = vmul.f32 %v859, %v863
  %867 = vrot.lane.b32.xlu0 %v865, 32
  %v868 = vpop.permute.xlu0 %867
  %v870 = vadd.f32 %v860, %v868
  %v871 = vtanh.pop %v870
  %873 = vrot.lane.b32.xlu0 %v871, 32
  %v874 = vpop.permute.xlu0 %873
  %v876 = vmul.f32 %v859, %v874
  %v877 = vpack.c.bf16 %v876, %v876
  %v878 = vadd.f32 %v114, %v179
  %v879 = vsel %vm73, %v787, 0
  %881 = vmatpush.bf16.msra.mxu0 0
  %882 = vmatpush.bf16.msra.mxu0 0
  %883 = vmatpush.bf16.msra.mxu0 0
  %884 = vmatpush.bf16.msra.mxu0 0
  %885 = vmatpush.bf16.msra.mxu0 0
  %886 = vmatpush.bf16.msra.mxu0 0
  %887 = vmatpush.bf16.msra.mxu0 %v309
  %888 = vmatpush.bf16.msra.mxu0 %v308
  %889 = vmatmul.bf16.gmra.mxu0 %v879
  %v890 = vpop.f32.mrf.mxu0
  %v891 = vadd.f32 0.0, %v890
  %v892 = vpop.f32.mrf.mxu0
  %893 = vdwg.mxu0
  %v894 = vadd.f32 %v878, %v891
  %v895 = vtanh.pop %v894
  %v896 = vmul.f32 %v895, 0.5
  %v897 = vadd.f32 %v896, 0.5
  %v898 = vmul.f32 %v897, %v775
  %900 = vrot.lane.b32.xlu0 %v895, 32
  %v901 = vpop.permute.xlu0 %900
  %v903 = vmul.f32 %v897, %v901
  %905 = vrot.lane.b32.xlu0 %v903, 32
  %v906 = vpop.permute.xlu0 %905
  %v908 = vadd.f32 %v898, %v906
  %v909 = vtanh.pop %v908
  %911 = vrot.lane.b32.xlu0 %v909, 32
  %v912 = vpop.permute.xlu0 %911
  %v914 = vmul.f32 %v897, %v912
  %v915 = vpack.c.bf16 %v914, %v914
  %v917 = vunpack.c.l.b16 %v915
  %v918 = vpack.c.b16 %v917, %v917
  %919 = vrot.lane.b32.xlu0 %v918, 64
  %v920 = vpop.permute.xlu0 %919
  %921 = vrot.lane.b32.xlu0 %v831, 96
  %v922 = vpop.permute.xlu0 %921
  %v925 = vsel %vm73, %v920, %v922
  %v926 = vsel %vm373, %v925, 0
  %928 = vmatpush.bf16.msra.mxu0 0
  %929 = vmatpush.bf16.msra.mxu0 0
  %930 = vmatpush.bf16.msra.mxu0 0
  %931 = vmatpush.bf16.msra.mxu0 0
  %932 = vmatpush.bf16.msra.mxu0 %v370
  %933 = vmatpush.bf16.msra.mxu0 %v369
  %934 = vmatpush.bf16.msra.mxu0 %v217
  %935 = vmatpush.bf16.msra.mxu0 %v216
  %936 = vmatmul.bf16.gmra.mxu0 %v926
  %v937 = vpop.f32.mrf.mxu0
  %v938 = vadd.f32 %v180, %v937
  %v939 = vpop.f32.mrf.mxu0
  %940 = vdwg.mxu0
  %v941 = vtanh.pop %v938
  %v942 = vmul.f32 %v941, 0.5
  %v943 = vadd.f32 %v942, 0.5
  %v944 = vmul.f32 %v943, %v821
  %946 = vrot.lane.b32.xlu0 %v941, 32
  %v947 = vpop.permute.xlu0 %946
  %v949 = vmul.f32 %v943, %v947
  %951 = vrot.lane.b32.xlu0 %v949, 32
  %v952 = vpop.permute.xlu0 %951
  %v954 = vadd.f32 %v944, %v952
  %v955 = vtanh.pop %v954
  %957 = vrot.lane.b32.xlu0 %v955, 32
  %v958 = vpop.permute.xlu0 %957
  %v960 = vmul.f32 %v943, %v958
  %v961 = vpack.c.bf16 %v960, %v960
  %v963 = vunpack.c.l.b16 %v961
  %v964 = vpack.c.b16 %v963, %v963
  %965 = vrot.lane.b32.xlu0 %v964, 64
  %v966 = vpop.permute.xlu0 %965
  %v968 = vunpack.c.l.b16 %v877
  %v969 = vpack.c.b16 %v968, %v968
  %970 = vrot.lane.b32.xlu0 %v969, 96
  %v971 = vpop.permute.xlu0 %970
  %v974 = vsel %vm73, %v966, %v971
  %v975 = vsel %vm373, %v974, 0
  %977 = vmatpush.bf16.msra.mxu0 0
  %978 = vmatpush.bf16.msra.mxu0 0
  %979 = vmatpush.bf16.msra.mxu0 0
  %980 = vmatpush.bf16.msra.mxu0 0
  %981 = vmatpush.bf16.msra.mxu0 %v436
  %982 = vmatpush.bf16.msra.mxu0 %v435
  %983 = vmatpush.bf16.msra.mxu0 %v265
  %984 = vmatpush.bf16.msra.mxu0 %v264
  %985 = vmatmul.bf16.gmra.mxu0 %v975
  %v986 = vpop.f32.mrf.mxu0
  %v987 = vadd.f32 %v181, %v986
  %v988 = vpop.f32.mrf.mxu0
  %989 = vdwg.mxu0
  %v990 = vtanh.pop %v987
  %v991 = vmul.f32 %v990, 0.5
  %v992 = vadd.f32 %v991, 0.5
  %v993 = vmul.f32 %v992, %v870
  %995 = vrot.lane.b32.xlu0 %v990, 32
  %v996 = vpop.permute.xlu0 %995
  %v998 = vmul.f32 %v992, %v996
  %1000 = vrot.lane.b32.xlu0 %v998, 32
  %v1001 = vpop.permute.xlu0 %1000
  %v1003 = vadd.f32 %v993, %v1001
  %v1004 = vtanh.pop %v1003
  %1006 = vrot.lane.b32.xlu0 %v1004, 32
  %v1007 = vpop.permute.xlu0 %1006
  %v1009 = vmul.f32 %v992, %v1007
  %v1010 = vpack.c.bf16 %v1009, %v1009
  %v1011 = vadd.f32 %v117, %v179
  %v1012 = vsel %vm73, %v920, 0
  %1014 = vmatpush.bf16.msra.mxu0 0
  %1015 = vmatpush.bf16.msra.mxu0 0
  %1016 = vmatpush.bf16.msra.mxu0 0
  %1017 = vmatpush.bf16.msra.mxu0 0
  %1018 = vmatpush.bf16.msra.mxu0 0
  %1019 = vmatpush.bf16.msra.mxu0 0
  %1020 = vmatpush.bf16.msra.mxu0 %v309
  %1021 = vmatpush.bf16.msra.mxu0 %v308
  %1022 = vmatmul.bf16.gmra.mxu0 %v1012
  %v1023 = vpop.f32.mrf.mxu0
  %v1024 = vadd.f32 0.0, %v1023
  %v1025 = vpop.f32.mrf.mxu0
  %1026 = vdwg.mxu0
  %v1027 = vadd.f32 %v1011, %v1024
  %v1028 = vtanh.pop %v1027
  %v1029 = vmul.f32 %v1028, 0.5
  %v1030 = vadd.f32 %v1029, 0.5
  %v1031 = vmul.f32 %v1030, %v908
  %1033 = vrot.lane.b32.xlu0 %v1028, 32
  %v1034 = vpop.permute.xlu0 %1033
  %v1036 = vmul.f32 %v1030, %v1034
  %1038 = vrot.lane.b32.xlu0 %v1036, 32
  %v1039 = vpop.permute.xlu0 %1038
  %v1041 = vadd.f32 %v1031, %v1039
  %v1042 = vtanh.pop %v1041
  %1044 = vrot.lane.b32.xlu0 %v1042, 32
  %v1045 = vpop.permute.xlu0 %1044
  %v1047 = vmul.f32 %v1030, %v1045
  %v1048 = vpack.c.bf16 %v1047, %v1047
  %v1050 = vunpack.c.l.b16 %v1048
  %v1051 = vpack.c.b16 %v1050, %v1050
  %1052 = vrot.lane.b32.xlu0 %v1051, 64
  %v1053 = vpop.permute.xlu0 %1052
  %1054 = vrot.lane.b32.xlu0 %v964, 96
  %v1055 = vpop.permute.xlu0 %1054
  %v1058 = vsel %vm73, %v1053, %v1055
  %v1059 = vsel %vm373, %v1058, 0
  %1061 = vmatpush.bf16.msra.mxu0 0
  %1062 = vmatpush.bf16.msra.mxu0 0
  %1063 = vmatpush.bf16.msra.mxu0 0
  %1064 = vmatpush.bf16.msra.mxu0 0
  %1065 = vmatpush.bf16.msra.mxu0 %v370
  %1066 = vmatpush.bf16.msra.mxu0 %v369
  %1067 = vmatpush.bf16.msra.mxu0 %v217
  %1068 = vmatpush.bf16.msra.mxu0 %v216
  %1069 = vmatmul.bf16.gmra.mxu0 %v1059
  %v1070 = vpop.f32.mrf.mxu0
  %v1071 = vadd.f32 %v180, %v1070
  %v1072 = vpop.f32.mrf.mxu0
  %1073 = vdwg.mxu0
  %v1074 = vtanh.pop %v1071
  %v1075 = vmul.f32 %v1074, 0.5
  %v1076 = vadd.f32 %v1075, 0.5
  %v1077 = vmul.f32 %v1076, %v954
  %1079 = vrot.lane.b32.xlu0 %v1074, 32
  %v1080 = vpop.permute.xlu0 %1079
  %v1082 = vmul.f32 %v1076, %v1080
  %1084 = vrot.lane.b32.xlu0 %v1082, 32
  %v1085 = vpop.permute.xlu0 %1084
  %v1087 = vadd.f32 %v1077, %v1085
  %v1088 = vtanh.pop %v1087
  %1090 = vrot.lane.b32.xlu0 %v1088, 32
  %v1091 = vpop.permute.xlu0 %1090
  %v1093 = vmul.f32 %v1076, %v1091
  %v1094 = vpack.c.bf16 %v1093, %v1093
  %v1096 = vunpack.c.l.b16 %v1094
  %v1097 = vpack.c.b16 %v1096, %v1096
  %1098 = vrot.lane.b32.xlu0 %v1097, 64
  %v1099 = vpop.permute.xlu0 %1098
  %v1101 = vunpack.c.l.b16 %v1010
  %v1102 = vpack.c.b16 %v1101, %v1101
  %1103 = vrot.lane.b32.xlu0 %v1102, 96
  %v1104 = vpop.permute.xlu0 %1103
  %v1107 = vsel %vm73, %v1099, %v1104
  %v1108 = vsel %vm373, %v1107, 0
  %1110 = vmatpush.bf16.msra.mxu0 0
  %1111 = vmatpush.bf16.msra.mxu0 0
  %1112 = vmatpush.bf16.msra.mxu0 0
  %1113 = vmatpush.bf16.msra.mxu0 0
  %1114 = vmatpush.bf16.msra.mxu0 %v436
  %1115 = vmatpush.bf16.msra.mxu0 %v435
  %1116 = vmatpush.bf16.msra.mxu0 %v265
  %1117 = vmatpush.bf16.msra.mxu0 %v264
  %1118 = vmatmul.bf16.gmra.mxu0 %v1108
  %v1119 = vpop.f32.mrf.mxu0
  %v1120 = vadd.f32 %v181, %v1119
  %v1121 = vpop.f32.mrf.mxu0
  %1122 = vdwg.mxu0
  %v1123 = vtanh.pop %v1120
  %v1124 = vmul.f32 %v1123, 0.5
  %v1125 = vadd.f32 %v1124, 0.5
  %v1126 = vmul.f32 %v1125, %v1003
  %1128 = vrot.lane.b32.xlu0 %v1123, 32
  %v1129 = vpop.permute.xlu0 %1128
  %v1131 = vmul.f32 %v1125, %v1129
  %1133 = vrot.lane.b32.xlu0 %v1131, 32
  %v1134 = vpop.permute.xlu0 %1133
  %v1136 = vadd.f32 %v1126, %v1134
  %v1137 = vtanh.pop %v1136
  %1139 = vrot.lane.b32.xlu0 %v1137, 32
  %v1140 = vpop.permute.xlu0 %1139
  %v1142 = vmul.f32 %v1125, %v1140
  %v1143 = vpack.c.bf16 %v1142, %v1142
  %v1144 = vadd.f32 %v119, %v179
  %v1145 = vsel %vm73, %v1053, 0
  %1147 = vmatpush.bf16.msra.mxu0 0
  %1148 = vmatpush.bf16.msra.mxu0 0
  %1149 = vmatpush.bf16.msra.mxu0 0
  %1150 = vmatpush.bf16.msra.mxu0 0
  %1151 = vmatpush.bf16.msra.mxu0 0
  %1152 = vmatpush.bf16.msra.mxu0 0
  %1153 = vmatpush.bf16.msra.mxu0 %v309
  %1154 = vmatpush.bf16.msra.mxu0 %v308
  %1155 = vmatmul.bf16.gmra.mxu0 %v1145
  %v1156 = vpop.f32.mrf.mxu0
  %v1157 = vadd.f32 0.0, %v1156
  %v1158 = vpop.f32.mrf.mxu0
  %1159 = vdwg.mxu0
  %v1160 = vadd.f32 %v1144, %v1157
  %v1161 = vtanh.pop %v1160
  %v1162 = vmul.f32 %v1161, 0.5
  %v1163 = vadd.f32 %v1162, 0.5
  %v1164 = vmul.f32 %v1163, %v1041
  %1166 = vrot.lane.b32.xlu0 %v1161, 32
  %v1167 = vpop.permute.xlu0 %1166
  %v1169 = vmul.f32 %v1163, %v1167
  %1171 = vrot.lane.b32.xlu0 %v1169, 32
  %v1172 = vpop.permute.xlu0 %1171
  %v1174 = vadd.f32 %v1164, %v1172
  %v1175 = vtanh.pop %v1174
  %1177 = vrot.lane.b32.xlu0 %v1175, 32
  %v1178 = vpop.permute.xlu0 %1177
  %v1180 = vmul.f32 %v1163, %v1178
  %v1181 = vpack.c.bf16 %v1180, %v1180
  %v1183 = vunpack.c.l.b16 %v1181
  %v1184 = vpack.c.b16 %v1183, %v1183
  %1185 = vrot.lane.b32.xlu0 %v1184, 64
  %v1186 = vpop.permute.xlu0 %1185
  %1187 = vrot.lane.b32.xlu0 %v1097, 96
  %v1188 = vpop.permute.xlu0 %1187
  %v1191 = vsel %vm73, %v1186, %v1188
  %v1192 = vsel %vm373, %v1191, 0
  %1194 = vmatpush.bf16.msra.mxu0 0
  %1195 = vmatpush.bf16.msra.mxu0 0
  %1196 = vmatpush.bf16.msra.mxu0 0
  %1197 = vmatpush.bf16.msra.mxu0 0
  %1198 = vmatpush.bf16.msra.mxu0 %v370
  %1199 = vmatpush.bf16.msra.mxu0 %v369
  %1200 = vmatpush.bf16.msra.mxu0 %v217
  %1201 = vmatpush.bf16.msra.mxu0 %v216
  %1202 = vmatmul.bf16.gmra.mxu0 %v1192
  %v1203 = vpop.f32.mrf.mxu0
  %v1204 = vadd.f32 %v180, %v1203
  %v1205 = vpop.f32.mrf.mxu0
  %1206 = vdwg.mxu0
  %v1207 = vtanh.pop %v1204
  %v1208 = vmul.f32 %v1207, 0.5
  %v1209 = vadd.f32 %v1208, 0.5
  %v1210 = vmul.f32 %v1209, %v1087
  %1212 = vrot.lane.b32.xlu0 %v1207, 32
  %v1213 = vpop.permute.xlu0 %1212
  %v1215 = vmul.f32 %v1209, %v1213
  %1217 = vrot.lane.b32.xlu0 %v1215, 32
  %v1218 = vpop.permute.xlu0 %1217
  %v1220 = vadd.f32 %v1210, %v1218
  %v1221 = vtanh.pop %v1220
  %1223 = vrot.lane.b32.xlu0 %v1221, 32
  %v1224 = vpop.permute.xlu0 %1223
  %v1226 = vmul.f32 %v1209, %v1224
  %v1227 = vpack.c.bf16 %v1226, %v1226
  %v1229 = vunpack.c.l.b16 %v1227
  %v1230 = vpack.c.b16 %v1229, %v1229
  %1231 = vrot.lane.b32.xlu0 %v1230, 64
  %v1232 = vpop.permute.xlu0 %1231
  %v1234 = vunpack.c.l.b16 %v1143
  %v1235 = vpack.c.b16 %v1234, %v1234
  %1236 = vrot.lane.b32.xlu0 %v1235, 96
  %v1237 = vpop.permute.xlu0 %1236
  %v1240 = vsel %vm73, %v1232, %v1237
  %v1241 = vsel %vm373, %v1240, 0
  %1243 = vmatpush.bf16.msra.mxu0 0
  %1244 = vmatpush.bf16.msra.mxu0 0
  %1245 = vmatpush.bf16.msra.mxu0 0
  %1246 = vmatpush.bf16.msra.mxu0 0
  %1247 = vmatpush.bf16.msra.mxu0 %v436
  %1248 = vmatpush.bf16.msra.mxu0 %v435
  %1249 = vmatpush.bf16.msra.mxu0 %v265
  %1250 = vmatpush.bf16.msra.mxu0 %v264
  %1251 = vmatmul.bf16.gmra.mxu0 %v1241
  %v1252 = vpop.f32.mrf.mxu0
  %v1253 = vadd.f32 %v181, %v1252
  %v1254 = vpop.f32.mrf.mxu0
  %1255 = vdwg.mxu0
  %v1256 = vtanh.pop %v1253
  %v1257 = vmul.f32 %v1256, 0.5
  %v1258 = vadd.f32 %v1257, 0.5
  %v1259 = vmul.f32 %v1258, %v1136
  %1261 = vrot.lane.b32.xlu0 %v1256, 32
  %v1262 = vpop.permute.xlu0 %1261
  %v1264 = vmul.f32 %v1258, %v1262
  %1266 = vrot.lane.b32.xlu0 %v1264, 32
  %v1267 = vpop.permute.xlu0 %1266
  %v1269 = vadd.f32 %v1259, %v1267
  %v1270 = vtanh.pop %v1269
  %1272 = vrot.lane.b32.xlu0 %v1270, 32
  %v1273 = vpop.permute.xlu0 %1272
  %v1275 = vmul.f32 %v1258, %v1273
  %v1276 = vpack.c.bf16 %v1275, %v1275
  %v1277 = vadd.f32 %v122, %v182
  %v1279 = vunpack.c.l.b16 %v1276
  %v1280 = vpack.c.b16 %v1279, %v1279
  %1281 = vrot.lane.b32.xlu0 %v1280, 64
  %v1282 = vpop.permute.xlu0 %1281
  %1283 = vrot.lane.b32.xlu0 %v1184, 96
  %v1284 = vpop.permute.xlu0 %1283
  %v1287 = vsel %vm73, %v1282, %v1284
  %v1296 = vunpack.c.l.b16 %v151
  %v1297 = vunpack.c.l.b16 %v152
  %v1298 = vunpack.c.l.b16 %v153
  %v1299 = vunpack.c.l.b16 %v154
  %v1300 = vunpack.c.l.b16 %v155
  %v1301 = vunpack.c.l.b16 %v156
  %v1302 = vunpack.c.l.b16 %v157
  %v1303 = vunpack.c.l.b16 %v158
  %v1304 = vpack.c.b16 %v1297, %v1296
  %v1305 = vpack.c.b16 %v1299, %v1298
  %v1306 = vpack.c.b16 %v1301, %v1300
  %v1307 = vpack.c.b16 %v1303, %v1302
  %v1312 = vsel %vm373, %v1287, 0
  %1314 = vmatpush.bf16.msra.mxu0 0
  %1315 = vmatpush.bf16.msra.mxu0 0
  %1316 = vmatpush.bf16.msra.mxu0 0
  %1317 = vmatpush.bf16.msra.mxu0 0
  %1318 = vmatpush.bf16.msra.mxu0 %v1307
  %1319 = vmatpush.bf16.msra.mxu0 %v1306
  %1320 = vmatpush.bf16.msra.mxu0 %v1305
  %1321 = vmatpush.bf16.msra.mxu0 %v1304
  %1322 = vmatmul.bf16.gmra.mxu0 %v1312
  %v1323 = vpop.f32.mrf.mxu0
  %v1324 = vadd.f32 0.0, %v1323
  %v1325 = vpop.f32.mrf.mxu0
  %1326 = vdwg.mxu0
  %v1327 = vadd.f32 %v1277, %v1324
  %v1328 = vtanh.pop %v1327
  %v1329 = vmul.f32 %v1328, 0.5
  %v1330 = vadd.f32 %v1329, 0.5
  %v1331 = vmul.f32 %v1330, %v1174
  %1333 = vrot.lane.b32.xlu0 %v1328, 32
  %v1334 = vpop.permute.xlu0 %1333
  %v1336 = vmul.f32 %v1330, %v1334
  %1338 = vrot.lane.b32.xlu0 %v1336, 32
  %v1339 = vpop.permute.xlu0 %1338
  %v1341 = vadd.f32 %v1331, %v1339
  %v1342 = vtanh.pop %v1341
  %1344 = vrot.lane.b32.xlu0 %v1342, 32
  %v1345 = vpop.permute.xlu0 %1344
  %v1347 = vmul.f32 %v1330, %v1345
  %v1348 = vpack.c.bf16 %v1347, %v1347
  %v1350 = vunpack.c.l.b16 %v1348
  %v1351 = vpack.c.b16 %v1350, %v1350
  %1352 = vrot.lane.b32.xlu0 %v1351, 64
  %v1353 = vpop.permute.xlu0 %1352
  %1354 = vrot.lane.b32.xlu0 %v1230, 96
  %v1355 = vpop.permute.xlu0 %1354
  %v1358 = vsel %vm73, %v1353, %v1355
  %v1367 = vunpack.c.l.b16 %v159
  %v1368 = vunpack.c.l.b16 %v160
  %v1369 = vunpack.c.l.b16 %v161
  %v1370 = vunpack.c.l.b16 %v162
  %v1371 = vunpack.c.l.b16 %v163
  %v1372 = vunpack.c.l.b16 %v164
  %v1373 = vunpack.c.l.b16 %v165
  %v1374 = vunpack.c.l.b16 %v166
  %v1375 = vpack.c.b16 %v1368, %v1367
  %v1376 = vpack.c.b16 %v1370, %v1369
  %v1377 = vpack.c.b16 %v1372, %v1371
  %v1378 = vpack.c.b16 %v1374, %v1373
  %v1383 = vsel %vm373, %v1358, 0
  %1385 = vmatpush.bf16.msra.mxu0 0
  %1386 = vmatpush.bf16.msra.mxu0 0
  %1387 = vmatpush.bf16.msra.mxu0 0
  %1388 = vmatpush.bf16.msra.mxu0 0
  %1389 = vmatpush.bf16.msra.mxu0 %v1378
  %1390 = vmatpush.bf16.msra.mxu0 %v1377
  %1391 = vmatpush.bf16.msra.mxu0 %v1376
  %1392 = vmatpush.bf16.msra.mxu0 %v1375
  %1393 = vmatmul.bf16.gmra.mxu0 %v1383
  %v1394 = vpop.f32.mrf.mxu0
  %v1395 = vadd.f32 %v183, %v1394
  %v1396 = vpop.f32.mrf.mxu0
  %1397 = vdwg.mxu0
  %v1398 = vtanh.pop %v1395
  %v1399 = vmul.f32 %v1398, 0.5
  %v1400 = vadd.f32 %v1399, 0.5
  %v1401 = vmul.f32 %v1400, %v1220
  %1403 = vrot.lane.b32.xlu0 %v1398, 32
  %v1404 = vpop.permute.xlu0 %1403
  %v1406 = vmul.f32 %v1400, %v1404
  %1408 = vrot.lane.b32.xlu0 %v1406, 32
  %v1409 = vpop.permute.xlu0 %1408
  %v1411 = vadd.f32 %v1401, %v1409
  %v1412 = vtanh.pop %v1411
  %1414 = vrot.lane.b32.xlu0 %v1412, 32
  %v1415 = vpop.permute.xlu0 %1414
  %v1417 = vmul.f32 %v1400, %v1415
  %v1418 = vpack.c.bf16 %v1417, %v1417
  %v1420 = vunpack.c.l.b16 %v1418
  %v1421 = vpack.c.b16 %v1420, %v1420
  %1422 = vrot.lane.b32.xlu0 %v1421, 64
  %v1423 = vpop.permute.xlu0 %1422
  %1424 = vrot.lane.b32.xlu0 %v1280, 96
  %v1425 = vpop.permute.xlu0 %1424
  %v1428 = vsel %vm73, %v1423, %v1425
  %v1437 = vunpack.c.l.b16 %v167
  %v1438 = vunpack.c.l.b16 %v168
  %v1439 = vunpack.c.l.b16 %v169
  %v1440 = vunpack.c.l.b16 %v170
  %v1441 = vunpack.c.l.b16 %v171
  %v1442 = vunpack.c.l.b16 %v172
  %v1443 = vunpack.c.l.b16 %v173
  %v1444 = vunpack.c.l.b16 %v174
  %v1445 = vpack.c.b16 %v1438, %v1437
  %v1446 = vpack.c.b16 %v1440, %v1439
  %v1447 = vpack.c.b16 %v1442, %v1441
  %v1448 = vpack.c.b16 %v1444, %v1443
  %v1453 = vsel %vm373, %v1428, 0
  %1455 = vmatpush.bf16.msra.mxu0 0
  %1456 = vmatpush.bf16.msra.mxu0 0
  %1457 = vmatpush.bf16.msra.mxu0 0
  %1458 = vmatpush.bf16.msra.mxu0 0
  %1459 = vmatpush.bf16.msra.mxu0 %v1448
  %1460 = vmatpush.bf16.msra.mxu0 %v1447
  %1461 = vmatpush.bf16.msra.mxu0 %v1446
  %1462 = vmatpush.bf16.msra.mxu0 %v1445
  %1463 = vmatmul.bf16.gmra.mxu0 %v1453
  %v1464 = vpop.f32.mrf.mxu0
  %v1465 = vadd.f32 %v184, %v1464
  %v1466 = vpop.f32.mrf.mxu0
  %1467 = vdwg.mxu0
  %v1468 = vtanh.pop %v1465
  %v1469 = vmul.f32 %v1468, 0.5
  %v1470 = vadd.f32 %v1469, 0.5
  %v1471 = vmul.f32 %v1470, %v1269
  %1473 = vrot.lane.b32.xlu0 %v1468, 32
  %v1474 = vpop.permute.xlu0 %1473
  %v1476 = vmul.f32 %v1470, %v1474
  %1478 = vrot.lane.b32.xlu0 %v1476, 32
  %v1479 = vpop.permute.xlu0 %1478
  %v1481 = vadd.f32 %v1471, %v1479
  %v1482 = vtanh.pop %v1481
  %1484 = vrot.lane.b32.xlu0 %v1482, 32
  %v1485 = vpop.permute.xlu0 %1484
  %v1487 = vmul.f32 %v1470, %v1485
  %v1488 = vpack.c.bf16 %v1487, %v1487
  %v1489 = vadd.f32 %v124, %v182
  %v1491 = vunpack.c.l.b16 %v1488
  %v1492 = vpack.c.b16 %v1491, %v1491
  %1493 = vrot.lane.b32.xlu0 %v1492, 64
  %v1494 = vpop.permute.xlu0 %1493
  %1495 = vrot.lane.b32.xlu0 %v1351, 96
  %v1496 = vpop.permute.xlu0 %1495
  %v1499 = vsel %vm73, %v1494, %v1496
  %v1500 = vsel %vm373, %v1499, 0
  %1502 = vmatpush.bf16.msra.mxu0 0
  %1503 = vmatpush.bf16.msra.mxu0 0
  %1504 = vmatpush.bf16.msra.mxu0 0
  %1505 = vmatpush.bf16.msra.mxu0 0
  %1506 = vmatpush.bf16.msra.mxu0 %v1307
  %1507 = vmatpush.bf16.msra.mxu0 %v1306
  %1508 = vmatpush.bf16.msra.mxu0 %v1305
  %1509 = vmatpush.bf16.msra.mxu0 %v1304
  %1510 = vmatmul.bf16.gmra.mxu0 %v1500
  %v1511 = vpop.f32.mrf.mxu0
  %v1512 = vadd.f32 0.0, %v1511
  %v1513 = vpop.f32.mrf.mxu0
  %1514 = vdwg.mxu0
  %v1515 = vadd.f32 %v1489, %v1512
  %v1516 = vtanh.pop %v1515
  %v1517 = vmul.f32 %v1516, 0.5
  %v1518 = vadd.f32 %v1517, 0.5
  %v1519 = vmul.f32 %v1518, %v1341
  %1521 = vrot.lane.b32.xlu0 %v1516, 32
  %v1522 = vpop.permute.xlu0 %1521
  %v1524 = vmul.f32 %v1518, %v1522
  %1526 = vrot.lane.b32.xlu0 %v1524, 32
  %v1527 = vpop.permute.xlu0 %1526
  %v1529 = vadd.f32 %v1519, %v1527
  %v1530 = vtanh.pop %v1529
  %1532 = vrot.lane.b32.xlu0 %v1530, 32
  %v1533 = vpop.permute.xlu0 %1532
  %v1535 = vmul.f32 %v1518, %v1533
  %v1536 = vpack.c.bf16 %v1535, %v1535
  %v1538 = vunpack.c.l.b16 %v1536
  %v1539 = vpack.c.b16 %v1538, %v1538
  %1540 = vrot.lane.b32.xlu0 %v1539, 64
  %v1541 = vpop.permute.xlu0 %1540
  %1542 = vrot.lane.b32.xlu0 %v1421, 96
  %v1543 = vpop.permute.xlu0 %1542
  %v1546 = vsel %vm73, %v1541, %v1543
  %v1547 = vsel %vm373, %v1546, 0
  %1549 = vmatpush.bf16.msra.mxu0 0
  %1550 = vmatpush.bf16.msra.mxu0 0
  %1551 = vmatpush.bf16.msra.mxu0 0
  %1552 = vmatpush.bf16.msra.mxu0 0
  %1553 = vmatpush.bf16.msra.mxu0 %v1378
  %1554 = vmatpush.bf16.msra.mxu0 %v1377
  %1555 = vmatpush.bf16.msra.mxu0 %v1376
  %1556 = vmatpush.bf16.msra.mxu0 %v1375
  %1557 = vmatmul.bf16.gmra.mxu0 %v1547
  %v1558 = vpop.f32.mrf.mxu0
  %v1559 = vadd.f32 %v183, %v1558
  %v1560 = vpop.f32.mrf.mxu0
  %1561 = vdwg.mxu0
  %v1562 = vtanh.pop %v1559
  %v1563 = vmul.f32 %v1562, 0.5
  %v1564 = vadd.f32 %v1563, 0.5
  %v1565 = vmul.f32 %v1564, %v1411
  %1567 = vrot.lane.b32.xlu0 %v1562, 32
  %v1568 = vpop.permute.xlu0 %1567
  %v1570 = vmul.f32 %v1564, %v1568
  %1572 = vrot.lane.b32.xlu0 %v1570, 32
  %v1573 = vpop.permute.xlu0 %1572
  %v1575 = vadd.f32 %v1565, %v1573
  %v1576 = vtanh.pop %v1575
  %1578 = vrot.lane.b32.xlu0 %v1576, 32
  %v1579 = vpop.permute.xlu0 %1578
  %v1581 = vmul.f32 %v1564, %v1579
  %v1582 = vpack.c.bf16 %v1581, %v1581
  %v1584 = vunpack.c.l.b16 %v1582
  %v1585 = vpack.c.b16 %v1584, %v1584
  %1586 = vrot.lane.b32.xlu0 %v1585, 64
  %v1587 = vpop.permute.xlu0 %1586
  %1588 = vrot.lane.b32.xlu0 %v1492, 96
  %v1589 = vpop.permute.xlu0 %1588
  %v1592 = vsel %vm73, %v1587, %v1589
  %v1593 = vsel %vm373, %v1592, 0
  %1595 = vmatpush.bf16.msra.mxu0 0
  %1596 = vmatpush.bf16.msra.mxu0 0
  %1597 = vmatpush.bf16.msra.mxu0 0
  %1598 = vmatpush.bf16.msra.mxu0 0
  %1599 = vmatpush.bf16.msra.mxu0 %v1448
  %1600 = vmatpush.bf16.msra.mxu0 %v1447
  %1601 = vmatpush.bf16.msra.mxu0 %v1446
  %1602 = vmatpush.bf16.msra.mxu0 %v1445
  %1603 = vmatmul.bf16.gmra.mxu0 %v1593
  %v1604 = vpop.f32.mrf.mxu0
  %v1605 = vadd.f32 %v184, %v1604
  %v1606 = vpop.f32.mrf.mxu0
  %1607 = vdwg.mxu0
  %v1608 = vtanh.pop %v1605
  %v1609 = vmul.f32 %v1608, 0.5
  %v1610 = vadd.f32 %v1609, 0.5
  %v1611 = vmul.f32 %v1610, %v1481
  %1613 = vrot.lane.b32.xlu0 %v1608, 32
  %v1614 = vpop.permute.xlu0 %1613
  %v1616 = vmul.f32 %v1610, %v1614
  %1618 = vrot.lane.b32.xlu0 %v1616, 32
  %v1619 = vpop.permute.xlu0 %1618
  %v1621 = vadd.f32 %v1611, %v1619
  %v1622 = vtanh.pop %v1621
  %1624 = vrot.lane.b32.xlu0 %v1622, 32
  %v1625 = vpop.permute.xlu0 %1624
  %v1627 = vmul.f32 %v1610, %v1625
  %v1628 = vpack.c.bf16 %v1627, %v1627
  %v1629 = vadd.f32 %v127, %v182
  %v1631 = vunpack.c.l.b16 %v1628
  %v1632 = vpack.c.b16 %v1631, %v1631
  %1633 = vrot.lane.b32.xlu0 %v1632, 64
  %v1634 = vpop.permute.xlu0 %1633
  %1635 = vrot.lane.b32.xlu0 %v1539, 96
  %v1636 = vpop.permute.xlu0 %1635
  %v1639 = vsel %vm73, %v1634, %v1636
  %v1640 = vsel %vm373, %v1639, 0
  %1642 = vmatpush.bf16.msra.mxu0 0
  %1643 = vmatpush.bf16.msra.mxu0 0
  %1644 = vmatpush.bf16.msra.mxu0 0
  %1645 = vmatpush.bf16.msra.mxu0 0
  %1646 = vmatpush.bf16.msra.mxu0 %v1307
  %1647 = vmatpush.bf16.msra.mxu0 %v1306
  %1648 = vmatpush.bf16.msra.mxu0 %v1305
  %1649 = vmatpush.bf16.msra.mxu0 %v1304
  %1650 = vmatmul.bf16.gmra.mxu0 %v1640
  %v1651 = vpop.f32.mrf.mxu0
  %v1652 = vadd.f32 0.0, %v1651
  %v1653 = vpop.f32.mrf.mxu0
  %1654 = vdwg.mxu0
  %v1655 = vadd.f32 %v1629, %v1652
  %v1656 = vtanh.pop %v1655
  %v1657 = vmul.f32 %v1656, 0.5
  %v1658 = vadd.f32 %v1657, 0.5
  %v1659 = vmul.f32 %v1658, %v1529
  %1661 = vrot.lane.b32.xlu0 %v1656, 32
  %v1662 = vpop.permute.xlu0 %1661
  %v1664 = vmul.f32 %v1658, %v1662
  %1666 = vrot.lane.b32.xlu0 %v1664, 32
  %v1667 = vpop.permute.xlu0 %1666
  %v1669 = vadd.f32 %v1659, %v1667
  %v1670 = vtanh.pop %v1669
  %1672 = vrot.lane.b32.xlu0 %v1670, 32
  %v1673 = vpop.permute.xlu0 %1672
  %v1675 = vmul.f32 %v1658, %v1673
  %v1676 = vpack.c.bf16 %v1675, %v1675
  %v1678 = vunpack.c.l.b16 %v1676
  %v1679 = vpack.c.b16 %v1678, %v1678
  %1680 = vrot.lane.b32.xlu0 %v1679, 64
  %v1681 = vpop.permute.xlu0 %1680
  %1682 = vrot.lane.b32.xlu0 %v1585, 96
  %v1683 = vpop.permute.xlu0 %1682
  %v1686 = vsel %vm73, %v1681, %v1683
  %v1687 = vsel %vm373, %v1686, 0
  %1689 = vmatpush.bf16.msra.mxu0 0
  %1690 = vmatpush.bf16.msra.mxu0 0
  %1691 = vmatpush.bf16.msra.mxu0 0
  %1692 = vmatpush.bf16.msra.mxu0 0
  %1693 = vmatpush.bf16.msra.mxu0 %v1378
  %1694 = vmatpush.bf16.msra.mxu0 %v1377
  %1695 = vmatpush.bf16.msra.mxu0 %v1376
  %1696 = vmatpush.bf16.msra.mxu0 %v1375
  %1697 = vmatmul.bf16.gmra.mxu0 %v1687
  %v1698 = vpop.f32.mrf.mxu0
  %v1699 = vadd.f32 %v183, %v1698
  %v1700 = vpop.f32.mrf.mxu0
  %1701 = vdwg.mxu0
  %v1702 = vtanh.pop %v1699
  %v1703 = vmul.f32 %v1702, 0.5
  %v1704 = vadd.f32 %v1703, 0.5
  %v1705 = vmul.f32 %v1704, %v1575
  %1707 = vrot.lane.b32.xlu0 %v1702, 32
  %v1708 = vpop.permute.xlu0 %1707
  %v1710 = vmul.f32 %v1704, %v1708
  %1712 = vrot.lane.b32.xlu0 %v1710, 32
  %v1713 = vpop.permute.xlu0 %1712
  %v1715 = vadd.f32 %v1705, %v1713
  %v1716 = vtanh.pop %v1715
  %1718 = vrot.lane.b32.xlu0 %v1716, 32
  %v1719 = vpop.permute.xlu0 %1718
  %v1721 = vmul.f32 %v1704, %v1719
  %v1722 = vpack.c.bf16 %v1721, %v1721
  %v1724 = vunpack.c.l.b16 %v1722
  %v1725 = vpack.c.b16 %v1724, %v1724
  %1726 = vrot.lane.b32.xlu0 %v1725, 64
  %v1727 = vpop.permute.xlu0 %1726
  %1728 = vrot.lane.b32.xlu0 %v1632, 96
  %v1729 = vpop.permute.xlu0 %1728
  %v1732 = vsel %vm73, %v1727, %v1729
  %v1733 = vsel %vm373, %v1732, 0
  %1735 = vmatpush.bf16.msra.mxu0 0
  %1736 = vmatpush.bf16.msra.mxu0 0
  %1737 = vmatpush.bf16.msra.mxu0 0
  %1738 = vmatpush.bf16.msra.mxu0 0
  %1739 = vmatpush.bf16.msra.mxu0 %v1448
  %1740 = vmatpush.bf16.msra.mxu0 %v1447
  %1741 = vmatpush.bf16.msra.mxu0 %v1446
  %1742 = vmatpush.bf16.msra.mxu0 %v1445
  %1743 = vmatmul.bf16.gmra.mxu0 %v1733
  %v1744 = vpop.f32.mrf.mxu0
  %v1745 = vadd.f32 %v184, %v1744
  %v1746 = vpop.f32.mrf.mxu0
  %1747 = vdwg.mxu0
  %v1748 = vtanh.pop %v1745
  %v1749 = vmul.f32 %v1748, 0.5
  %v1750 = vadd.f32 %v1749, 0.5
  %v1751 = vmul.f32 %v1750, %v1621
  %1753 = vrot.lane.b32.xlu0 %v1748, 32
  %v1754 = vpop.permute.xlu0 %1753
  %v1756 = vmul.f32 %v1750, %v1754
  %1758 = vrot.lane.b32.xlu0 %v1756, 32
  %v1759 = vpop.permute.xlu0 %1758
  %v1761 = vadd.f32 %v1751, %v1759
  %v1762 = vtanh.pop %v1761
  %1764 = vrot.lane.b32.xlu0 %v1762, 32
  %v1765 = vpop.permute.xlu0 %1764
  %v1767 = vmul.f32 %v1750, %v1765
  %v1768 = vpack.c.bf16 %v1767, %v1767
  %v1769 = vadd.f32 %v129, %v182
  %v1771 = vunpack.c.l.b16 %v1768
  %v1772 = vpack.c.b16 %v1771, %v1771
  %1773 = vrot.lane.b32.xlu0 %v1772, 64
  %v1774 = vpop.permute.xlu0 %1773
  %1775 = vrot.lane.b32.xlu0 %v1679, 96
  %v1776 = vpop.permute.xlu0 %1775
  %v1779 = vsel %vm73, %v1774, %v1776
  %v1780 = vsel %vm373, %v1779, 0
  %1782 = vmatpush.bf16.msra.mxu0 0
  %1783 = vmatpush.bf16.msra.mxu0 0
  %1784 = vmatpush.bf16.msra.mxu0 0
  %1785 = vmatpush.bf16.msra.mxu0 0
  %1786 = vmatpush.bf16.msra.mxu0 %v1307
  %1787 = vmatpush.bf16.msra.mxu0 %v1306
  %1788 = vmatpush.bf16.msra.mxu0 %v1305
  %1789 = vmatpush.bf16.msra.mxu0 %v1304
  %1790 = vmatmul.bf16.gmra.mxu0 %v1780
  %v1791 = vpop.f32.mrf.mxu0
  %v1792 = vadd.f32 0.0, %v1791
  %v1793 = vpop.f32.mrf.mxu0
  %1794 = vdwg.mxu0
  %v1795 = vadd.f32 %v1769, %v1792
  %v1796 = vtanh.pop %v1795
  %v1797 = vmul.f32 %v1796, 0.5
  %v1798 = vadd.f32 %v1797, 0.5
  %v1799 = vmul.f32 %v1798, %v1669
  %1801 = vrot.lane.b32.xlu0 %v1796, 32
  %v1802 = vpop.permute.xlu0 %1801
  %v1804 = vmul.f32 %v1798, %v1802
  %1806 = vrot.lane.b32.xlu0 %v1804, 32
  %v1807 = vpop.permute.xlu0 %1806
  %v1809 = vadd.f32 %v1799, %v1807
  %v1810 = vtanh.pop %v1809
  %1812 = vrot.lane.b32.xlu0 %v1810, 32
  %v1813 = vpop.permute.xlu0 %1812
  %v1815 = vmul.f32 %v1798, %v1813
  %v1816 = vpack.c.bf16 %v1815, %v1815
  %v1818 = vunpack.c.l.b16 %v1816
  %v1819 = vpack.c.b16 %v1818, %v1818
  %1820 = vrot.lane.b32.xlu0 %v1819, 64
  %v1821 = vpop.permute.xlu0 %1820
  %1822 = vrot.lane.b32.xlu0 %v1725, 96
  %v1823 = vpop.permute.xlu0 %1822
  %v1826 = vsel %vm73, %v1821, %v1823
  %v1827 = vsel %vm373, %v1826, 0
  %1829 = vmatpush.bf16.msra.mxu0 0
  %1830 = vmatpush.bf16.msra.mxu0 0
  %1831 = vmatpush.bf16.msra.mxu0 0
  %1832 = vmatpush.bf16.msra.mxu0 0
  %1833 = vmatpush.bf16.msra.mxu0 %v1378
  %1834 = vmatpush.bf16.msra.mxu0 %v1377
  %1835 = vmatpush.bf16.msra.mxu0 %v1376
  %1836 = vmatpush.bf16.msra.mxu0 %v1375
  %1837 = vmatmul.bf16.gmra.mxu0 %v1827
  %v1838 = vpop.f32.mrf.mxu0
  %v1839 = vadd.f32 %v183, %v1838
  %v1840 = vpop.f32.mrf.mxu0
  %1841 = vdwg.mxu0
  %v1842 = vtanh.pop %v1839
  %v1843 = vmul.f32 %v1842, 0.5
  %v1844 = vadd.f32 %v1843, 0.5
  %v1845 = vmul.f32 %v1844, %v1715
  %1847 = vrot.lane.b32.xlu0 %v1842, 32
  %v1848 = vpop.permute.xlu0 %1847
  %v1850 = vmul.f32 %v1844, %v1848
  %1852 = vrot.lane.b32.xlu0 %v1850, 32
  %v1853 = vpop.permute.xlu0 %1852
  %v1855 = vadd.f32 %v1845, %v1853
  %v1856 = vtanh.pop %v1855
  %1858 = vrot.lane.b32.xlu0 %v1856, 32
  %v1859 = vpop.permute.xlu0 %1858
  %v1861 = vmul.f32 %v1844, %v1859
  %v1862 = vpack.c.bf16 %v1861, %v1861
  %v1864 = vunpack.c.l.b16 %v1862
  %v1865 = vpack.c.b16 %v1864, %v1864
  %1866 = vrot.lane.b32.xlu0 %v1865, 64
  %v1867 = vpop.permute.xlu0 %1866
  %1868 = vrot.lane.b32.xlu0 %v1772, 96
  %v1869 = vpop.permute.xlu0 %1868
  %v1872 = vsel %vm73, %v1867, %v1869
  %v1873 = vsel %vm373, %v1872, 0
  %1875 = vmatpush.bf16.msra.mxu0 0
  %1876 = vmatpush.bf16.msra.mxu0 0
  %1877 = vmatpush.bf16.msra.mxu0 0
  %1878 = vmatpush.bf16.msra.mxu0 0
  %1879 = vmatpush.bf16.msra.mxu0 %v1448
  %1880 = vmatpush.bf16.msra.mxu0 %v1447
  %1881 = vmatpush.bf16.msra.mxu0 %v1446
  %1882 = vmatpush.bf16.msra.mxu0 %v1445
  %1883 = vmatmul.bf16.gmra.mxu0 %v1873
  %v1884 = vpop.f32.mrf.mxu0
  %v1885 = vadd.f32 %v184, %v1884
  %v1886 = vpop.f32.mrf.mxu0
  %1887 = vdwg.mxu0
  %v1888 = vtanh.pop %v1885
  %v1889 = vmul.f32 %v1888, 0.5
  %v1890 = vadd.f32 %v1889, 0.5
  %v1891 = vmul.f32 %v1890, %v1761
  %1893 = vrot.lane.b32.xlu0 %v1888, 32
  %v1894 = vpop.permute.xlu0 %1893
  %v1896 = vmul.f32 %v1890, %v1894
  %1898 = vrot.lane.b32.xlu0 %v1896, 32
  %v1899 = vpop.permute.xlu0 %1898
  %v1901 = vadd.f32 %v1891, %v1899
  %v1902 = vtanh.pop %v1901
  %1904 = vrot.lane.b32.xlu0 %v1902, 32
  %v1905 = vpop.permute.xlu0 %1904
  %v1907 = vmul.f32 %v1890, %v1905
  %v1908 = vpack.c.bf16 %v1907, %v1907
  %v1910 = vunpack.c.l.b16 %v1908
  %v1911 = vpack.c.b16 %v1910, %v1910
  %vm1912 = vcmask 1043456
  %v1915 = vsel %vm1912, %v1488, %v1632
  %v1918 = vsel %vm1912, %v1768, %v1911
  %1921 = vrot.lane.b32.xlu0 %v1915, 64
  %v1922 = vpop.permute.xlu0 %1921
  %1923 = vrot.lane.b32.xlu0 %v1918, 64
  %v1924 = vpop.permute.xlu0 %1923
  %v1929 = vunpack.c.l.b16 %v175
  %v1930 = vunpack.c.l.b16 %v176
  %v1931 = vunpack.c.l.b16 %v177
  %v1932 = vunpack.c.l.b16 %v178
  %v1933 = vpack.c.b16 %v1930, %v1929
  %v1934 = vpack.c.b16 %v1932, %v1931
  %v1938 = vsel %vm73, %v1922, 0
  %v1941 = vsel %vm73, %v1924, 0
  %1943 = vmatpush.bf16.msra.mxu0 0
  %1944 = vmatpush.bf16.msra.mxu0 0
  %1945 = vmatpush.bf16.msra.mxu0 0
  %1946 = vmatpush.bf16.msra.mxu0 0
  %1947 = vmatpush.bf16.msra.mxu0 0
  %1948 = vmatpush.bf16.msra.mxu0 0
  %1949 = vmatpush.bf16.msra.mxu0 %v1934
  %1950 = vmatpush.bf16.msra.mxu0 %v1933
  %1951 = vmatmul.bf16.gmra.mxu0 %v1938
  %v1952 = vpop.f32.mrf.mxu0
  %v1953 = vadd.f32 %v185, %v1952
  %v1954 = vpop.f32.mrf.mxu0
  %v1955 = vadd.f32 %v186, %v1954
  %1956 = vmatmul.bf16.gmra.mxu0 %v1941
  %v1957 = vpop.f32.mrf.mxu0
  %v1958 = vadd.f32 %v187, %v1957
  %v1959 = vpop.f32.mrf.mxu0
  %v1960 = vadd.f32 %v188, %v1959
  %1961 = vdwg.mxu0
  %v1962 = vlaneseq
  %v1963 = vand.u32 %v1962, 127
  %vm1964 = vcmp.lt.s32.totalorder %v1963, 2
  %v1965 = vmax.f32 %v1953, 0.0
  %v1966 = vmax.f32 %v1955, 0.0
  %v1967 = vmax.f32 %v1958, 0.0
  %v1968 = vmax.f32 %v1960, 0.0
  %v1969 = vand.u32 2147483647, %v1953
  %v1970 = vand.u32 2147483647, %v1955
  %v1971 = vand.u32 2147483647, %v1958
  %v1972 = vand.u32 2147483647, %v1960
  %v1973 = vsub.f32 0.0, %v1969
  %v1974 = vsub.f32 0.0, %v1970
  %v1975 = vsub.f32 0.0, %v1971
  %v1976 = vsub.f32 0.0, %v1972
  %v1977 = vmul.f32 %v1973, 1.442695
  %v1978 = vpow.pop %v1977
  %v1979 = vmul.f32 %v1974, 1.442695
  %v1980 = vpow.pop %v1979
  %v1981 = vmul.f32 %v1975, 1.442695
  %v1982 = vpow.pop %v1981
  %v1983 = vmul.f32 %v1976, 1.442695
  %v1984 = vpow.pop %v1983
  %v1985 = vadd.f32 %v1978, 1.0
  %v1986 = vadd.f32 %v1980, 1.0
  %v1987 = vadd.f32 %v1982, 1.0
  %v1988 = vadd.f32 %v1984, 1.0
  %v1989 = vlog2.pop %v1985
  %v1990 = vmul.f32 %v1989, 0.6931472
  %v1991 = vlog2.pop %v1986
  %v1992 = vmul.f32 %v1991, 0.6931472
  %v1993 = vlog2.pop %v1987
  %v1994 = vmul.f32 %v1993, 0.6931472
  %v1995 = vlog2.pop %v1988
  %v1996 = vmul.f32 %v1995, 0.6931472
  %v1997 = vadd.f32 %v1965, %v1990
  %v1998 = vadd.f32 %v1966, %v1992
  %v1999 = vadd.f32 %v1967, %v1994
  %v2000 = vadd.f32 %v1968, %v1996
  %v2001 = vsel %vm1964, %v1953, %v1997
  %v2002 = vsel %vm1964, %v1955, %v1998
  %v2003 = vsel %vm1964, %v1958, %v1999
  %v2004 = vsel %vm1964, %v1960, %v2000
  %2005 = vst [vmem:[%s3] sm:$0xff] %v2001
  %2006 = vst [vmem:[%s3 + $0x8] sm:$0xff] %v2002
  %2007 = vst [vmem:[%s3 + $0x10] sm:$0xff] %v2003
  %2008 = vst [vmem:[%s3 + $0x18] sm:$0xff] %v2004
  // Predicated region
  $region14: #{deepar_pallas.1} parent=0 // pred_check
    _
  $region15: #{deepar_pallas.1} parent=0 // pred_check_branch
    %2010 = sbr.rel (0) target = $region17
  $region16: #{deepar_pallas.1} parent=0 // pred_region
    _
  $region17: #{deepar_pallas.1} parent=0 // pred_fallthru
    _
  // Predicated region
  $region18: #{deepar_pallas.1} parent=0 // pred_check
    _
  $region19: #{deepar_pallas.1} parent=0 // pred_check_branch
    %2012 = sbr.rel (0) target = $region21
  $region20: #{deepar_pallas.1} parent=0 // pred_region
    _
  $region21: #{deepar_pallas.1} parent=0 // pred_fallthru
    _

</llo_original>
